<compile_context>
chip_gen: v6e
topology: v6e:2x2x1
jax: 0.10.0
libtpu: 0.0.40
codegen_flags: <defaults>
</compile_context>

<pallas_src>
import math

import numpy as np
import jax
import jax.numpy as jnp
from jax.experimental import pallas as pl
from jax.experimental.pallas import tpu as pltpu


def _round_up(n, m):
    return ((n + m - 1) // m) * m


# ----------------------------------------------------------------------------
# Fused kernel: 10 lane-dense matmuls per sample, everything resident in VMEM.
# ----------------------------------------------------------------------------

def make_ae_kernel(L, input_dim, latent_dim, hidden_dim):
    L1, L2, L3 = L, L // 2, L // 4
    we1 = L2 * hidden_dim            # even-half width after conv1/pool1 (250)
    off1 = _round_up(we1, 128)       # lane-aligned offset of the odd half (256)
    we2 = L3 * hidden_dim            # even-half width after conv2/pool2 (120)
    off2 = _round_up(we2, 128)       # 128

    def kernel(x_ref, w1, w2, w3, wmu, wfc, w4, w5, w6,
               a1, a2, a3, a4, a5, bmu, bfc, b6, o_ref):
        f32 = jnp.float32

        def dot(a, b):
            return jnp.dot(a, b, preferred_element_type=f32)

        def block(acc, a_ref, relu):
            # conv bias -> (ReLU) -> folded BatchNorm affine (scale, shift).
            h = acc + a_ref[0:1, :]
            if relu:
                h = jnp.maximum(h, 0.0)
            return h * a_ref[1:2, :] + a_ref[2:3, :]

        x = x_ref[...].astype(f32)                                  # (1, L*Cin)

        # -------- encoder --------
        h1 = block(dot(x, w1[...]), a1, True)                       # conv1 (+pool sel packed)
        p1 = jnp.maximum(h1[:, 0:we1], h1[:, off1:off1 + we1])      # maxpool1
        h2 = block(dot(p1, w2[...]), a2, True)                      # conv2 (+pool sel packed)
        p2 = jnp.maximum(h2[:, 0:we2], h2[:, off2:off2 + we2])      # maxpool2
        h3 = block(dot(p2, w3[...]), a3, False)                     # conv3 + bn3 (no ReLU)
        z = dot(h3, wmu[...]) + bmu[...]                            # fc_mu (flatten folded)

        # -------- decoder --------
        d = jnp.maximum(dot(z, wfc[...]) + bfc[...], 0.0)           # fc1 + ReLU (unflatten folded)
        h4 = block(dot(d, w4[...]), a4, True)                       # conv4^T + bn4
        h5 = block(dot(h4, w5[...]), a5, True)                      # upsample1 ∘ conv5^T + bn5
        o = jnp.maximum(dot(h5, w6[...]) + b6[...], 0.0)            # upsample2 ∘ conv6^T + ReLU
        o_ref[...] = o.astype(o_ref.dtype)                          # lane-dense (1, L*Cin) store

    return kernel


def ae_forward(x, ops, latent_dim=20, hidden_dim=10):
    """x: (B, L, input_dim) with (L // 2) // 2 == 12 (module requirement)."""
    B, L, input_dim = x.shape
    assert (L // 2) // 2 == 12 and L // 4 == 12, "model hard-codes a length-12 latent"
    K = L * input_dim
    x3 = x.reshape(B, 1, K)                      # position-major flatten (l*C + c)
    kernel = make_ae_kernel(L, input_dim, latent_dim, hidden_dim)

    def const_spec(a):
        return pl.BlockSpec(a.shape, lambda b: (0,) * a.ndim)

    out = pl.pallas_call(
        kernel,
        out_shape=jax.ShapeDtypeStruct((B, 1, K), jnp.float32),
        grid_spec=pltpu.PrefetchScalarGridSpec(
            num_scalar_prefetch=0,
            grid=(B,),
            in_specs=[pl.BlockSpec((None, 1, K), lambda b: (b, 0, 0))]
                     + [const_spec(op) for op in ops],
            out_specs=pl.BlockSpec((None, 1, K), lambda b: (b, 0, 0)),
        ),
        compiler_params=pltpu.CompilerParams(
            dimension_semantics=("parallel",)),      # 2 samples -> 2 TCs on v7x
    )(x3, *ops)
    return out.reshape(B, L, input_dim)


# ----------------------------------------------------------------------------
# Parameters (deterministic, in-script)
# ----------------------------------------------------------------------------

def init_params(key, input_dim=20, latent_dim=20, hidden_dim=10, L=50):
    L3 = L // 4
    ks = jax.random.split(key, 16)

    def xavier(k, shape, fan_in, fan_out):
        bound = math.sqrt(6.0 / (fan_in + fan_out))
        return jax.random.uniform(k, shape, jnp.float32, -bound, bound)

    def conv_w(k, cout, cin):                   # nn.Conv1d weight (Cout, Cin, 3)
        w = xavier(k, (cout, cin, 3), cin * 3, cout * 3)
        return jnp.transpose(w, (2, 1, 0))      # -> tap-first (3, Cin, Cout)

    def convT_w(k, cin, cout):                  # nn.ConvTranspose1d weight (Cin, Cout, 3)
        w = xavier(k, (cin, cout, 3), cin * 3, cout * 3)
        # stride=1, padding=1 transpose conv == same-padded conv with flipped taps
        return jnp.transpose(w[:, :, ::-1], (2, 0, 1))   # (3, Cin, Cout)

    def bias(k, c, fan_in):
        bnd = 1.0 / math.sqrt(fan_in)
        return jax.random.uniform(k, (c,), jnp.float32, -bnd, bnd)

    def bn(c, eps=1e-5):
        # eval-mode BatchNorm1d at init: gamma=1, beta=0, mean=0, var=1
        scale = jnp.full((c,), 1.0 / math.sqrt(1.0 + eps), jnp.float32)
        shift = jnp.zeros((c,), jnp.float32)
        return scale, shift

    p = {}
    p["w1"], p["b1"] = conv_w(ks[0], hidden_dim, input_dim), bias(ks[1], hidden_dim, input_dim * 3)
    p["scale1"], p["shift1"] = bn(hidden_dim)
    p["w2"], p["b2"] = conv_w(ks[2], hidden_dim, hidden_dim), bias(ks[3], hidden_dim, hidden_dim * 3)
    p["scale2"], p["shift2"] = bn(hidden_dim)
    p["w3"], p["b3"] = conv_w(ks[4], latent_dim, hidden_dim), bias(ks[5], latent_dim, hidden_dim * 3)
    p["scale3"], p["shift3"] = bn(latent_dim)
    p["fc_mu_w"] = xavier(ks[6], (latent_dim, latent_dim * L3), latent_dim * L3, latent_dim)
    p["fc_mu_b"] = bias(ks[7], latent_dim, latent_dim * L3)
    p["fc1_w"] = xavier(ks[8], (hidden_dim * L3, latent_dim), latent_dim, hidden_dim * L3)
    p["fc1_b"] = bias(ks[9], hidden_dim * L3, latent_dim)
    p["w4"], p["b4"] = convT_w(ks[10], hidden_dim, hidden_dim), bias(ks[11], hidden_dim, hidden_dim * 3)
    p["scale4"], p["shift4"] = bn(hidden_dim)
    p["w5"], p["b5"] = convT_w(ks[12], hidden_dim, hidden_dim), bias(ks[13], hidden_dim, hidden_dim * 3)
    p["scale5"], p["shift5"] = bn(hidden_dim)
    p["w6"], p["b6"] = convT_w(ks[14], hidden_dim, input_dim), bias(ks[15], input_dim, hidden_dim * 3)
    p["scale6"] = jnp.ones((input_dim,), jnp.float32)   # conv6: ReLU only, no BN
    p["shift6"] = jnp.zeros((input_dim,), jnp.float32)
    return p


# ----------------------------------------------------------------------------
# Host-side (once per model): banded conv matrices, folded pool/upsample, packed
# bias/scale/shift rows.
# ----------------------------------------------------------------------------

def _banded_conv(wt, l_in, out_positions, src=None):
    """Dense (l_in*Cin, n_out*Cout) matrix for a k=3, stride=1, 'same' conv acting
    on a position-major flattened activation, optionally preceded by a nearest
    upsample given by the source-index list `src` (len(src) = conv input length)."""
    wt = np.asarray(wt, np.float32)                       # (3, cin, cout)
    _, cin, cout = wt.shape
    l_conv = l_in if src is None else len(src)
    m = np.zeros((l_in * cin, len(out_positions) * cout), np.float32)
    for p_idx, p in enumerate(out_positions):
        for t in range(3):
            j = p - 1 + t                                 # implicit zero padding
            if 0 <= j < l_conv:
                s = j if src is None else int(src[j])
                m[s * cin:(s + 1) * cin, p_idx * cout:(p_idx + 1) * cout] += wt[t]
    return m


def _pack_even_odd(m_even, m_odd):
    rows, we = m_even.shape
    off = _round_up(we, 128)                              # lane-aligned odd half
    out = np.zeros((rows, off + m_odd.shape[1]), np.float32)
    out[:, :we] = m_even
    out[:, off:off + m_odd.shape[1]] = m_odd
    return out, off


def _affine(b, s, t, n_pos):
    return np.stack([np.tile(np.asarray(b, np.float32), n_pos),
                     np.tile(np.asarray(s, np.float32), n_pos),
                     np.tile(np.asarray(t, np.float32), n_pos)])


def _affine_even_odd(b, s, t, n_pos, off):
    a = _affine(b, s, t, n_pos)
    out = np.zeros((3, off + a.shape[1]), np.float32)
    out[:, :a.shape[1]] = a
    out[:, off:off + a.shape[1]] = a
    return out


def prepare_operands(p, L, input_dim=20, latent_dim=20, hidden_dim=10):
    L1, L2, L3 = L, L // 2, L // 4

    even1, odd1 = list(range(0, 2 * L2, 2)), list(range(1, 2 * L2, 2))   # pool1 pairs
    even2, odd2 = list(range(0, 2 * L3, 2)), list(range(1, 2 * L3, 2))   # pool2 pairs
    src25 = [(j * L3) // L2 for j in range(L2)]   # nearest upsample 12 -> 25
    src50 = [(j * L2) // L1 for j in range(L1)]   # nearest upsample 25 -> 50

    W1, off1 = _pack_even_odd(_banded_conv(p["w1"], L1, even1),
                              _banded_conv(p["w1"], L1, odd1))
    W2, off2 = _pack_even_odd(_banded_conv(p["w2"], L2, even2),
                              _banded_conv(p["w2"], L2, odd2))
    W3 = _banded_conv(p["w3"], L3, list(range(L3)))
    W4 = _banded_conv(p["w4"], L3, list(range(L3)))
    W5 = _banded_conv(p["w5"], L3, list(range(L2)), src=src25)   # upsample1 ∘ conv5
    W6 = _banded_conv(p["w6"], L2, list(range(L1)), src=src50)   # upsample2 ∘ conv6

    # fc_mu: rows reordered from PyTorch's channel-major flatten (c*L3 + l) to the
    # kernel's position-major layout (l*latent + c); stored (in, out).
    Wmu = np.transpose(np.asarray(p["fc_mu_w"], np.float32)
                       .reshape(latent_dim, latent_dim, L3), (2, 1, 0)
                       ).reshape(L3 * latent_dim, latent_dim)
    bmu = np.asarray(p["fc_mu_b"], np.float32).reshape(1, -1)

    # fc1: output features reordered from (c*L3 + l) to (l*hidden + c); stored (in, out).
    Wfc = np.transpose(np.asarray(p["fc1_w"], np.float32)
                       .reshape(hidden_dim, L3, latent_dim), (2, 1, 0)
                       ).reshape(latent_dim, L3 * hidden_dim)
    bfc = np.asarray(p["fc1_b"], np.float32).reshape(hidden_dim, L3).T.reshape(1, -1)

    A1 = _affine_even_odd(p["b1"], p["scale1"], p["shift1"], L2, off1)
    A2 = _affine_even_odd(p["b2"], p["scale2"], p["shift2"], L3, off2)
    A3 = _affine(p["b3"], p["scale3"], p["shift3"], L3)
    A4 = _affine(p["b4"], p["scale4"], p["shift4"], L3)
    A5 = _affine(p["b5"], p["scale5"], p["shift5"], L2)
    b6 = np.tile(np.asarray(p["b6"], np.float32), L1).reshape(1, -1)

    ops = (W1, W2, W3, Wmu, Wfc, W4, W5, W6, A1, A2, A3, A4, A5, bmu, bfc, b6)
    return tuple(jnp.asarray(o) for o in ops)


# ----------------------------------------------------------------------------
# Pure-JAX reference (mirrors the PyTorch forward, eval mode) for validation
# ----------------------------------------------------------------------------

def ae_reference(x, p, latent_dim=20, hidden_dim=10):
    B, L, _ = x.shape
    L3 = L // 4
    prec = jax.lax.Precision.HIGHEST

    def conv(h, w, b, scale, shift, relu):
        Lh = h.shape[1]
        hp = jnp.pad(h, ((0, 0), (1, 1), (0, 0)))
        acc = sum(jnp.einsum("blc,cd->bld", hp[:, t:t + Lh, :], w[t], precision=prec)
                  for t in range(3))
        acc = acc + b
        if relu:
            acc = jnp.maximum(acc, 0.0)
        return acc * scale + shift

    def pool(h):
        n = h.shape[1] // 2
        return jnp.maximum(h[:, 0:2 * n:2, :], h[:, 1:2 * n:2, :])

    def upsample(h, l_out):
        l_in = h.shape[1]
        src = (np.arange(l_out) * l_in) // l_out
        return h[:, src, :]

    h = conv(x, p["w1"], p["b1"], p["scale1"], p["shift1"], True)
    h = pool(h)
    h = conv(h, p["w2"], p["b2"], p["scale2"], p["shift2"], True)
    h = pool(h)
    h = conv(h, p["w3"], p["b3"], p["scale3"], p["shift3"], False)
    hf = jnp.transpose(h, (0, 2, 1)).reshape(B, -1)                    # channel-major flatten
    z = jnp.dot(hf, p["fc_mu_w"].T, precision=prec) + p["fc_mu_b"]
    d = jnp.maximum(jnp.dot(z, p["fc1_w"].T, precision=prec) + p["fc1_b"], 0.0)
    d = jnp.transpose(d.reshape(B, hidden_dim, L3), (0, 2, 1))         # view(B, hid, 12)
    d = conv(d, p["w4"], p["b4"], p["scale4"], p["shift4"], True)
    d = upsample(d, L // 2)
    d = conv(d, p["w5"], p["b5"], p["scale5"], p["shift5"], True)
    d = upsample(d, L)
    d = conv(d, p["w6"], p["b6"], p["scale6"], p["shift6"], True)
    return d


# ----------------------------------------------------------------------------
# Main
# ----------------------------------------------------------------------------

if __name__ == "__main__":
    B, L = 2, 50                      # module requires the length-12 latent -> L = 50
    input_dim, latent_dim, hidden_dim = 20, 20, 10

    key = jax.random.PRNGKey(0)
    kp, kx = jax.random.split(key)
    params = init_params(kp, input_dim, latent_dim, hidden_dim, L)
    x = jax.random.normal(kx, (B, L, input_dim), jnp.float32)

    ops = prepare_operands(params, L, input_dim, latent_dim, hidden_dim)
    out = ae_forward(x, ops, latent_dim, hidden_dim)
    out = jax.block_until_ready(out)

    assert out.shape == (B, L, input_dim), out.shape
    assert bool(jnp.all(jnp.isfinite(out)))

    ref = jax.block_until_ready(ae_reference(x, params, latent_dim, hidden_dim))
    max_err = float(jnp.max(jnp.abs(out - ref)))
    assert max_err < 2e-3, f"kernel/reference mismatch: {max_err}"

    print("KERNEL_OK")
</pallas_src>

<mosaic_0001>
module attributes {stable_mosaic.version = 11 : i64} {
  func.func @kernel(%arg0: i32, %arg1: memref<1x1x1000xf32, #tpu.memory_space<vmem>>, %arg2: memref<1000x506xf32, #tpu.memory_space<vmem>>, %arg3: memref<250x248xf32, #tpu.memory_space<vmem>>, %arg4: memref<120x240xf32, #tpu.memory_space<vmem>>, %arg5: memref<240x20xf32, #tpu.memory_space<vmem>>, %arg6: memref<20x120xf32, #tpu.memory_space<vmem>>, %arg7: memref<120x120xf32, #tpu.memory_space<vmem>>, %arg8: memref<120x250xf32, #tpu.memory_space<vmem>>, %arg9: memref<250x1000xf32, #tpu.memory_space<vmem>>, %arg10: memref<3x506xf32, #tpu.memory_space<vmem>>, %arg11: memref<3x248xf32, #tpu.memory_space<vmem>>, %arg12: memref<3x240xf32, #tpu.memory_space<vmem>>, %arg13: memref<3x120xf32, #tpu.memory_space<vmem>>, %arg14: memref<3x250xf32, #tpu.memory_space<vmem>>, %arg15: memref<1x20xf32, #tpu.memory_space<vmem>>, %arg16: memref<1x120xf32, #tpu.memory_space<vmem>>, %arg17: memref<1x1000xf32, #tpu.memory_space<vmem>>, %arg18: memref<1x1x1000xf32, #tpu.memory_space<vmem>>) attributes {dimension_semantics = [#tpu.dimension_semantics<parallel>], iteration_bounds = array<i64: 2>, scalar_prefetch = 0 : i64, scratch_operands = 0 : i64, tpu.core_type = #tpu.core_type<tc>, window_params = [{transform_indices = @transform_0, window_bounds = array<i64: 1, 1, 1000>}, {pipeline_mode = #tpu.pipeline_mode<synchronous>, transform_indices = @transform_1, window_bounds = array<i64: 1000, 506>}, {pipeline_mode = #tpu.pipeline_mode<synchronous>, transform_indices = @transform_2, window_bounds = array<i64: 250, 248>}, {pipeline_mode = #tpu.pipeline_mode<synchronous>, transform_indices = @transform_3, window_bounds = array<i64: 120, 240>}, {pipeline_mode = #tpu.pipeline_mode<synchronous>, transform_indices = @transform_4, window_bounds = array<i64: 240, 20>}, {pipeline_mode = #tpu.pipeline_mode<synchronous>, transform_indices = @transform_5, window_bounds = array<i64: 20, 120>}, {pipeline_mode = #tpu.pipeline_mode<synchronous>, transform_indices = @transform_6, window_bounds = array<i64: 120, 120>}, {pipeline_mode = #tpu.pipeline_mode<synchronous>, transform_indices = @transform_7, window_bounds = array<i64: 120, 250>}, {pipeline_mode = #tpu.pipeline_mode<synchronous>, transform_indices = @transform_8, window_bounds = array<i64: 250, 1000>}, {pipeline_mode = #tpu.pipeline_mode<synchronous>, transform_indices = @transform_9, window_bounds = array<i64: 3, 506>}, {pipeline_mode = #tpu.pipeline_mode<synchronous>, transform_indices = @transform_10, window_bounds = array<i64: 3, 248>}, {pipeline_mode = #tpu.pipeline_mode<synchronous>, transform_indices = @transform_11, window_bounds = array<i64: 3, 240>}, {pipeline_mode = #tpu.pipeline_mode<synchronous>, transform_indices = @transform_12, window_bounds = array<i64: 3, 120>}, {pipeline_mode = #tpu.pipeline_mode<synchronous>, transform_indices = @transform_13, window_bounds = array<i64: 3, 250>}, {pipeline_mode = #tpu.pipeline_mode<synchronous>, transform_indices = @transform_14, window_bounds = array<i64: 1, 20>}, {pipeline_mode = #tpu.pipeline_mode<synchronous>, transform_indices = @transform_15, window_bounds = array<i64: 1, 120>}, {pipeline_mode = #tpu.pipeline_mode<synchronous>, transform_indices = @transform_16, window_bounds = array<i64: 1, 1000>}, {transform_indices = @transform_17, window_bounds = array<i64: 1, 1, 1000>}]} {
    %c0 = arith.constant 0 : index
    %c0_0 = arith.constant 0 : index
    %c0_1 = arith.constant 0 : index
    %0 = vector.load %arg1[%c0, %c0_0, %c0_1] : memref<1x1x1000xf32, #tpu.memory_space<vmem>>, vector<1x1x1000xf32>
    %1 = vector.shape_cast %0 : vector<1x1x1000xf32> to vector<1x1000xf32>
    %c0_2 = arith.constant 0 : index
    %c0_3 = arith.constant 0 : index
    %2 = vector.load %arg2[%c0_2, %c0_3] : memref<1000x506xf32, #tpu.memory_space<vmem>>, vector<1000x506xf32>
    %cst = arith.constant dense<0.000000e+00> : vector<1x506xf32>
    %3 = tpu.matmul %1, %2, %cst {dimension_numbers = #tpu.dot_dimension_numbers<[1], [0], [0], [1], [0, 0, 1, 1], [], []>} : vector<1x1000xf32>, vector<1000x506xf32>, vector<1x506xf32> -> vector<1x506xf32>
    %c0_4 = arith.constant 0 : index
    %c0_5 = arith.constant 0 : index
    %4 = vector.load %arg10[%c0_4, %c0_5] : memref<3x506xf32, #tpu.memory_space<vmem>>, vector<1x506xf32>
    %5 = arith.addf %3, %4 : vector<1x506xf32>
    %cst_6 = arith.constant 0.000000e+00 : f32
    %6 = vector.broadcast %cst_6 : f32 to vector<1x506xf32>
    %7 = arith.maximumf %5, %6 : vector<1x506xf32>
    %c1 = arith.constant 1 : index
    %c0_7 = arith.constant 0 : index
    %8 = vector.load %arg10[%c1, %c0_7] : memref<3x506xf32, #tpu.memory_space<vmem>>, vector<1x506xf32>
    %9 = arith.mulf %7, %8 : vector<1x506xf32>
    %c2 = arith.constant 2 : index
    %c0_8 = arith.constant 0 : index
    %10 = vector.load %arg10[%c2, %c0_8] : memref<3x506xf32, #tpu.memory_space<vmem>>, vector<1x506xf32>
    %11 = arith.addf %9, %10 : vector<1x506xf32>
    %12 = vector.extract_strided_slice %11 {offsets = [0, 0], sizes = [1, 250], strides = [1, 1]} : vector<1x506xf32> to vector<1x250xf32>
    %13 = vector.extract_strided_slice %11 {offsets = [0, 256], sizes = [1, 250], strides = [1, 1]} : vector<1x506xf32> to vector<1x250xf32>
    %14 = arith.maximumf %12, %13 : vector<1x250xf32>
    %c0_9 = arith.constant 0 : index
    %c0_10 = arith.constant 0 : index
    %15 = vector.load %arg3[%c0_9, %c0_10] : memref<250x248xf32, #tpu.memory_space<vmem>>, vector<250x248xf32>
    %cst_11 = arith.constant dense<0.000000e+00> : vector<1x248xf32>
    %16 = tpu.matmul %14, %15, %cst_11 {dimension_numbers = #tpu.dot_dimension_numbers<[1], [0], [0], [1], [0, 0, 1, 1], [], []>} : vector<1x250xf32>, vector<250x248xf32>, vector<1x248xf32> -> vector<1x248xf32>
    %c0_12 = arith.constant 0 : index
    %c0_13 = arith.constant 0 : index
    %17 = vector.load %arg11[%c0_12, %c0_13] : memref<3x248xf32, #tpu.memory_space<vmem>>, vector<1x248xf32>
    %18 = arith.addf %16, %17 : vector<1x248xf32>
    %cst_14 = arith.constant 0.000000e+00 : f32
    %19 = vector.broadcast %cst_14 : f32 to vector<1x248xf32>
    %20 = arith.maximumf %18, %19 : vector<1x248xf32>
    %c1_15 = arith.constant 1 : index
    %c0_16 = arith.constant 0 : index
    %21 = vector.load %arg11[%c1_15, %c0_16] : memref<3x248xf32, #tpu.memory_space<vmem>>, vector<1x248xf32>
    %22 = arith.mulf %20, %21 : vector<1x248xf32>
    %c2_17 = arith.constant 2 : index
    %c0_18 = arith.constant 0 : index
    %23 = vector.load %arg11[%c2_17, %c0_18] : memref<3x248xf32, #tpu.memory_space<vmem>>, vector<1x248xf32>
    %24 = arith.addf %22, %23 : vector<1x248xf32>
    %25 = vector.extract_strided_slice %24 {offsets = [0, 0], sizes = [1, 120], strides = [1, 1]} : vector<1x248xf32> to vector<1x120xf32>
    %26 = vector.extract_strided_slice %24 {offsets = [0, 128], sizes = [1, 120], strides = [1, 1]} : vector<1x248xf32> to vector<1x120xf32>
    %27 = arith.maximumf %25, %26 : vector<1x120xf32>
    %c0_19 = arith.constant 0 : index
    %c0_20 = arith.constant 0 : index
    %28 = vector.load %arg4[%c0_19, %c0_20] : memref<120x240xf32, #tpu.memory_space<vmem>>, vector<120x240xf32>
    %cst_21 = arith.constant dense<0.000000e+00> : vector<1x240xf32>
    %29 = tpu.matmul %27, %28, %cst_21 {dimension_numbers = #tpu.dot_dimension_numbers<[1], [0], [0], [1], [0, 0, 1, 1], [], []>} : vector<1x120xf32>, vector<120x240xf32>, vector<1x240xf32> -> vector<1x240xf32>
    %c0_22 = arith.constant 0 : index
    %c0_23 = arith.constant 0 : index
    %30 = vector.load %arg12[%c0_22, %c0_23] : memref<3x240xf32, #tpu.memory_space<vmem>>, vector<1x240xf32>
    %31 = arith.addf %29, %30 : vector<1x240xf32>
    %c1_24 = arith.constant 1 : index
    %c0_25 = arith.constant 0 : index
    %32 = vector.load %arg12[%c1_24, %c0_25] : memref<3x240xf32, #tpu.memory_space<vmem>>, vector<1x240xf32>
    %33 = arith.mulf %31, %32 : vector<1x240xf32>
    %c2_26 = arith.constant 2 : index
    %c0_27 = arith.constant 0 : index
    %34 = vector.load %arg12[%c2_26, %c0_27] : memref<3x240xf32, #tpu.memory_space<vmem>>, vector<1x240xf32>
    %35 = arith.addf %33, %34 : vector<1x240xf32>
    %c0_28 = arith.constant 0 : index
    %c0_29 = arith.constant 0 : index
    %36 = vector.load %arg5[%c0_28, %c0_29] : memref<240x20xf32, #tpu.memory_space<vmem>>, vector<240x20xf32>
    %cst_30 = arith.constant dense<0.000000e+00> : vector<1x20xf32>
    %37 = tpu.matmul %35, %36, %cst_30 {dimension_numbers = #tpu.dot_dimension_numbers<[1], [0], [0], [1], [0, 0, 1, 1], [], []>} : vector<1x240xf32>, vector<240x20xf32>, vector<1x20xf32> -> vector<1x20xf32>
    %c0_31 = arith.constant 0 : index
    %c0_32 = arith.constant 0 : index
    %38 = vector.load %arg15[%c0_31, %c0_32] : memref<1x20xf32, #tpu.memory_space<vmem>>, vector<1x20xf32>
    %39 = arith.addf %37, %38 : vector<1x20xf32>
    %c0_33 = arith.constant 0 : index
    %c0_34 = arith.constant 0 : index
    %40 = vector.load %arg6[%c0_33, %c0_34] : memref<20x120xf32, #tpu.memory_space<vmem>>, vector<20x120xf32>
    %cst_35 = arith.constant dense<0.000000e+00> : vector<1x120xf32>
    %41 = tpu.matmul %39, %40, %cst_35 {dimension_numbers = #tpu.dot_dimension_numbers<[1], [0], [0], [1], [0, 0, 1, 1], [], []>} : vector<1x20xf32>, vector<20x120xf32>, vector<1x120xf32> -> vector<1x120xf32>
    %c0_36 = arith.constant 0 : index
    %c0_37 = arith.constant 0 : index
    %42 = vector.load %arg16[%c0_36, %c0_37] : memref<1x120xf32, #tpu.memory_space<vmem>>, vector<1x120xf32>
    %43 = arith.addf %41, %42 : vector<1x120xf32>
    %cst_38 = arith.constant 0.000000e+00 : f32
    %44 = vector.broadcast %cst_38 : f32 to vector<1x120xf32>
    %45 = arith.maximumf %43, %44 : vector<1x120xf32>
    %c0_39 = arith.constant 0 : index
    %c0_40 = arith.constant 0 : index
    %46 = vector.load %arg7[%c0_39, %c0_40] : memref<120x120xf32, #tpu.memory_space<vmem>>, vector<120x120xf32>
    %cst_41 = arith.constant dense<0.000000e+00> : vector<1x120xf32>
    %47 = tpu.matmul %45, %46, %cst_41 {dimension_numbers = #tpu.dot_dimension_numbers<[1], [0], [0], [1], [0, 0, 1, 1], [], []>} : vector<1x120xf32>, vector<120x120xf32>, vector<1x120xf32> -> vector<1x120xf32>
    %c0_42 = arith.constant 0 : index
    %c0_43 = arith.constant 0 : index
    %48 = vector.load %arg13[%c0_42, %c0_43] : memref<3x120xf32, #tpu.memory_space<vmem>>, vector<1x120xf32>
    %49 = arith.addf %47, %48 : vector<1x120xf32>
    %cst_44 = arith.constant 0.000000e+00 : f32
    %50 = vector.broadcast %cst_44 : f32 to vector<1x120xf32>
    %51 = arith.maximumf %49, %50 : vector<1x120xf32>
    %c1_45 = arith.constant 1 : index
    %c0_46 = arith.constant 0 : index
    %52 = vector.load %arg13[%c1_45, %c0_46] : memref<3x120xf32, #tpu.memory_space<vmem>>, vector<1x120xf32>
    %53 = arith.mulf %51, %52 : vector<1x120xf32>
    %c2_47 = arith.constant 2 : index
    %c0_48 = arith.constant 0 : index
    %54 = vector.load %arg13[%c2_47, %c0_48] : memref<3x120xf32, #tpu.memory_space<vmem>>, vector<1x120xf32>
    %55 = arith.addf %53, %54 : vector<1x120xf32>
    %c0_49 = arith.constant 0 : index
    %c0_50 = arith.constant 0 : index
    %56 = vector.load %arg8[%c0_49, %c0_50] : memref<120x250xf32, #tpu.memory_space<vmem>>, vector<120x250xf32>
    %cst_51 = arith.constant dense<0.000000e+00> : vector<1x250xf32>
    %57 = tpu.matmul %55, %56, %cst_51 {dimension_numbers = #tpu.dot_dimension_numbers<[1], [0], [0], [1], [0, 0, 1, 1], [], []>} : vector<1x120xf32>, vector<120x250xf32>, vector<1x250xf32> -> vector<1x250xf32>
    %c0_52 = arith.constant 0 : index
    %c0_53 = arith.constant 0 : index
    %58 = vector.load %arg14[%c0_52, %c0_53] : memref<3x250xf32, #tpu.memory_space<vmem>>, vector<1x250xf32>
    %59 = arith.addf %57, %58 : vector<1x250xf32>
    %cst_54 = arith.constant 0.000000e+00 : f32
    %60 = vector.broadcast %cst_54 : f32 to vector<1x250xf32>
    %61 = arith.maximumf %59, %60 : vector<1x250xf32>
    %c1_55 = arith.constant 1 : index
    %c0_56 = arith.constant 0 : index
    %62 = vector.load %arg14[%c1_55, %c0_56] : memref<3x250xf32, #tpu.memory_space<vmem>>, vector<1x250xf32>
    %63 = arith.mulf %61, %62 : vector<1x250xf32>
    %c2_57 = arith.constant 2 : index
    %c0_58 = arith.constant 0 : index
    %64 = vector.load %arg14[%c2_57, %c0_58] : memref<3x250xf32, #tpu.memory_space<vmem>>, vector<1x250xf32>
    %65 = arith.addf %63, %64 : vector<1x250xf32>
    %c0_59 = arith.constant 0 : index
    %c0_60 = arith.constant 0 : index
    %66 = vector.load %arg9[%c0_59, %c0_60] : memref<250x1000xf32, #tpu.memory_space<vmem>>, vector<250x1000xf32>
    %cst_61 = arith.constant dense<0.000000e+00> : vector<1x1000xf32>
    %67 = tpu.matmul %65, %66, %cst_61 {dimension_numbers = #tpu.dot_dimension_numbers<[1], [0], [0], [1], [0, 0, 1, 1], [], []>} : vector<1x250xf32>, vector<250x1000xf32>, vector<1x1000xf32> -> vector<1x1000xf32>
    %c0_62 = arith.constant 0 : index
    %c0_63 = arith.constant 0 : index
    %68 = vector.load %arg17[%c0_62, %c0_63] : memref<1x1000xf32, #tpu.memory_space<vmem>>, vector<1x1000xf32>
    %69 = arith.addf %67, %68 : vector<1x1000xf32>
    %cst_64 = arith.constant 0.000000e+00 : f32
    %70 = vector.broadcast %cst_64 : f32 to vector<1x1000xf32>
    %71 = arith.maximumf %69, %70 : vector<1x1000xf32>
    %c0_65 = arith.constant 0 : index
    %c0_66 = arith.constant 0 : index
    %c0_67 = arith.constant 0 : index
    %72 = vector.load %arg18[%c0_65, %c0_66, %c0_67] : memref<1x1x1000xf32, #tpu.memory_space<vmem>>, vector<1x1x1000xf32>
    %73 = vector.shape_cast %72 : vector<1x1x1000xf32> to vector<1x1000xf32>
    %74 = vector.shape_cast %71 : vector<1x1000xf32> to vector<1x1x1000xf32>
    tpu.vector_store %arg18[%c0_65, %c0_66, %c0_67], %74 {strides = array<i32>} : memref<1x1x1000xf32, #tpu.memory_space<vmem>>, vector<1x1x1000xf32>,
    return
  }
  func.func @transform_0(%arg0: i32) -> (i32, i32, i32) {
    %c0_i32 = arith.constant 0 : i32
    %c0_i32_0 = arith.constant 0 : i32
    %c0_i32_1 = arith.constant 0 : i32
    return %arg0, %c0_i32, %c0_i32_0 : i32, i32, i32
  }
  func.func @transform_1(%arg0: i32) -> (i32, i32) {
    %c0_i32 = arith.constant 0 : i32
    %c0_i32_0 = arith.constant 0 : i32
    %c0_i32_1 = arith.constant 0 : i32
    return %c0_i32, %c0_i32_0 : i32, i32
  }
  func.func @transform_2(%arg0: i32) -> (i32, i32) {
    %c0_i32 = arith.constant 0 : i32
    %c0_i32_0 = arith.constant 0 : i32
    %c0_i32_1 = arith.constant 0 : i32
    return %c0_i32, %c0_i32_0 : i32, i32
  }
  func.func @transform_3(%arg0: i32) -> (i32, i32) {
    %c0_i32 = arith.constant 0 : i32
    %c0_i32_0 = arith.constant 0 : i32
    %c0_i32_1 = arith.constant 0 : i32
    return %c0_i32, %c0_i32_0 : i32, i32
  }
  func.func @transform_4(%arg0: i32) -> (i32, i32) {
    %c0_i32 = arith.constant 0 : i32
    %c0_i32_0 = arith.constant 0 : i32
    %c0_i32_1 = arith.constant 0 : i32
    return %c0_i32, %c0_i32_0 : i32, i32
  }
  func.func @transform_5(%arg0: i32) -> (i32, i32) {
    %c0_i32 = arith.constant 0 : i32
    %c0_i32_0 = arith.constant 0 : i32
    %c0_i32_1 = arith.constant 0 : i32
    return %c0_i32, %c0_i32_0 : i32, i32
  }
  func.func @transform_6(%arg0: i32) -> (i32, i32) {
    %c0_i32 = arith.constant 0 : i32
    %c0_i32_0 = arith.constant 0 : i32
    %c0_i32_1 = arith.constant 0 : i32
    return %c0_i32, %c0_i32_0 : i32, i32
  }
  func.func @transform_7(%arg0: i32) -> (i32, i32) {
    %c0_i32 = arith.constant 0 : i32
    %c0_i32_0 = arith.constant 0 : i32
    %c0_i32_1 = arith.constant 0 : i32
    return %c0_i32, %c0_i32_0 : i32, i32
  }
  func.func @transform_8(%arg0: i32) -> (i32, i32) {
    %c0_i32 = arith.constant 0 : i32
    %c0_i32_0 = arith.constant 0 : i32
    %c0_i32_1 = arith.constant 0 : i32
    return %c0_i32, %c0_i32_0 : i32, i32
  }
  func.func @transform_9(%arg0: i32) -> (i32, i32) {
    %c0_i32 = arith.constant 0 : i32
    %c0_i32_0 = arith.constant 0 : i32
    %c0_i32_1 = arith.constant 0 : i32
    return %c0_i32, %c0_i32_0 : i32, i32
  }
  func.func @transform_10(%arg0: i32) -> (i32, i32) {
    %c0_i32 = arith.constant 0 : i32
    %c0_i32_0 = arith.constant 0 : i32
    %c0_i32_1 = arith.constant 0 : i32
    return %c0_i32, %c0_i32_0 : i32, i32
  }
  func.func @transform_11(%arg0: i32) -> (i32, i32) {
    %c0_i32 = arith.constant 0 : i32
    %c0_i32_0 = arith.constant 0 : i32
    %c0_i32_1 = arith.constant 0 : i32
    return %c0_i32, %c0_i32_0 : i32, i32
  }
  func.func @transform_12(%arg0: i32) -> (i32, i32) {
    %c0_i32 = arith.constant 0 : i32
    %c0_i32_0 = arith.constant 0 : i32
    %c0_i32_1 = arith.constant 0 : i32
    return %c0_i32, %c0_i32_0 : i32, i32
  }
  func.func @transform_13(%arg0: i32) -> (i32, i32) {
    %c0_i32 = arith.constant 0 : i32
    %c0_i32_0 = arith.constant 0 : i32
    %c0_i32_1 = arith.constant 0 : i32
    return %c0_i32, %c0_i32_0 : i32, i32
  }
  func.func @transform_14(%arg0: i32) -> (i32, i32) {
    %c0_i32 = arith.constant 0 : i32
    %c0_i32_0 = arith.constant 0 : i32
    %c0_i32_1 = arith.constant 0 : i32
    return %c0_i32, %c0_i32_0 : i32, i32
  }
  func.func @transform_15(%arg0: i32) -> (i32, i32) {
    %c0_i32 = arith.constant 0 : i32
    %c0_i32_0 = arith.constant 0 : i32
    %c0_i32_1 = arith.constant 0 : i32
    return %c0_i32, %c0_i32_0 : i32, i32
  }
  func.func @transform_16(%arg0: i32) -> (i32, i32) {
    %c0_i32 = arith.constant 0 : i32
    %c0_i32_0 = arith.constant 0 : i32
    %c0_i32_1 = arith.constant 0 : i32
    return %c0_i32, %c0_i32_0 : i32, i32
  }
  func.func @transform_17(%arg0: i32) -> (i32, i32, i32) {
    %c0_i32 = arith.constant 0 : i32
    %c0_i32_0 = arith.constant 0 : i32
    %c0_i32_1 = arith.constant 0 : i32
    return %arg0, %c0_i32, %c0_i32_0 : i32, i32, i32
  }
}

</mosaic_0001>

<llo_original>
// kernel: tpu_custom_call.1
$region0: #{tpu_custom_call.1}
  #allocation0 [shape = 'u32[]', space=smem, size = 0x4, offset = 0x4, fixed_abs, tag = 'smem constant byte address 0x4 - core index']
  #allocation1 [shape = 'u32[144,128]{1,0:T(1,128)}', space=vmem, size = 0x12000, scoped, tag = 'internal scratch']
  %s0 = inlined_call_operand.vmem [shape: f32[2,1,1000], index: 0, kind: input, shape index: {}]
  %s1 = inlined_call_operand.vmem [shape: f32[1000,506], index: 1, kind: input, shape index: {}]
  %s2 = inlined_call_operand.vmem [shape: f32[250,248], index: 2, kind: input, shape index: {}]
  %s3 = inlined_call_operand.vmem [shape: f32[120,240], index: 3, kind: input, shape index: {}]
  %s4 = inlined_call_operand.vmem [shape: f32[240,20], index: 4, kind: input, shape index: {}]
  %s5 = inlined_call_operand.vmem [shape: f32[20,120], index: 5, kind: input, shape index: {}]
  %s6 = inlined_call_operand.vmem [shape: f32[120,120], index: 6, kind: input, shape index: {}]
  %s7 = inlined_call_operand.vmem [shape: f32[120,250], index: 7, kind: input, shape index: {}]
  %s8 = inlined_call_operand.vmem [shape: f32[250,1000], index: 8, kind: input, shape index: {}]
  %s9 = inlined_call_operand.vmem [shape: f32[3,506], index: 9, kind: input, shape index: {}]
  %s10 = inlined_call_operand.vmem [shape: f32[3,248], index: 10, kind: input, shape index: {}]
  %s11 = inlined_call_operand.vmem [shape: f32[3,240], index: 11, kind: input, shape index: {}]
  %s12 = inlined_call_operand.vmem [shape: f32[3,120], index: 12, kind: input, shape index: {}]
  %s13 = inlined_call_operand.vmem [shape: f32[3,250], index: 13, kind: input, shape index: {}]
  %s14 = inlined_call_operand.vmem [shape: f32[1,20], index: 14, kind: input, shape index: {}]
  %s15 = inlined_call_operand.vmem [shape: f32[1,120], index: 15, kind: input, shape index: {}]
  %s16 = inlined_call_operand.vmem [shape: f32[1,1000], index: 16, kind: input, shape index: {}]
  %s17 = inlined_call_operand.hbm [shape: f32[2,1,1000], index: 17, kind: output, shape index: {}]
  %s18 = sld [smem:[#allocation0]]
  $region101: #{tpu_custom_call.1} parent=0
    _
  %s20 = ssub.s32 1, %s18
  %s21 = scalar_select 0, %s20, %s18
  $region1: #{tpu_custom_call.1} parent=0
    #allocation2 [shape = 'u8[8192]{0}', space=vmem, size = 0x2000, scoped, tag = 'output window, operand 0']
    #allocation3 [shape = 's32[2]{0}', space=sflag, size = 0x8, scoped, tag = 'scoped memory for tpu_custom_call.1']
    %22 = vsyncpa [#allocation3], 0
    %s23 = scalar_lea.sflag [#allocation3], 1
    %24 = vsyncpa %s23, 0
    loop: start=0, step=1, limit=4
    $region2: #{tpu_custom_call.1} parent=1 // loop_pre_header
      _
    $region3: #{tpu_custom_call.1} parent=1 // loop_header
      %s26 = sphi 0, %s30
      %p27 = scmp.ge.s32.totalorder %s26, 4
      %s36 = sphi 0, %s38
      %s39 = sphi 0, %s36
      %s40 = sphi 0, %s39
      %s56 = sphi 0, %s40
      %s60 = sphi 0, %s60
      %s62 = sphi 0, %s60
      %s63 = sphi 0, %s62
      %s77 = sphi 0, %s63
      %s81 = sphi 0, %s81
      %s83 = sphi 0, %s81
      %s84 = sphi 0, %s83
      %s98 = sphi 0, %s84
      %s102 = sphi 0, %s102
      %s104 = sphi 0, %s102
      %s105 = sphi 0, %s104
      %s119 = sphi 0, %s105
      %s123 = sphi 0, %s123
      %s125 = sphi 0, %s123
      %s126 = sphi 0, %s125
      %s140 = sphi 0, %s126
      %s144 = sphi 0, %s144
      %s146 = sphi 0, %s144
      %s147 = sphi 0, %s146
      %s161 = sphi 0, %s147
      %s165 = sphi 0, %s165
      %s167 = sphi 0, %s165
      %s168 = sphi 0, %s167
      %s182 = sphi 0, %s168
      %s186 = sphi 0, %s186
      %s188 = sphi 0, %s186
      %s189 = sphi 0, %s188
      %s203 = sphi 0, %s189
      %s207 = sphi 0, %s207
      %s209 = sphi 0, %s207
      %s210 = sphi 0, %s209
      %s224 = sphi 0, %s210
      %s228 = sphi 0, %s228
      %s230 = sphi 0, %s228
      %s231 = sphi 0, %s230
      %s245 = sphi 0, %s231
      %s249 = sphi 0, %s249
      %s251 = sphi 0, %s249
      %s252 = sphi 0, %s251
      %s266 = sphi 0, %s252
      %s270 = sphi 0, %s270
      %s272 = sphi 0, %s270
      %s273 = sphi 0, %s272
      %s287 = sphi 0, %s273
      %s291 = sphi 0, %s291
      %s293 = sphi 0, %s291
      %s294 = sphi 0, %s293
      %s308 = sphi 0, %s294
      %s312 = sphi 0, %s312
      %s314 = sphi 0, %s312
      %s315 = sphi 0, %s314
      %s329 = sphi 0, %s315
      %s333 = sphi 0, %s333
      %s335 = sphi 0, %s333
      %s336 = sphi 0, %s335
      %s350 = sphi 0, %s336
      %s354 = sphi 0, %s354
      %s356 = sphi 0, %s354
      %s357 = sphi 0, %s356
      %s371 = sphi 0, %s357
      %s375 = sphi 0, %s375
      %s377 = sphi 0, %s375
      %s378 = sphi 0, %s377
      %s392 = sphi 0, %s378
      %s398 = sphi 0, %s400
      %s401 = sphi 0, %s398
      %s402 = sphi 0, %s401
      %s418 = sphi 0, %s402
    $region4: #{tpu_custom_call.1} parent=1 // loop_header_branch
      %29 = sbr.rel (%p27) target = $region8
    $region5: #{tpu_custom_call.1} parent=1 // loop_body
      %s31 = ssub.s32 %s26, 1
      %s32 = ssub.s32 %s26, 2
      %s33 = sadd.s32 %s26, 1
      %s34 = ssub.s32 %s26, %s33
      %p35 = scmp.eq.s32.totalorder %s34, 0
      %s37 = sadd.s32 %s36, 1
      %s38 = scalar_select %p35, %s36, %s37
      %p41 = pneg %p35
      %p42 = scmp.eq.s32.totalorder %s26, 1
      %p43 = por %p41, %p42
      %p44 = scmp.ne.s32.totalorder %s36, %s39
      %p45 = scmp.eq.s32.totalorder %s26, 0
      %p46 = por %p44, %p45
      %p47 = scmp.ne.s32.totalorder %s36, %s39
      %p48 = scmp.eq.s32.totalorder %s31, 1
      %p49 = por %p47, %p48
      %p50 = scmp.ne.s32.totalorder %s39, %s40
      %p51 = scmp.eq.s32.totalorder %s31, 0
      %p52 = por %p50, %p51
      %p53 = scmp.ne.s32.totalorder %s39, %s40
      %p54 = scmp.eq.s32.totalorder %s32, 1
      %p55 = por %p53, %p54
      %p57 = scmp.ne.s32.totalorder %s40, %s56
      %p58 = scmp.eq.s32.totalorder %s32, 0
      %p59 = por %p57, %p58
      %s61 = sadd.s32 %s60, 1
      %p64 = scmp.eq.s32.totalorder %s26, 1
      %p65 = scmp.ne.s32.totalorder %s60, %s62
      %p66 = scmp.eq.s32.totalorder %s26, 0
      %p67 = por %p65, %p66
      %p68 = scmp.ne.s32.totalorder %s60, %s62
      %p69 = scmp.eq.s32.totalorder %s31, 1
      %p70 = por %p68, %p69
      %p71 = scmp.ne.s32.totalorder %s62, %s63
      %p72 = scmp.eq.s32.totalorder %s31, 0
      %p73 = por %p71, %p72
      %p74 = scmp.ne.s32.totalorder %s62, %s63
      %p75 = scmp.eq.s32.totalorder %s32, 1
      %p76 = por %p74, %p75
      %p78 = scmp.ne.s32.totalorder %s63, %s77
      %p79 = scmp.eq.s32.totalorder %s32, 0
      %p80 = por %p78, %p79
      %s82 = sadd.s32 %s81, 1
      %p85 = scmp.eq.s32.totalorder %s26, 1
      %p86 = scmp.ne.s32.totalorder %s81, %s83
      %p87 = scmp.eq.s32.totalorder %s26, 0
      %p88 = por %p86, %p87
      %p89 = scmp.ne.s32.totalorder %s81, %s83
      %p90 = scmp.eq.s32.totalorder %s31, 1
      %p91 = por %p89, %p90
      %p92 = scmp.ne.s32.totalorder %s83, %s84
      %p93 = scmp.eq.s32.totalorder %s31, 0
      %p94 = por %p92, %p93
      %p95 = scmp.ne.s32.totalorder %s83, %s84
      %p96 = scmp.eq.s32.totalorder %s32, 1
      %p97 = por %p95, %p96
      %p99 = scmp.ne.s32.totalorder %s84, %s98
      %p100 = scmp.eq.s32.totalorder %s32, 0
      %p101 = por %p99, %p100
      %s103 = sadd.s32 %s102, 1
      %p106 = scmp.eq.s32.totalorder %s26, 1
      %p107 = scmp.ne.s32.totalorder %s102, %s104
      %p108 = scmp.eq.s32.totalorder %s26, 0
      %p109 = por %p107, %p108
      %p110 = scmp.ne.s32.totalorder %s102, %s104
      %p111 = scmp.eq.s32.totalorder %s31, 1
      %p112 = por %p110, %p111
      %p113 = scmp.ne.s32.totalorder %s104, %s105
      %p114 = scmp.eq.s32.totalorder %s31, 0
      %p115 = por %p113, %p114
      %p116 = scmp.ne.s32.totalorder %s104, %s105
      %p117 = scmp.eq.s32.totalorder %s32, 1
      %p118 = por %p116, %p117
      %p120 = scmp.ne.s32.totalorder %s105, %s119
      %p121 = scmp.eq.s32.totalorder %s32, 0
      %p122 = por %p120, %p121
      %s124 = sadd.s32 %s123, 1
      %p127 = scmp.eq.s32.totalorder %s26, 1
      %p128 = scmp.ne.s32.totalorder %s123, %s125
      %p129 = scmp.eq.s32.totalorder %s26, 0
      %p130 = por %p128, %p129
      %p131 = scmp.ne.s32.totalorder %s123, %s125
      %p132 = scmp.eq.s32.totalorder %s31, 1
      %p133 = por %p131, %p132
      %p134 = scmp.ne.s32.totalorder %s125, %s126
      %p135 = scmp.eq.s32.totalorder %s31, 0
      %p136 = por %p134, %p135
      %p137 = scmp.ne.s32.totalorder %s125, %s126
      %p138 = scmp.eq.s32.totalorder %s32, 1
      %p139 = por %p137, %p138
      %p141 = scmp.ne.s32.totalorder %s126, %s140
      %p142 = scmp.eq.s32.totalorder %s32, 0
      %p143 = por %p141, %p142
      %s145 = sadd.s32 %s144, 1
      %p148 = scmp.eq.s32.totalorder %s26, 1
      %p149 = scmp.ne.s32.totalorder %s144, %s146
      %p150 = scmp.eq.s32.totalorder %s26, 0
      %p151 = por %p149, %p150
      %p152 = scmp.ne.s32.totalorder %s144, %s146
      %p153 = scmp.eq.s32.totalorder %s31, 1
      %p154 = por %p152, %p153
      %p155 = scmp.ne.s32.totalorder %s146, %s147
      %p156 = scmp.eq.s32.totalorder %s31, 0
      %p157 = por %p155, %p156
      %p158 = scmp.ne.s32.totalorder %s146, %s147
      %p159 = scmp.eq.s32.totalorder %s32, 1
      %p160 = por %p158, %p159
      %p162 = scmp.ne.s32.totalorder %s147, %s161
      %p163 = scmp.eq.s32.totalorder %s32, 0
      %p164 = por %p162, %p163
      %s166 = sadd.s32 %s165, 1
      %p169 = scmp.eq.s32.totalorder %s26, 1
      %p170 = scmp.ne.s32.totalorder %s165, %s167
      %p171 = scmp.eq.s32.totalorder %s26, 0
      %p172 = por %p170, %p171
      %p173 = scmp.ne.s32.totalorder %s165, %s167
      %p174 = scmp.eq.s32.totalorder %s31, 1
      %p175 = por %p173, %p174
      %p176 = scmp.ne.s32.totalorder %s167, %s168
      %p177 = scmp.eq.s32.totalorder %s31, 0
      %p178 = por %p176, %p177
      %p179 = scmp.ne.s32.totalorder %s167, %s168
      %p180 = scmp.eq.s32.totalorder %s32, 1
      %p181 = por %p179, %p180
      %p183 = scmp.ne.s32.totalorder %s168, %s182
      %p184 = scmp.eq.s32.totalorder %s32, 0
      %p185 = por %p183, %p184
      %s187 = sadd.s32 %s186, 1
      %p190 = scmp.eq.s32.totalorder %s26, 1
      %p191 = scmp.ne.s32.totalorder %s186, %s188
      %p192 = scmp.eq.s32.totalorder %s26, 0
      %p193 = por %p191, %p192
      %p194 = scmp.ne.s32.totalorder %s186, %s188
      %p195 = scmp.eq.s32.totalorder %s31, 1
      %p196 = por %p194, %p195
      %p197 = scmp.ne.s32.totalorder %s188, %s189
      %p198 = scmp.eq.s32.totalorder %s31, 0
      %p199 = por %p197, %p198
      %p200 = scmp.ne.s32.totalorder %s188, %s189
      %p201 = scmp.eq.s32.totalorder %s32, 1
      %p202 = por %p200, %p201
      %p204 = scmp.ne.s32.totalorder %s189, %s203
      %p205 = scmp.eq.s32.totalorder %s32, 0
      %p206 = por %p204, %p205
      %s208 = sadd.s32 %s207, 1
      %p211 = scmp.eq.s32.totalorder %s26, 1
      %p212 = scmp.ne.s32.totalorder %s207, %s209
      %p213 = scmp.eq.s32.totalorder %s26, 0
      %p214 = por %p212, %p213
      %p215 = scmp.ne.s32.totalorder %s207, %s209
      %p216 = scmp.eq.s32.totalorder %s31, 1
      %p217 = por %p215, %p216
      %p218 = scmp.ne.s32.totalorder %s209, %s210
      %p219 = scmp.eq.s32.totalorder %s31, 0
      %p220 = por %p218, %p219
      %p221 = scmp.ne.s32.totalorder %s209, %s210
      %p222 = scmp.eq.s32.totalorder %s32, 1
      %p223 = por %p221, %p222
      %p225 = scmp.ne.s32.totalorder %s210, %s224
      %p226 = scmp.eq.s32.totalorder %s32, 0
      %p227 = por %p225, %p226
      %s229 = sadd.s32 %s228, 1
      %p232 = scmp.eq.s32.totalorder %s26, 1
      %p233 = scmp.ne.s32.totalorder %s228, %s230
      %p234 = scmp.eq.s32.totalorder %s26, 0
      %p235 = por %p233, %p234
      %p236 = scmp.ne.s32.totalorder %s228, %s230
      %p237 = scmp.eq.s32.totalorder %s31, 1
      %p238 = por %p236, %p237
      %p239 = scmp.ne.s32.totalorder %s230, %s231
      %p240 = scmp.eq.s32.totalorder %s31, 0
      %p241 = por %p239, %p240
      %p242 = scmp.ne.s32.totalorder %s230, %s231
      %p243 = scmp.eq.s32.totalorder %s32, 1
      %p244 = por %p242, %p243
      %p246 = scmp.ne.s32.totalorder %s231, %s245
      %p247 = scmp.eq.s32.totalorder %s32, 0
      %p248 = por %p246, %p247
      %s250 = sadd.s32 %s249, 1
      %p253 = scmp.eq.s32.totalorder %s26, 1
      %p254 = scmp.ne.s32.totalorder %s249, %s251
      %p255 = scmp.eq.s32.totalorder %s26, 0
      %p256 = por %p254, %p255
      %p257 = scmp.ne.s32.totalorder %s249, %s251
      %p258 = scmp.eq.s32.totalorder %s31, 1
      %p259 = por %p257, %p258
      %p260 = scmp.ne.s32.totalorder %s251, %s252
      %p261 = scmp.eq.s32.totalorder %s31, 0
      %p262 = por %p260, %p261
      %p263 = scmp.ne.s32.totalorder %s251, %s252
      %p264 = scmp.eq.s32.totalorder %s32, 1
      %p265 = por %p263, %p264
      %p267 = scmp.ne.s32.totalorder %s252, %s266
      %p268 = scmp.eq.s32.totalorder %s32, 0
      %p269 = por %p267, %p268
      %s271 = sadd.s32 %s270, 1
      %p274 = scmp.eq.s32.totalorder %s26, 1
      %p275 = scmp.ne.s32.totalorder %s270, %s272
      %p276 = scmp.eq.s32.totalorder %s26, 0
      %p277 = por %p275, %p276
      %p278 = scmp.ne.s32.totalorder %s270, %s272
      %p279 = scmp.eq.s32.totalorder %s31, 1
      %p280 = por %p278, %p279
      %p281 = scmp.ne.s32.totalorder %s272, %s273
      %p282 = scmp.eq.s32.totalorder %s31, 0
      %p283 = por %p281, %p282
      %p284 = scmp.ne.s32.totalorder %s272, %s273
      %p285 = scmp.eq.s32.totalorder %s32, 1
      %p286 = por %p284, %p285
      %p288 = scmp.ne.s32.totalorder %s273, %s287
      %p289 = scmp.eq.s32.totalorder %s32, 0
      %p290 = por %p288, %p289
      %s292 = sadd.s32 %s291, 1
      %p295 = scmp.eq.s32.totalorder %s26, 1
      %p296 = scmp.ne.s32.totalorder %s291, %s293
      %p297 = scmp.eq.s32.totalorder %s26, 0
      %p298 = por %p296, %p297
      %p299 = scmp.ne.s32.totalorder %s291, %s293
      %p300 = scmp.eq.s32.totalorder %s31, 1
      %p301 = por %p299, %p300
      %p302 = scmp.ne.s32.totalorder %s293, %s294
      %p303 = scmp.eq.s32.totalorder %s31, 0
      %p304 = por %p302, %p303
      %p305 = scmp.ne.s32.totalorder %s293, %s294
      %p306 = scmp.eq.s32.totalorder %s32, 1
      %p307 = por %p305, %p306
      %p309 = scmp.ne.s32.totalorder %s294, %s308
      %p310 = scmp.eq.s32.totalorder %s32, 0
      %p311 = por %p309, %p310
      %s313 = sadd.s32 %s312, 1
      %p316 = scmp.eq.s32.totalorder %s26, 1
      %p317 = scmp.ne.s32.totalorder %s312, %s314
      %p318 = scmp.eq.s32.totalorder %s26, 0
      %p319 = por %p317, %p318
      %p320 = scmp.ne.s32.totalorder %s312, %s314
      %p321 = scmp.eq.s32.totalorder %s31, 1
      %p322 = por %p320, %p321
      %p323 = scmp.ne.s32.totalorder %s314, %s315
      %p324 = scmp.eq.s32.totalorder %s31, 0
      %p325 = por %p323, %p324
      %p326 = scmp.ne.s32.totalorder %s314, %s315
      %p327 = scmp.eq.s32.totalorder %s32, 1
      %p328 = por %p326, %p327
      %p330 = scmp.ne.s32.totalorder %s315, %s329
      %p331 = scmp.eq.s32.totalorder %s32, 0
      %p332 = por %p330, %p331
      %s334 = sadd.s32 %s333, 1
      %p337 = scmp.eq.s32.totalorder %s26, 1
      %p338 = scmp.ne.s32.totalorder %s333, %s335
      %p339 = scmp.eq.s32.totalorder %s26, 0
      %p340 = por %p338, %p339
      %p341 = scmp.ne.s32.totalorder %s333, %s335
      %p342 = scmp.eq.s32.totalorder %s31, 1
      %p343 = por %p341, %p342
      %p344 = scmp.ne.s32.totalorder %s335, %s336
      %p345 = scmp.eq.s32.totalorder %s31, 0
      %p346 = por %p344, %p345
      %p347 = scmp.ne.s32.totalorder %s335, %s336
      %p348 = scmp.eq.s32.totalorder %s32, 1
      %p349 = por %p347, %p348
      %p351 = scmp.ne.s32.totalorder %s336, %s350
      %p352 = scmp.eq.s32.totalorder %s32, 0
      %p353 = por %p351, %p352
      %s355 = sadd.s32 %s354, 1
      %p358 = scmp.eq.s32.totalorder %s26, 1
      %p359 = scmp.ne.s32.totalorder %s354, %s356
      %p360 = scmp.eq.s32.totalorder %s26, 0
      %p361 = por %p359, %p360
      %p362 = scmp.ne.s32.totalorder %s354, %s356
      %p363 = scmp.eq.s32.totalorder %s31, 1
      %p364 = por %p362, %p363
      %p365 = scmp.ne.s32.totalorder %s356, %s357
      %p366 = scmp.eq.s32.totalorder %s31, 0
      %p367 = por %p365, %p366
      %p368 = scmp.ne.s32.totalorder %s356, %s357
      %p369 = scmp.eq.s32.totalorder %s32, 1
      %p370 = por %p368, %p369
      %p372 = scmp.ne.s32.totalorder %s357, %s371
      %p373 = scmp.eq.s32.totalorder %s32, 0
      %p374 = por %p372, %p373
      %s376 = sadd.s32 %s375, 1
      %p379 = scmp.eq.s32.totalorder %s26, 1
      %p380 = scmp.ne.s32.totalorder %s375, %s377
      %p381 = scmp.eq.s32.totalorder %s26, 0
      %p382 = por %p380, %p381
      %p383 = scmp.ne.s32.totalorder %s375, %s377
      %p384 = scmp.eq.s32.totalorder %s31, 1
      %p385 = por %p383, %p384
      %p386 = scmp.ne.s32.totalorder %s377, %s378
      %p387 = scmp.eq.s32.totalorder %s31, 0
      %p388 = por %p386, %p387
      %p389 = scmp.ne.s32.totalorder %s377, %s378
      %p390 = scmp.eq.s32.totalorder %s32, 1
      %p391 = por %p389, %p390
      %p393 = scmp.ne.s32.totalorder %s378, %s392
      %p394 = scmp.eq.s32.totalorder %s32, 0
      %p395 = por %p393, %p394
      %s396 = ssub.s32 %s26, %s33
      %p397 = scmp.eq.s32.totalorder %s396, 0
      %s399 = sadd.s32 %s398, 1
      %s400 = scalar_select %p397, %s398, %s399
      %p403 = pneg %p397
      %p404 = scmp.eq.s32.totalorder %s26, 1
      %p405 = por %p403, %p404
      %p406 = scmp.ne.s32.totalorder %s398, %s401
      %p407 = scmp.eq.s32.totalorder %s26, 0
      %p408 = por %p406, %p407
      %p409 = scmp.ne.s32.totalorder %s398, %s401
      %p410 = scmp.eq.s32.totalorder %s31, 1
      %p411 = por %p409, %p410
      %p412 = scmp.ne.s32.totalorder %s401, %s402
      %p413 = scmp.eq.s32.totalorder %s31, 0
      %p414 = por %p412, %p413
      %p415 = scmp.ne.s32.totalorder %s401, %s402
      %p416 = scmp.eq.s32.totalorder %s32, 1
      %p417 = por %p415, %p416
      %p419 = scmp.ne.s32.totalorder %s402, %s418
      %p420 = scmp.eq.s32.totalorder %s32, 0
      %p421 = por %p419, %p420
      %p422 = scmp.le.s32.totalorder 1, %s26
      %p423 = scmp.lt.s32.totalorder %s26, 3
      %p424 = pnand %p422, %p423
      %p425 = pneg %p424
      // Predicated region
      $region9: #{tpu_custom_call.1} parent=5 // pred_check
        _
      $region10: #{tpu_custom_call.1} parent=5 // pred_check_branch
        %427 = sbr.rel (%p424) target = $region12
      $region11: #{tpu_custom_call.1} parent=5 // pred_region
        %s428 = ssub.s32 %s26, 1
        // Predicated region
        $region13: #{tpu_custom_call.1} parent=11 // pred_check
          %p429 = pneg %p73
        $region14: #{tpu_custom_call.1} parent=11 // pred_check_branch
          %431 = sbr.rel (%p429) target = $region16
        $region15: #{tpu_custom_call.1} parent=11 // pred_region
          _
        $region16: #{tpu_custom_call.1} parent=11 // pred_fallthru
          _
        // Predicated region
        $region17: #{tpu_custom_call.1} parent=11 // pred_check
          %p432 = pneg %p94
        $region18: #{tpu_custom_call.1} parent=11 // pred_check_branch
          %434 = sbr.rel (%p432) target = $region20
        $region19: #{tpu_custom_call.1} parent=11 // pred_region
          _
        $region20: #{tpu_custom_call.1} parent=11 // pred_fallthru
          _
        // Predicated region
        $region21: #{tpu_custom_call.1} parent=11 // pred_check
          %p435 = pneg %p115
        $region22: #{tpu_custom_call.1} parent=11 // pred_check_branch
          %437 = sbr.rel (%p435) target = $region24
        $region23: #{tpu_custom_call.1} parent=11 // pred_region
          _
        $region24: #{tpu_custom_call.1} parent=11 // pred_fallthru
          _
        // Predicated region
        $region25: #{tpu_custom_call.1} parent=11 // pred_check
          %p438 = pneg %p136
        $region26: #{tpu_custom_call.1} parent=11 // pred_check_branch
          %440 = sbr.rel (%p438) target = $region28
        $region27: #{tpu_custom_call.1} parent=11 // pred_region
          _
        $region28: #{tpu_custom_call.1} parent=11 // pred_fallthru
          _
        // Predicated region
        $region29: #{tpu_custom_call.1} parent=11 // pred_check
          %p441 = pneg %p157
        $region30: #{tpu_custom_call.1} parent=11 // pred_check_branch
          %443 = sbr.rel (%p441) target = $region32
        $region31: #{tpu_custom_call.1} parent=11 // pred_region
          _
        $region32: #{tpu_custom_call.1} parent=11 // pred_fallthru
          _
        // Predicated region
        $region33: #{tpu_custom_call.1} parent=11 // pred_check
          %p444 = pneg %p178
        $region34: #{tpu_custom_call.1} parent=11 // pred_check_branch
          %446 = sbr.rel (%p444) target = $region36
        $region35: #{tpu_custom_call.1} parent=11 // pred_region
          _
        $region36: #{tpu_custom_call.1} parent=11 // pred_fallthru
          _
        // Predicated region
        $region37: #{tpu_custom_call.1} parent=11 // pred_check
          %p447 = pneg %p199
        $region38: #{tpu_custom_call.1} parent=11 // pred_check_branch
          %449 = sbr.rel (%p447) target = $region40
        $region39: #{tpu_custom_call.1} parent=11 // pred_region
          _
        $region40: #{tpu_custom_call.1} parent=11 // pred_fallthru
          _
        // Predicated region
        $region41: #{tpu_custom_call.1} parent=11 // pred_check
          %p450 = pneg %p220
        $region42: #{tpu_custom_call.1} parent=11 // pred_check_branch
          %452 = sbr.rel (%p450) target = $region44
        $region43: #{tpu_custom_call.1} parent=11 // pred_region
          _
        $region44: #{tpu_custom_call.1} parent=11 // pred_fallthru
          _
        // Predicated region
        $region45: #{tpu_custom_call.1} parent=11 // pred_check
          %p453 = pneg %p241
        $region46: #{tpu_custom_call.1} parent=11 // pred_check_branch
          %455 = sbr.rel (%p453) target = $region48
        $region47: #{tpu_custom_call.1} parent=11 // pred_region
          _
        $region48: #{tpu_custom_call.1} parent=11 // pred_fallthru
          _
        // Predicated region
        $region49: #{tpu_custom_call.1} parent=11 // pred_check
          %p456 = pneg %p262
        $region50: #{tpu_custom_call.1} parent=11 // pred_check_branch
          %458 = sbr.rel (%p456) target = $region52
        $region51: #{tpu_custom_call.1} parent=11 // pred_region
          _
        $region52: #{tpu_custom_call.1} parent=11 // pred_fallthru
          _
        // Predicated region
        $region53: #{tpu_custom_call.1} parent=11 // pred_check
          %p459 = pneg %p283
        $region54: #{tpu_custom_call.1} parent=11 // pred_check_branch
          %461 = sbr.rel (%p459) target = $region56
        $region55: #{tpu_custom_call.1} parent=11 // pred_region
          _
        $region56: #{tpu_custom_call.1} parent=11 // pred_fallthru
          _
        // Predicated region
        $region57: #{tpu_custom_call.1} parent=11 // pred_check
          %p462 = pneg %p304
        $region58: #{tpu_custom_call.1} parent=11 // pred_check_branch
          %464 = sbr.rel (%p462) target = $region60
        $region59: #{tpu_custom_call.1} parent=11 // pred_region
          _
        $region60: #{tpu_custom_call.1} parent=11 // pred_fallthru
          _
        // Predicated region
        $region61: #{tpu_custom_call.1} parent=11 // pred_check
          %p465 = pneg %p325
        $region62: #{tpu_custom_call.1} parent=11 // pred_check_branch
          %467 = sbr.rel (%p465) target = $region64
        $region63: #{tpu_custom_call.1} parent=11 // pred_region
          _
        $region64: #{tpu_custom_call.1} parent=11 // pred_fallthru
          _
        // Predicated region
        $region65: #{tpu_custom_call.1} parent=11 // pred_check
          %p468 = pneg %p346
        $region66: #{tpu_custom_call.1} parent=11 // pred_check_branch
          %470 = sbr.rel (%p468) target = $region68
        $region67: #{tpu_custom_call.1} parent=11 // pred_region
          _
        $region68: #{tpu_custom_call.1} parent=11 // pred_fallthru
          _
        // Predicated region
        $region69: #{tpu_custom_call.1} parent=11 // pred_check
          %p471 = pneg %p367
        $region70: #{tpu_custom_call.1} parent=11 // pred_check_branch
          %473 = sbr.rel (%p471) target = $region72
        $region71: #{tpu_custom_call.1} parent=11 // pred_region
          _
        $region72: #{tpu_custom_call.1} parent=11 // pred_fallthru
          _
        // Predicated region
        $region73: #{tpu_custom_call.1} parent=11 // pred_check
          %p474 = pneg %p388
        $region74: #{tpu_custom_call.1} parent=11 // pred_check_branch
          %476 = sbr.rel (%p474) target = $region76
        $region75: #{tpu_custom_call.1} parent=11 // pred_region
          _
        $region76: #{tpu_custom_call.1} parent=11 // pred_fallthru
          _
      $region12: #{tpu_custom_call.1} parent=5 // pred_fallthru
        _
      %p477 = scmp.lt.s32.totalorder %s26, 2
      // Predicated region
      $region77: #{tpu_custom_call.1} parent=5 // pred_check
        %p478 = pneg %p477
      $region78: #{tpu_custom_call.1} parent=5 // pred_check_branch
        %480 = sbr.rel (%p478) target = $region80
      $region79: #{tpu_custom_call.1} parent=5 // pred_region
        // Predicated region
        $region81: #{tpu_custom_call.1} parent=79 // pred_check
          %p481 = pneg %p46
        $region82: #{tpu_custom_call.1} parent=79 // pred_check_branch
          %483 = sbr.rel (%p481) target = $region84
        $region83: #{tpu_custom_call.1} parent=79 // pred_region
          %p484 = scmp.lt.s32.totalorder %s26, 1
          %s485 = scalar_select %p484, %s26, 1
          %s486 = smul.addr %s485, 8
          %s487 = scalar_lea.vmem %s0, %s486
        $region84: #{tpu_custom_call.1} parent=79 // pred_fallthru
          _
      $region80: #{tpu_custom_call.1} parent=5 // pred_fallthru
        _
      %p488 = scmp.le.s32.totalorder 1, %s26
      %p489 = scmp.lt.s32.totalorder %s26, 3
      %p490 = pnand %p488, %p489
      %p491 = pneg %p490
      // Predicated region
      $region85: #{tpu_custom_call.1} parent=5 // pred_check
        _
      $region86: #{tpu_custom_call.1} parent=5 // pred_check_branch
        %493 = sbr.rel (%p490) target = $region88
      $region87: #{tpu_custom_call.1} parent=5 // pred_region
        %s494 = ssub.s32 %s26, 1
        %p495 = scmp.lt.s32.totalorder %s31, 1
        %s496 = scalar_select %p495, %s31, 1
        %s497 = smul.addr %s496, 8
        %s498 = scalar_lea.vmem %s0, %s497
        %p499 = pneg %p52
        %p500 = pneg %p49
        %p501 = pneg %p73
        %p502 = pneg %p70
        %p503 = pneg %p94
        %p504 = pneg %p91
        %p505 = pneg %p115
        %p506 = pneg %p112
        %p507 = pneg %p136
        %p508 = pneg %p133
        %p509 = pneg %p157
        %p510 = pneg %p154
        %p511 = pneg %p178
        %p512 = pneg %p175
        %p513 = pneg %p199
        %p514 = pneg %p196
        %p515 = pneg %p220
        %p516 = pneg %p217
        %p517 = pneg %p241
        %p518 = pneg %p238
        %p519 = pneg %p262
        %p520 = pneg %p259
        %p521 = pneg %p283
        %p522 = pneg %p280
        %p523 = pneg %p304
        %p524 = pneg %p301
        %p525 = pneg %p325
        %p526 = pneg %p322
        %p527 = pneg %p346
        %p528 = pneg %p343
        %p529 = pneg %p367
        %p530 = pneg %p364
        %p531 = pneg %p388
        %p532 = pneg %p385
        %p533 = pneg %p414
        %p534 = pneg %p411
        %s535 = sand.u32 %s401, 1
        %s536 = scalar_lea.sflag [#allocation3], %s535
        %s537 = sand.u32 %s401, 1
        %s538 = smul.addr %s537, 8
        %s539 = scalar_lea.vmem [#allocation2], %s538
        %p540 = scmp.lt.s32.totalorder %s31, 1
        %s541 = scalar_select %p540, %s31, 1
        %s542 = smul.addr %s541, 8
        %s543 = scalar_lea.vmem %s0, %s542
        %v544 = vld [vmem:[%s543] sm:$0xff]
        %v545 = vld [vmem:[%s1] sm:$0xff]
        %v546 = vld [vmem:[%s1 + $0x8] sm:$0xff]
        %v547 = vld [vmem:[%s1 + $0x10] sm:$0xff]
        %v548 = vld [vmem:[%s1 + $0x18] sm:$0xff]
        %v549 = vld [vmem:[%s1 + $0x20] sm:$0xff]
        %v550 = vld [vmem:[%s1 + $0x28] sm:$0xff]
        %v551 = vld [vmem:[%s1 + $0x30] sm:$0xff]
        %v552 = vld [vmem:[%s1 + $0x38] sm:$0xff]
        %v553 = vld [vmem:[%s1 + $0x40] sm:$0xff]
        %v554 = vld [vmem:[%s1 + $0x48] sm:$0xff]
        %v555 = vld [vmem:[%s1 + $0x50] sm:$0xff]
        %v556 = vld [vmem:[%s1 + $0x58] sm:$0xff]
        %v557 = vld [vmem:[%s1 + $0x60] sm:$0xff]
        %v558 = vld [vmem:[%s1 + $0x68] sm:$0xff]
        %v559 = vld [vmem:[%s1 + $0x70] sm:$0xff]
        %v560 = vld [vmem:[%s1 + $0x78] sm:$0xff]
        %v561 = vld [vmem:[%s1 + $0x80] sm:$0xff]
        %v562 = vld [vmem:[%s1 + $0x88] sm:$0xff]
        %v563 = vld [vmem:[%s1 + $0x90] sm:$0xff]
        %v564 = vld [vmem:[%s1 + $0x98] sm:$0xff]
        %v565 = vld [vmem:[%s1 + $0xa0] sm:$0xff]
        %v566 = vld [vmem:[%s1 + $0xa8] sm:$0xff]
        %v567 = vld [vmem:[%s1 + $0xb0] sm:$0xff]
        %v568 = vld [vmem:[%s1 + $0xb8] sm:$0xff]
        %v569 = vld [vmem:[%s1 + $0xc0] sm:$0xff]
        %v570 = vld [vmem:[%s1 + $0xc8] sm:$0xff]
        %v571 = vld [vmem:[%s1 + $0xd0] sm:$0xff]
        %v572 = vld [vmem:[%s1 + $0xd8] sm:$0xff]
        %v573 = vld [vmem:[%s1 + $0xe0] sm:$0xff]
        %v574 = vld [vmem:[%s1 + $0xe8] sm:$0xff]
        %v575 = vld [vmem:[%s1 + $0xf0] sm:$0xff]
        %v576 = vld [vmem:[%s1 + $0xf8] sm:$0xff]
        %v577 = vld [vmem:[%s1 + $0x100] sm:$0xff]
        %v578 = vld [vmem:[%s1 + $0x108] sm:$0xff]
        %v579 = vld [vmem:[%s1 + $0x110] sm:$0xff]
        %v580 = vld [vmem:[%s1 + $0x118] sm:$0xff]
        %v581 = vld [vmem:[%s1 + $0x120] sm:$0xff]
        %v582 = vld [vmem:[%s1 + $0x128] sm:$0xff]
        %v583 = vld [vmem:[%s1 + $0x130] sm:$0xff]
        %v584 = vld [vmem:[%s1 + $0x138] sm:$0xff]
        %v585 = vld [vmem:[%s1 + $0x140] sm:$0xff]
        %v586 = vld [vmem:[%s1 + $0x148] sm:$0xff]
        %v587 = vld [vmem:[%s1 + $0x150] sm:$0xff]
        %v588 = vld [vmem:[%s1 + $0x158] sm:$0xff]
        %v589 = vld [vmem:[%s1 + $0x160] sm:$0xff]
        %v590 = vld [vmem:[%s1 + $0x168] sm:$0xff]
        %v591 = vld [vmem:[%s1 + $0x170] sm:$0xff]
        %v592 = vld [vmem:[%s1 + $0x178] sm:$0xff]
        %v593 = vld [vmem:[%s1 + $0x180] sm:$0xff]
        %v594 = vld [vmem:[%s1 + $0x188] sm:$0xff]
        %v595 = vld [vmem:[%s1 + $0x190] sm:$0xff]
        %v596 = vld [vmem:[%s1 + $0x198] sm:$0xff]
        %v597 = vld [vmem:[%s1 + $0x1a0] sm:$0xff]
        %v598 = vld [vmem:[%s1 + $0x1a8] sm:$0xff]
        %v599 = vld [vmem:[%s1 + $0x1b0] sm:$0xff]
        %v600 = vld [vmem:[%s1 + $0x1b8] sm:$0xff]
        %v601 = vld [vmem:[%s1 + $0x1c0] sm:$0xff]
        %v602 = vld [vmem:[%s1 + $0x1c8] sm:$0xff]
        %v603 = vld [vmem:[%s1 + $0x1d0] sm:$0xff]
        %v604 = vld [vmem:[%s1 + $0x1d8] sm:$0xff]
        %v605 = vld [vmem:[%s1 + $0x1e0] sm:$0xff]
        %v606 = vld [vmem:[%s1 + $0x1e8] sm:$0xff]
        %v607 = vld [vmem:[%s1 + $0x1f0] sm:$0xff]
        %v608 = vld [vmem:[%s1 + $0x1f8] sm:$0xff]
        %v609 = vld [vmem:[%s1 + $0x200] sm:$0xff]
        %v610 = vld [vmem:[%s1 + $0x208] sm:$0xff]
        %v611 = vld [vmem:[%s1 + $0x210] sm:$0xff]
        %v612 = vld [vmem:[%s1 + $0x218] sm:$0xff]
        %v613 = vld [vmem:[%s1 + $0x220] sm:$0xff]
        %v614 = vld [vmem:[%s1 + $0x228] sm:$0xff]
        %v615 = vld [vmem:[%s1 + $0x230] sm:$0xff]
        %v616 = vld [vmem:[%s1 + $0x238] sm:$0xff]
        %v617 = vld [vmem:[%s1 + $0x240] sm:$0xff]
        %v618 = vld [vmem:[%s1 + $0x248] sm:$0xff]
        %v619 = vld [vmem:[%s1 + $0x250] sm:$0xff]
        %v620 = vld [vmem:[%s1 + $0x258] sm:$0xff]
        %v621 = vld [vmem:[%s1 + $0x260] sm:$0xff]
        %v622 = vld [vmem:[%s1 + $0x268] sm:$0xff]
        %v623 = vld [vmem:[%s1 + $0x270] sm:$0xff]
        %v624 = vld [vmem:[%s1 + $0x278] sm:$0xff]
        %v625 = vld [vmem:[%s1 + $0x280] sm:$0xff]
        %v626 = vld [vmem:[%s1 + $0x288] sm:$0xff]
        %v627 = vld [vmem:[%s1 + $0x290] sm:$0xff]
        %v628 = vld [vmem:[%s1 + $0x298] sm:$0xff]
        %v629 = vld [vmem:[%s1 + $0x2a0] sm:$0xff]
        %v630 = vld [vmem:[%s1 + $0x2a8] sm:$0xff]
        %v631 = vld [vmem:[%s1 + $0x2b0] sm:$0xff]
        %v632 = vld [vmem:[%s1 + $0x2b8] sm:$0xff]
        %v633 = vld [vmem:[%s1 + $0x2c0] sm:$0xff]
        %v634 = vld [vmem:[%s1 + $0x2c8] sm:$0xff]
        %v635 = vld [vmem:[%s1 + $0x2d0] sm:$0xff]
        %v636 = vld [vmem:[%s1 + $0x2d8] sm:$0xff]
        %v637 = vld [vmem:[%s1 + $0x2e0] sm:$0xff]
        %v638 = vld [vmem:[%s1 + $0x2e8] sm:$0xff]
        %v639 = vld [vmem:[%s1 + $0x2f0] sm:$0xff]
        %v640 = vld [vmem:[%s1 + $0x2f8] sm:$0xff]
        %v641 = vld [vmem:[%s1 + $0x300] sm:$0xff]
        %v642 = vld [vmem:[%s1 + $0x308] sm:$0xff]
        %v643 = vld [vmem:[%s1 + $0x310] sm:$0xff]
        %v644 = vld [vmem:[%s1 + $0x318] sm:$0xff]
        %v645 = vld [vmem:[%s1 + $0x320] sm:$0xff]
        %v646 = vld [vmem:[%s1 + $0x328] sm:$0xff]
        %v647 = vld [vmem:[%s1 + $0x330] sm:$0xff]
        %v648 = vld [vmem:[%s1 + $0x338] sm:$0xff]
        %v649 = vld [vmem:[%s1 + $0x340] sm:$0xff]
        %v650 = vld [vmem:[%s1 + $0x348] sm:$0xff]
        %v651 = vld [vmem:[%s1 + $0x350] sm:$0xff]
        %v652 = vld [vmem:[%s1 + $0x358] sm:$0xff]
        %v653 = vld [vmem:[%s1 + $0x360] sm:$0xff]
        %v654 = vld [vmem:[%s1 + $0x368] sm:$0xff]
        %v655 = vld [vmem:[%s1 + $0x370] sm:$0xff]
        %v656 = vld [vmem:[%s1 + $0x378] sm:$0xff]
        %v657 = vld [vmem:[%s1 + $0x380] sm:$0xff]
        %v658 = vld [vmem:[%s1 + $0x388] sm:$0xff]
        %v659 = vld [vmem:[%s1 + $0x390] sm:$0xff]
        %v660 = vld [vmem:[%s1 + $0x398] sm:$0xff]
        %v661 = vld [vmem:[%s1 + $0x3a0] sm:$0xff]
        %v662 = vld [vmem:[%s1 + $0x3a8] sm:$0xff]
        %v663 = vld [vmem:[%s1 + $0x3b0] sm:$0xff]
        %v664 = vld [vmem:[%s1 + $0x3b8] sm:$0xff]
        %v665 = vld [vmem:[%s1 + $0x3c0] sm:$0xff]
        %v666 = vld [vmem:[%s1 + $0x3c8] sm:$0xff]
        %v667 = vld [vmem:[%s1 + $0x3d0] sm:$0xff]
        %v668 = vld [vmem:[%s1 + $0x3d8] sm:$0xff]
        %v669 = vld [vmem:[%s1 + $0x3e0] sm:$0xff]
        %v670 = vld [vmem:[%s1 + $0x3e8] sm:$0xff]
        %v671 = vld [vmem:[%s1 + $0x3f0] sm:$0xff]
        %v672 = vld [vmem:[%s1 + $0x3f8] sm:$0xff]
        %v673 = vld [vmem:[%s1 + $0x400] sm:$0xff]
        %v674 = vld [vmem:[%s1 + $0x408] sm:$0xff]
        %v675 = vld [vmem:[%s1 + $0x410] sm:$0xff]
        %v676 = vld [vmem:[%s1 + $0x418] sm:$0xff]
        %v677 = vld [vmem:[%s1 + $0x420] sm:$0xff]
        %v678 = vld [vmem:[%s1 + $0x428] sm:$0xff]
        %v679 = vld [vmem:[%s1 + $0x430] sm:$0xff]
        %v680 = vld [vmem:[%s1 + $0x438] sm:$0xff]
        %v681 = vld [vmem:[%s1 + $0x440] sm:$0xff]
        %v682 = vld [vmem:[%s1 + $0x448] sm:$0xff]
        %v683 = vld [vmem:[%s1 + $0x450] sm:$0xff]
        %v684 = vld [vmem:[%s1 + $0x458] sm:$0xff]
        %v685 = vld [vmem:[%s1 + $0x460] sm:$0xff]
        %v686 = vld [vmem:[%s1 + $0x468] sm:$0xff]
        %v687 = vld [vmem:[%s1 + $0x470] sm:$0xff]
        %v688 = vld [vmem:[%s1 + $0x478] sm:$0xff]
        %v689 = vld [vmem:[%s1 + $0x480] sm:$0xff]
        %v690 = vld [vmem:[%s1 + $0x488] sm:$0xff]
        %v691 = vld [vmem:[%s1 + $0x490] sm:$0xff]
        %v692 = vld [vmem:[%s1 + $0x498] sm:$0xff]
        %v693 = vld [vmem:[%s1 + $0x4a0] sm:$0xff]
        %v694 = vld [vmem:[%s1 + $0x4a8] sm:$0xff]
        %v695 = vld [vmem:[%s1 + $0x4b0] sm:$0xff]
        %v696 = vld [vmem:[%s1 + $0x4b8] sm:$0xff]
        %v697 = vld [vmem:[%s1 + $0x4c0] sm:$0xff]
        %v698 = vld [vmem:[%s1 + $0x4c8] sm:$0xff]
        %v699 = vld [vmem:[%s1 + $0x4d0] sm:$0xff]
        %v700 = vld [vmem:[%s1 + $0x4d8] sm:$0xff]
        %v701 = vld [vmem:[%s1 + $0x4e0] sm:$0xff]
        %v702 = vld [vmem:[%s1 + $0x4e8] sm:$0xff]
        %v703 = vld [vmem:[%s1 + $0x4f0] sm:$0xff]
        %v704 = vld [vmem:[%s1 + $0x4f8] sm:$0xff]
        %v705 = vld [vmem:[%s1 + $0x500] sm:$0xff]
        %v706 = vld [vmem:[%s1 + $0x508] sm:$0xff]
        %v707 = vld [vmem:[%s1 + $0x510] sm:$0xff]
        %v708 = vld [vmem:[%s1 + $0x518] sm:$0xff]
        %v709 = vld [vmem:[%s1 + $0x520] sm:$0xff]
        %v710 = vld [vmem:[%s1 + $0x528] sm:$0xff]
        %v711 = vld [vmem:[%s1 + $0x530] sm:$0xff]
        %v712 = vld [vmem:[%s1 + $0x538] sm:$0xff]
        %v713 = vld [vmem:[%s1 + $0x540] sm:$0xff]
        %v714 = vld [vmem:[%s1 + $0x548] sm:$0xff]
        %v715 = vld [vmem:[%s1 + $0x550] sm:$0xff]
        %v716 = vld [vmem:[%s1 + $0x558] sm:$0xff]
        %v717 = vld [vmem:[%s1 + $0x560] sm:$0xff]
        %v718 = vld [vmem:[%s1 + $0x568] sm:$0xff]
        %v719 = vld [vmem:[%s1 + $0x570] sm:$0xff]
        %v720 = vld [vmem:[%s1 + $0x578] sm:$0xff]
        %v721 = vld [vmem:[%s1 + $0x580] sm:$0xff]
        %v722 = vld [vmem:[%s1 + $0x588] sm:$0xff]
        %v723 = vld [vmem:[%s1 + $0x590] sm:$0xff]
        %v724 = vld [vmem:[%s1 + $0x598] sm:$0xff]
        %v725 = vld [vmem:[%s1 + $0x5a0] sm:$0xff]
        %v726 = vld [vmem:[%s1 + $0x5a8] sm:$0xff]
        %v727 = vld [vmem:[%s1 + $0x5b0] sm:$0xff]
        %v728 = vld [vmem:[%s1 + $0x5b8] sm:$0xff]
        %v729 = vld [vmem:[%s1 + $0x5c0] sm:$0xff]
        %v730 = vld [vmem:[%s1 + $0x5c8] sm:$0xff]
        %v731 = vld [vmem:[%s1 + $0x5d0] sm:$0xff]
        %v732 = vld [vmem:[%s1 + $0x5d8] sm:$0xff]
        %v733 = vld [vmem:[%s1 + $0x5e0] sm:$0xff]
        %v734 = vld [vmem:[%s1 + $0x5e8] sm:$0xff]
        %v735 = vld [vmem:[%s1 + $0x5f0] sm:$0xff]
        %v736 = vld [vmem:[%s1 + $0x5f8] sm:$0xff]
        %v737 = vld [vmem:[%s1 + $0x600] sm:$0xff]
        %v738 = vld [vmem:[%s1 + $0x608] sm:$0xff]
        %v739 = vld [vmem:[%s1 + $0x610] sm:$0xff]
        %v740 = vld [vmem:[%s1 + $0x618] sm:$0xff]
        %v741 = vld [vmem:[%s1 + $0x620] sm:$0xff]
        %v742 = vld [vmem:[%s1 + $0x628] sm:$0xff]
        %v743 = vld [vmem:[%s1 + $0x630] sm:$0xff]
        %v744 = vld [vmem:[%s1 + $0x638] sm:$0xff]
        %v745 = vld [vmem:[%s1 + $0x640] sm:$0xff]
        %v746 = vld [vmem:[%s1 + $0x648] sm:$0xff]
        %v747 = vld [vmem:[%s1 + $0x650] sm:$0xff]
        %v748 = vld [vmem:[%s1 + $0x658] sm:$0xff]
        %v749 = vld [vmem:[%s1 + $0x660] sm:$0xff]
        %v750 = vld [vmem:[%s1 + $0x668] sm:$0xff]
        %v751 = vld [vmem:[%s1 + $0x670] sm:$0xff]
        %v752 = vld [vmem:[%s1 + $0x678] sm:$0xff]
        %v753 = vld [vmem:[%s1 + $0x680] sm:$0xff]
        %v754 = vld [vmem:[%s1 + $0x688] sm:$0xff]
        %v755 = vld [vmem:[%s1 + $0x690] sm:$0xff]
        %v756 = vld [vmem:[%s1 + $0x698] sm:$0xff]
        %v757 = vld [vmem:[%s1 + $0x6a0] sm:$0xff]
        %v758 = vld [vmem:[%s1 + $0x6a8] sm:$0xff]
        %v759 = vld [vmem:[%s1 + $0x6b0] sm:$0xff]
        %v760 = vld [vmem:[%s1 + $0x6b8] sm:$0xff]
        %v761 = vld [vmem:[%s1 + $0x6c0] sm:$0xff]
        %v762 = vld [vmem:[%s1 + $0x6c8] sm:$0xff]
        %v763 = vld [vmem:[%s1 + $0x6d0] sm:$0xff]
        %v764 = vld [vmem:[%s1 + $0x6d8] sm:$0xff]
        %v765 = vld [vmem:[%s1 + $0x6e0] sm:$0xff]
        %v766 = vld [vmem:[%s1 + $0x6e8] sm:$0xff]
        %v767 = vld [vmem:[%s1 + $0x6f0] sm:$0xff]
        %v768 = vld [vmem:[%s1 + $0x6f8] sm:$0xff]
        %v769 = vld [vmem:[%s1 + $0x700] sm:$0xff]
        %v770 = vld [vmem:[%s1 + $0x708] sm:$0xff]
        %v771 = vld [vmem:[%s1 + $0x710] sm:$0xff]
        %v772 = vld [vmem:[%s1 + $0x718] sm:$0xff]
        %v773 = vld [vmem:[%s1 + $0x720] sm:$0xff]
        %v774 = vld [vmem:[%s1 + $0x728] sm:$0xff]
        %v775 = vld [vmem:[%s1 + $0x730] sm:$0xff]
        %v776 = vld [vmem:[%s1 + $0x738] sm:$0xff]
        %v777 = vld [vmem:[%s1 + $0x740] sm:$0xff]
        %v778 = vld [vmem:[%s1 + $0x748] sm:$0xff]
        %v779 = vld [vmem:[%s1 + $0x750] sm:$0xff]
        %v780 = vld [vmem:[%s1 + $0x758] sm:$0xff]
        %v781 = vld [vmem:[%s1 + $0x760] sm:$0xff]
        %v782 = vld [vmem:[%s1 + $0x768] sm:$0xff]
        %v783 = vld [vmem:[%s1 + $0x770] sm:$0xff]
        %v784 = vld [vmem:[%s1 + $0x778] sm:$0xff]
        %v785 = vld [vmem:[%s1 + $0x780] sm:$0xff]
        %v786 = vld [vmem:[%s1 + $0x788] sm:$0xff]
        %v787 = vld [vmem:[%s1 + $0x790] sm:$0xff]
        %v788 = vld [vmem:[%s1 + $0x798] sm:$0xff]
        %v789 = vld [vmem:[%s1 + $0x7a0] sm:$0xff]
        %v790 = vld [vmem:[%s1 + $0x7a8] sm:$0xff]
        %v791 = vld [vmem:[%s1 + $0x7b0] sm:$0xff]
        %v792 = vld [vmem:[%s1 + $0x7b8] sm:$0xff]
        %v793 = vld [vmem:[%s1 + $0x7c0] sm:$0xff]
        %v794 = vld [vmem:[%s1 + $0x7c8] sm:$0xff]
        %v795 = vld [vmem:[%s1 + $0x7d0] sm:$0xff]
        %v796 = vld [vmem:[%s1 + $0x7d8] sm:$0xff]
        %v797 = vld [vmem:[%s1 + $0x7e0] sm:$0xff]
        %v798 = vld [vmem:[%s1 + $0x7e8] sm:$0xff]
        %v799 = vld [vmem:[%s1 + $0x7f0] sm:$0xff]
        %v800 = vld [vmem:[%s1 + $0x7f8] sm:$0xff]
        %v801 = vld [vmem:[%s1 + $0x800] sm:$0xff]
        %v802 = vld [vmem:[%s1 + $0x808] sm:$0xff]
        %v803 = vld [vmem:[%s1 + $0x810] sm:$0xff]
        %v804 = vld [vmem:[%s1 + $0x818] sm:$0xff]
        %v805 = vld [vmem:[%s1 + $0x820] sm:$0xff]
        %v806 = vld [vmem:[%s1 + $0x828] sm:$0xff]
        %v807 = vld [vmem:[%s1 + $0x830] sm:$0xff]
        %v808 = vld [vmem:[%s1 + $0x838] sm:$0xff]
        %v809 = vld [vmem:[%s1 + $0x840] sm:$0xff]
        %v810 = vld [vmem:[%s1 + $0x848] sm:$0xff]
        %v811 = vld [vmem:[%s1 + $0x850] sm:$0xff]
        %v812 = vld [vmem:[%s1 + $0x858] sm:$0xff]
        %v813 = vld [vmem:[%s1 + $0x860] sm:$0xff]
        %v814 = vld [vmem:[%s1 + $0x868] sm:$0xff]
        %v815 = vld [vmem:[%s1 + $0x870] sm:$0xff]
        %v816 = vld [vmem:[%s1 + $0x878] sm:$0xff]
        %v817 = vld [vmem:[%s1 + $0x880] sm:$0xff]
        %v818 = vld [vmem:[%s1 + $0x888] sm:$0xff]
        %v819 = vld [vmem:[%s1 + $0x890] sm:$0xff]
        %v820 = vld [vmem:[%s1 + $0x898] sm:$0xff]
        %v821 = vld [vmem:[%s1 + $0x8a0] sm:$0xff]
        %v822 = vld [vmem:[%s1 + $0x8a8] sm:$0xff]
        %v823 = vld [vmem:[%s1 + $0x8b0] sm:$0xff]
        %v824 = vld [vmem:[%s1 + $0x8b8] sm:$0xff]
        %v825 = vld [vmem:[%s1 + $0x8c0] sm:$0xff]
        %v826 = vld [vmem:[%s1 + $0x8c8] sm:$0xff]
        %v827 = vld [vmem:[%s1 + $0x8d0] sm:$0xff]
        %v828 = vld [vmem:[%s1 + $0x8d8] sm:$0xff]
        %v829 = vld [vmem:[%s1 + $0x8e0] sm:$0xff]
        %v830 = vld [vmem:[%s1 + $0x8e8] sm:$0xff]
        %v831 = vld [vmem:[%s1 + $0x8f0] sm:$0xff]
        %v832 = vld [vmem:[%s1 + $0x8f8] sm:$0xff]
        %v833 = vld [vmem:[%s1 + $0x900] sm:$0xff]
        %v834 = vld [vmem:[%s1 + $0x908] sm:$0xff]
        %v835 = vld [vmem:[%s1 + $0x910] sm:$0xff]
        %v836 = vld [vmem:[%s1 + $0x918] sm:$0xff]
        %v837 = vld [vmem:[%s1 + $0x920] sm:$0xff]
        %v838 = vld [vmem:[%s1 + $0x928] sm:$0xff]
        %v839 = vld [vmem:[%s1 + $0x930] sm:$0xff]
        %v840 = vld [vmem:[%s1 + $0x938] sm:$0xff]
        %v841 = vld [vmem:[%s1 + $0x940] sm:$0xff]
        %v842 = vld [vmem:[%s1 + $0x948] sm:$0xff]
        %v843 = vld [vmem:[%s1 + $0x950] sm:$0xff]
        %v844 = vld [vmem:[%s1 + $0x958] sm:$0xff]
        %v845 = vld [vmem:[%s1 + $0x960] sm:$0xff]
        %v846 = vld [vmem:[%s1 + $0x968] sm:$0xff]
        %v847 = vld [vmem:[%s1 + $0x970] sm:$0xff]
        %v848 = vld [vmem:[%s1 + $0x978] sm:$0xff]
        %v849 = vld [vmem:[%s1 + $0x980] sm:$0xff]
        %v850 = vld [vmem:[%s1 + $0x988] sm:$0xff]
        %v851 = vld [vmem:[%s1 + $0x990] sm:$0xff]
        %v852 = vld [vmem:[%s1 + $0x998] sm:$0xff]
        %v853 = vld [vmem:[%s1 + $0x9a0] sm:$0xff]
        %v854 = vld [vmem:[%s1 + $0x9a8] sm:$0xff]
        %v855 = vld [vmem:[%s1 + $0x9b0] sm:$0xff]
        %v856 = vld [vmem:[%s1 + $0x9b8] sm:$0xff]
        %v857 = vld [vmem:[%s1 + $0x9c0] sm:$0xff]
        %v858 = vld [vmem:[%s1 + $0x9c8] sm:$0xff]
        %v859 = vld [vmem:[%s1 + $0x9d0] sm:$0xff]
        %v860 = vld [vmem:[%s1 + $0x9d8] sm:$0xff]
        %v861 = vld [vmem:[%s1 + $0x9e0] sm:$0xff]
        %v862 = vld [vmem:[%s1 + $0x9e8] sm:$0xff]
        %v863 = vld [vmem:[%s1 + $0x9f0] sm:$0xff]
        %v864 = vld [vmem:[%s1 + $0x9f8] sm:$0xff]
        %v865 = vld [vmem:[%s1 + $0xa00] sm:$0xff]
        %v866 = vld [vmem:[%s1 + $0xa08] sm:$0xff]
        %v867 = vld [vmem:[%s1 + $0xa10] sm:$0xff]
        %v868 = vld [vmem:[%s1 + $0xa18] sm:$0xff]
        %v869 = vld [vmem:[%s1 + $0xa20] sm:$0xff]
        %v870 = vld [vmem:[%s1 + $0xa28] sm:$0xff]
        %v871 = vld [vmem:[%s1 + $0xa30] sm:$0xff]
        %v872 = vld [vmem:[%s1 + $0xa38] sm:$0xff]
        %v873 = vld [vmem:[%s1 + $0xa40] sm:$0xff]
        %v874 = vld [vmem:[%s1 + $0xa48] sm:$0xff]
        %v875 = vld [vmem:[%s1 + $0xa50] sm:$0xff]
        %v876 = vld [vmem:[%s1 + $0xa58] sm:$0xff]
        %v877 = vld [vmem:[%s1 + $0xa60] sm:$0xff]
        %v878 = vld [vmem:[%s1 + $0xa68] sm:$0xff]
        %v879 = vld [vmem:[%s1 + $0xa70] sm:$0xff]
        %v880 = vld [vmem:[%s1 + $0xa78] sm:$0xff]
        %v881 = vld [vmem:[%s1 + $0xa80] sm:$0xff]
        %v882 = vld [vmem:[%s1 + $0xa88] sm:$0xff]
        %v883 = vld [vmem:[%s1 + $0xa90] sm:$0xff]
        %v884 = vld [vmem:[%s1 + $0xa98] sm:$0xff]
        %v885 = vld [vmem:[%s1 + $0xaa0] sm:$0xff]
        %v886 = vld [vmem:[%s1 + $0xaa8] sm:$0xff]
        %v887 = vld [vmem:[%s1 + $0xab0] sm:$0xff]
        %v888 = vld [vmem:[%s1 + $0xab8] sm:$0xff]
        %v889 = vld [vmem:[%s1 + $0xac0] sm:$0xff]
        %v890 = vld [vmem:[%s1 + $0xac8] sm:$0xff]
        %v891 = vld [vmem:[%s1 + $0xad0] sm:$0xff]
        %v892 = vld [vmem:[%s1 + $0xad8] sm:$0xff]
        %v893 = vld [vmem:[%s1 + $0xae0] sm:$0xff]
        %v894 = vld [vmem:[%s1 + $0xae8] sm:$0xff]
        %v895 = vld [vmem:[%s1 + $0xaf0] sm:$0xff]
        %v896 = vld [vmem:[%s1 + $0xaf8] sm:$0xff]
        %v897 = vld [vmem:[%s1 + $0xb00] sm:$0xff]
        %v898 = vld [vmem:[%s1 + $0xb08] sm:$0xff]
        %v899 = vld [vmem:[%s1 + $0xb10] sm:$0xff]
        %v900 = vld [vmem:[%s1 + $0xb18] sm:$0xff]
        %v901 = vld [vmem:[%s1 + $0xb20] sm:$0xff]
        %v902 = vld [vmem:[%s1 + $0xb28] sm:$0xff]
        %v903 = vld [vmem:[%s1 + $0xb30] sm:$0xff]
        %v904 = vld [vmem:[%s1 + $0xb38] sm:$0xff]
        %v905 = vld [vmem:[%s1 + $0xb40] sm:$0xff]
        %v906 = vld [vmem:[%s1 + $0xb48] sm:$0xff]
        %v907 = vld [vmem:[%s1 + $0xb50] sm:$0xff]
        %v908 = vld [vmem:[%s1 + $0xb58] sm:$0xff]
        %v909 = vld [vmem:[%s1 + $0xb60] sm:$0xff]
        %v910 = vld [vmem:[%s1 + $0xb68] sm:$0xff]
        %v911 = vld [vmem:[%s1 + $0xb70] sm:$0xff]
        %v912 = vld [vmem:[%s1 + $0xb78] sm:$0xff]
        %v913 = vld [vmem:[%s1 + $0xb80] sm:$0xff]
        %v914 = vld [vmem:[%s1 + $0xb88] sm:$0xff]
        %v915 = vld [vmem:[%s1 + $0xb90] sm:$0xff]
        %v916 = vld [vmem:[%s1 + $0xb98] sm:$0xff]
        %v917 = vld [vmem:[%s1 + $0xba0] sm:$0xff]
        %v918 = vld [vmem:[%s1 + $0xba8] sm:$0xff]
        %v919 = vld [vmem:[%s1 + $0xbb0] sm:$0xff]
        %v920 = vld [vmem:[%s1 + $0xbb8] sm:$0xff]
        %v921 = vld [vmem:[%s1 + $0xbc0] sm:$0xff]
        %v922 = vld [vmem:[%s1 + $0xbc8] sm:$0xff]
        %v923 = vld [vmem:[%s1 + $0xbd0] sm:$0xff]
        %v924 = vld [vmem:[%s1 + $0xbd8] sm:$0xff]
        %v925 = vld [vmem:[%s1 + $0xbe0] sm:$0xff]
        %v926 = vld [vmem:[%s1 + $0xbe8] sm:$0xff]
        %v927 = vld [vmem:[%s1 + $0xbf0] sm:$0xff]
        %v928 = vld [vmem:[%s1 + $0xbf8] sm:$0xff]
        %v929 = vld [vmem:[%s1 + $0xc00] sm:$0xff]
        %v930 = vld [vmem:[%s1 + $0xc08] sm:$0xff]
        %v931 = vld [vmem:[%s1 + $0xc10] sm:$0xff]
        %v932 = vld [vmem:[%s1 + $0xc18] sm:$0xff]
        %v933 = vld [vmem:[%s1 + $0xc20] sm:$0xff]
        %v934 = vld [vmem:[%s1 + $0xc28] sm:$0xff]
        %v935 = vld [vmem:[%s1 + $0xc30] sm:$0xff]
        %v936 = vld [vmem:[%s1 + $0xc38] sm:$0xff]
        %v937 = vld [vmem:[%s1 + $0xc40] sm:$0xff]
        %v938 = vld [vmem:[%s1 + $0xc48] sm:$0xff]
        %v939 = vld [vmem:[%s1 + $0xc50] sm:$0xff]
        %v940 = vld [vmem:[%s1 + $0xc58] sm:$0xff]
        %v941 = vld [vmem:[%s1 + $0xc60] sm:$0xff]
        %v942 = vld [vmem:[%s1 + $0xc68] sm:$0xff]
        %v943 = vld [vmem:[%s1 + $0xc70] sm:$0xff]
        %v944 = vld [vmem:[%s1 + $0xc78] sm:$0xff]
        %v945 = vld [vmem:[%s1 + $0xc80] sm:$0xff]
        %v946 = vld [vmem:[%s1 + $0xc88] sm:$0xff]
        %v947 = vld [vmem:[%s1 + $0xc90] sm:$0xff]
        %v948 = vld [vmem:[%s1 + $0xc98] sm:$0xff]
        %v949 = vld [vmem:[%s1 + $0xca0] sm:$0xff]
        %v950 = vld [vmem:[%s1 + $0xca8] sm:$0xff]
        %v951 = vld [vmem:[%s1 + $0xcb0] sm:$0xff]
        %v952 = vld [vmem:[%s1 + $0xcb8] sm:$0xff]
        %v953 = vld [vmem:[%s1 + $0xcc0] sm:$0xff]
        %v954 = vld [vmem:[%s1 + $0xcc8] sm:$0xff]
        %v955 = vld [vmem:[%s1 + $0xcd0] sm:$0xff]
        %v956 = vld [vmem:[%s1 + $0xcd8] sm:$0xff]
        %v957 = vld [vmem:[%s1 + $0xce0] sm:$0xff]
        %v958 = vld [vmem:[%s1 + $0xce8] sm:$0xff]
        %v959 = vld [vmem:[%s1 + $0xcf0] sm:$0xff]
        %v960 = vld [vmem:[%s1 + $0xcf8] sm:$0xff]
        %v961 = vld [vmem:[%s1 + $0xd00] sm:$0xff]
        %v962 = vld [vmem:[%s1 + $0xd08] sm:$0xff]
        %v963 = vld [vmem:[%s1 + $0xd10] sm:$0xff]
        %v964 = vld [vmem:[%s1 + $0xd18] sm:$0xff]
        %v965 = vld [vmem:[%s1 + $0xd20] sm:$0xff]
        %v966 = vld [vmem:[%s1 + $0xd28] sm:$0xff]
        %v967 = vld [vmem:[%s1 + $0xd30] sm:$0xff]
        %v968 = vld [vmem:[%s1 + $0xd38] sm:$0xff]
        %v969 = vld [vmem:[%s1 + $0xd40] sm:$0xff]
        %v970 = vld [vmem:[%s1 + $0xd48] sm:$0xff]
        %v971 = vld [vmem:[%s1 + $0xd50] sm:$0xff]
        %v972 = vld [vmem:[%s1 + $0xd58] sm:$0xff]
        %v973 = vld [vmem:[%s1 + $0xd60] sm:$0xff]
        %v974 = vld [vmem:[%s1 + $0xd68] sm:$0xff]
        %v975 = vld [vmem:[%s1 + $0xd70] sm:$0xff]
        %v976 = vld [vmem:[%s1 + $0xd78] sm:$0xff]
        %v977 = vld [vmem:[%s1 + $0xd80] sm:$0xff]
        %v978 = vld [vmem:[%s1 + $0xd88] sm:$0xff]
        %v979 = vld [vmem:[%s1 + $0xd90] sm:$0xff]
        %v980 = vld [vmem:[%s1 + $0xd98] sm:$0xff]
        %v981 = vld [vmem:[%s1 + $0xda0] sm:$0xff]
        %v982 = vld [vmem:[%s1 + $0xda8] sm:$0xff]
        %v983 = vld [vmem:[%s1 + $0xdb0] sm:$0xff]
        %v984 = vld [vmem:[%s1 + $0xdb8] sm:$0xff]
        %v985 = vld [vmem:[%s1 + $0xdc0] sm:$0xff]
        %v986 = vld [vmem:[%s1 + $0xdc8] sm:$0xff]
        %v987 = vld [vmem:[%s1 + $0xdd0] sm:$0xff]
        %v988 = vld [vmem:[%s1 + $0xdd8] sm:$0xff]
        %v989 = vld [vmem:[%s1 + $0xde0] sm:$0xff]
        %v990 = vld [vmem:[%s1 + $0xde8] sm:$0xff]
        %v991 = vld [vmem:[%s1 + $0xdf0] sm:$0xff]
        %v992 = vld [vmem:[%s1 + $0xdf8] sm:$0xff]
        %v993 = vld [vmem:[%s1 + $0xe00] sm:$0xff]
        %v994 = vld [vmem:[%s1 + $0xe08] sm:$0xff]
        %v995 = vld [vmem:[%s1 + $0xe10] sm:$0xff]
        %v996 = vld [vmem:[%s1 + $0xe18] sm:$0xff]
        %v997 = vld [vmem:[%s1 + $0xe20] sm:$0xff]
        %v998 = vld [vmem:[%s1 + $0xe28] sm:$0xff]
        %v999 = vld [vmem:[%s1 + $0xe30] sm:$0xff]
        %v1000 = vld [vmem:[%s1 + $0xe38] sm:$0xff]
        %v1001 = vld [vmem:[%s1 + $0xe40] sm:$0xff]
        %v1002 = vld [vmem:[%s1 + $0xe48] sm:$0xff]
        %v1003 = vld [vmem:[%s1 + $0xe50] sm:$0xff]
        %v1004 = vld [vmem:[%s1 + $0xe58] sm:$0xff]
        %v1005 = vld [vmem:[%s1 + $0xe60] sm:$0xff]
        %v1006 = vld [vmem:[%s1 + $0xe68] sm:$0xff]
        %v1007 = vld [vmem:[%s1 + $0xe70] sm:$0xff]
        %v1008 = vld [vmem:[%s1 + $0xe78] sm:$0xff]
        %v1009 = vld [vmem:[%s1 + $0xe80] sm:$0xff]
        %v1010 = vld [vmem:[%s1 + $0xe88] sm:$0xff]
        %v1011 = vld [vmem:[%s1 + $0xe90] sm:$0xff]
        %v1012 = vld [vmem:[%s1 + $0xe98] sm:$0xff]
        %v1013 = vld [vmem:[%s1 + $0xea0] sm:$0xff]
        %v1014 = vld [vmem:[%s1 + $0xea8] sm:$0xff]
        %v1015 = vld [vmem:[%s1 + $0xeb0] sm:$0xff]
        %v1016 = vld [vmem:[%s1 + $0xeb8] sm:$0xff]
        %v1017 = vld [vmem:[%s1 + $0xec0] sm:$0xff]
        %v1018 = vld [vmem:[%s1 + $0xec8] sm:$0xff]
        %v1019 = vld [vmem:[%s1 + $0xed0] sm:$0xff]
        %v1020 = vld [vmem:[%s1 + $0xed8] sm:$0xff]
        %v1021 = vld [vmem:[%s1 + $0xee0] sm:$0xff]
        %v1022 = vld [vmem:[%s1 + $0xee8] sm:$0xff]
        %v1023 = vld [vmem:[%s1 + $0xef0] sm:$0xff]
        %v1024 = vld [vmem:[%s1 + $0xef8] sm:$0xff]
        %v1025 = vld [vmem:[%s1 + $0xf00] sm:$0xff]
        %v1026 = vld [vmem:[%s1 + $0xf08] sm:$0xff]
        %v1027 = vld [vmem:[%s1 + $0xf10] sm:$0xff]
        %v1028 = vld [vmem:[%s1 + $0xf18] sm:$0xff]
        %v1029 = vld [vmem:[%s1 + $0xf20] sm:$0xff]
        %v1030 = vld [vmem:[%s1 + $0xf28] sm:$0xff]
        %v1031 = vld [vmem:[%s1 + $0xf30] sm:$0xff]
        %v1032 = vld [vmem:[%s1 + $0xf38] sm:$0xff]
        %v1033 = vld [vmem:[%s1 + $0xf40] sm:$0xff]
        %v1034 = vld [vmem:[%s1 + $0xf48] sm:$0xff]
        %v1035 = vld [vmem:[%s1 + $0xf50] sm:$0xff]
        %v1036 = vld [vmem:[%s1 + $0xf58] sm:$0xff]
        %v1037 = vld [vmem:[%s1 + $0xf60] sm:$0xff]
        %v1038 = vld [vmem:[%s1 + $0xf68] sm:$0xff]
        %v1039 = vld [vmem:[%s1 + $0xf70] sm:$0xff]
        %v1040 = vld [vmem:[%s1 + $0xf78] sm:$0xff]
        %v1041 = vld [vmem:[%s1 + $0xf80] sm:$0xff]
        %v1042 = vld [vmem:[%s1 + $0xf88] sm:$0xff]
        %v1043 = vld [vmem:[%s1 + $0xf90] sm:$0xff]
        %v1044 = vld [vmem:[%s1 + $0xf98] sm:$0xff]
        %v1045 = vld [vmem:[%s9] ss:$4 sm:$0xf]
        %v1047 = vlaneseq
        %v1048 = vshrl.u32 %v1047, 7
        %v1049 = vsub.s32 0, %v1048
        %v1050 = vrot.slane %v544, %v1049
        %v1051 = vlaneseq
        %v1052 = vshrl.u32 %v1051, 7
        %v1053 = vsub.s32 1, %v1052
        %v1054 = vrot.slane %v544, %v1053
        %v1055 = vlaneseq
        %v1056 = vshrl.u32 %v1055, 7
        %v1057 = vsub.s32 2, %v1056
        %v1058 = vrot.slane %v544, %v1057
        %v1059 = vlaneseq
        %v1060 = vshrl.u32 %v1059, 7
        %v1061 = vsub.s32 3, %v1060
        %v1062 = vrot.slane %v544, %v1061
        %v1063 = vlaneseq
        %v1064 = vshrl.u32 %v1063, 7
        %v1065 = vsub.s32 4, %v1064
        %v1066 = vrot.slane %v544, %v1065
        %v1067 = vlaneseq
        %v1068 = vshrl.u32 %v1067, 7
        %v1069 = vsub.s32 5, %v1068
        %v1070 = vrot.slane %v544, %v1069
        %v1071 = vlaneseq
        %v1072 = vshrl.u32 %v1071, 7
        %v1073 = vsub.s32 6, %v1072
        %v1074 = vrot.slane %v544, %v1073
        %v1075 = vlaneseq
        %v1076 = vshrl.u32 %v1075, 7
        %v1077 = vsub.s32 7, %v1076
        %v1078 = vrot.slane %v544, %v1077
        %v1087 = vlaneseq
        %v1088 = vshrl.u32 %v1087, 7
        %v1089 = vsub.s32 0, %v1088
        %v1090 = vrot.slane %v1045, %v1089
        %v1091 = vlaneseq
        %v1092 = vshrl.u32 %v1091, 7
        %v1093 = vsub.s32 1, %v1092
        %v1094 = vrot.slane %v1045, %v1093
        %v1095 = vlaneseq
        %v1096 = vshrl.u32 %v1095, 7
        %v1097 = vsub.s32 2, %v1096
        %v1098 = vrot.slane %v1045, %v1097
        %v1099 = vlaneseq
        %v1100 = vshrl.u32 %v1099, 7
        %v1101 = vsub.s32 3, %v1100
        %v1102 = vrot.slane %v1045, %v1101
        %vm1107 = vcmask 850944
        %v1108 = vsel %vm1107, %v1078, 0
        %1110 = vmatprep.subr.mxu0 %v606
        %1111 = vmatpush1.msra.mxu0 %v605
        %1112 = vmatprep.subr.mxu0 %v602
        %1113 = vmatpush1.msra.mxu0 %v601
        %1114 = vmatprep.subr.mxu0 %v598
        %1115 = vmatpush1.msra.mxu0 %v597
        %1116 = vmatprep.subr.mxu0 %v594
        %1117 = vmatpush1.msra.mxu0 %v593
        %1118 = vmatprep.subr.mxu0 %v590
        %1119 = vmatpush1.msra.mxu0 %v589
        %1120 = vmatprep.subr.mxu0 %v586
        %1121 = vmatpush1.msra.mxu0 %v585
        %1122 = vmatprep.subr.mxu0 %v582
        %1123 = vmatpush1.msra.mxu0 %v581
        %1124 = vmatprep.subr.mxu0 %v578
        %1125 = vmatpush1.msra.mxu0 %v577
        %1126 = vmatprep.subr.mxu0 %v574
        %1127 = vmatpush1.msra.mxu0 %v573
        %1128 = vmatprep.subr.mxu0 %v570
        %1129 = vmatpush1.msra.mxu0 %v569
        %1130 = vmatprep.subr.mxu0 %v566
        %1131 = vmatpush1.msra.mxu0 %v565
        %1132 = vmatprep.subr.mxu0 %v562
        %1133 = vmatpush1.msra.mxu0 %v561
        %1134 = vmatprep.subr.mxu0 %v558
        %1135 = vmatpush1.msra.mxu0 %v557
        %1136 = vmatprep.subr.mxu0 %v554
        %1137 = vmatpush1.msra.mxu0 %v553
        %1138 = vmatprep.subr.mxu0 %v550
        %1139 = vmatpush1.msra.mxu0 %v549
        %1140 = vmatprep.subr.mxu0 %v546
        %1141 = vmatpush1.msra.mxu0 %v545
        %1142 = vmatprep.subr.mxu0 %v670
        %1143 = vmatpush2.msra.mxu0 %v669
        %1144 = vmatprep.subr.mxu0 %v666
        %1145 = vmatpush2.msra.mxu0 %v665
        %1146 = vmatprep.subr.mxu0 %v662
        %1147 = vmatpush2.msra.mxu0 %v661
        %1148 = vmatprep.subr.mxu0 %v658
        %1149 = vmatpush2.msra.mxu0 %v657
        %1150 = vmatprep.subr.mxu0 %v654
        %1151 = vmatpush2.msra.mxu0 %v653
        %1152 = vmatprep.subr.mxu0 %v650
        %1153 = vmatpush2.msra.mxu0 %v649
        %1154 = vmatprep.subr.mxu0 %v646
        %1155 = vmatpush2.msra.mxu0 %v645
        %1156 = vmatprep.subr.mxu0 %v642
        %1157 = vmatpush2.msra.mxu0 %v641
        %1158 = vmatprep.subr.mxu0 %v638
        %1159 = vmatpush2.msra.mxu0 %v637
        %1160 = vmatprep.subr.mxu0 %v634
        %1161 = vmatpush2.msra.mxu0 %v633
        %1162 = vmatprep.subr.mxu0 %v630
        %1163 = vmatpush2.msra.mxu0 %v629
        %1164 = vmatprep.subr.mxu0 %v626
        %1165 = vmatpush2.msra.mxu0 %v625
        %1166 = vmatprep.subr.mxu0 %v622
        %1167 = vmatpush2.msra.mxu0 %v621
        %1168 = vmatprep.subr.mxu0 %v618
        %1169 = vmatpush2.msra.mxu0 %v617
        %1170 = vmatprep.subr.mxu0 %v614
        %1171 = vmatpush2.msra.mxu0 %v613
        %1172 = vmatprep.subr.mxu0 %v610
        %1173 = vmatpush2.msra.mxu0 %v609
        %1174 = vmatprep.mubr.f32.mxu0 %v1054
        %1175 = vmatmul.mubr.f32.gmra.mxu0 %v1050
        %v1176 = vpop.f32.mrf.mxu0
        %v1177 = vadd.f32 %v1090, %v1176
        %v1178 = vpop.f32.mrf.mxu0
        %v1179 = vadd.f32 %v1094, %v1178
        %1180 = vdwg.mxu0
        %1181 = vmatprep.subr.mxu0 %v734
        %1182 = vmatpush1.msra.mxu0 %v733
        %1183 = vmatprep.subr.mxu0 %v730
        %1184 = vmatpush1.msra.mxu0 %v729
        %1185 = vmatprep.subr.mxu0 %v726
        %1186 = vmatpush1.msra.mxu0 %v725
        %1187 = vmatprep.subr.mxu0 %v722
        %1188 = vmatpush1.msra.mxu0 %v721
        %1189 = vmatprep.subr.mxu0 %v718
        %1190 = vmatpush1.msra.mxu0 %v717
        %1191 = vmatprep.subr.mxu0 %v714
        %1192 = vmatpush1.msra.mxu0 %v713
        %1193 = vmatprep.subr.mxu0 %v710
        %1194 = vmatpush1.msra.mxu0 %v709
        %1195 = vmatprep.subr.mxu0 %v706
        %1196 = vmatpush1.msra.mxu0 %v705
        %1197 = vmatprep.subr.mxu0 %v702
        %1198 = vmatpush1.msra.mxu0 %v701
        %1199 = vmatprep.subr.mxu0 %v698
        %1200 = vmatpush1.msra.mxu0 %v697
        %1201 = vmatprep.subr.mxu0 %v694
        %1202 = vmatpush1.msra.mxu0 %v693
        %1203 = vmatprep.subr.mxu0 %v690
        %1204 = vmatpush1.msra.mxu0 %v689
        %1205 = vmatprep.subr.mxu0 %v686
        %1206 = vmatpush1.msra.mxu0 %v685
        %1207 = vmatprep.subr.mxu0 %v682
        %1208 = vmatpush1.msra.mxu0 %v681
        %1209 = vmatprep.subr.mxu0 %v678
        %1210 = vmatpush1.msra.mxu0 %v677
        %1211 = vmatprep.subr.mxu0 %v674
        %1212 = vmatpush1.msra.mxu0 %v673
        %1213 = vmatprep.subr.mxu0 %v798
        %1214 = vmatpush2.msra.mxu0 %v797
        %1215 = vmatprep.subr.mxu0 %v794
        %1216 = vmatpush2.msra.mxu0 %v793
        %1217 = vmatprep.subr.mxu0 %v790
        %1218 = vmatpush2.msra.mxu0 %v789
        %1219 = vmatprep.subr.mxu0 %v786
        %1220 = vmatpush2.msra.mxu0 %v785
        %1221 = vmatprep.subr.mxu0 %v782
        %1222 = vmatpush2.msra.mxu0 %v781
        %1223 = vmatprep.subr.mxu0 %v778
        %1224 = vmatpush2.msra.mxu0 %v777
        %1225 = vmatprep.subr.mxu0 %v774
        %1226 = vmatpush2.msra.mxu0 %v773
        %1227 = vmatprep.subr.mxu0 %v770
        %1228 = vmatpush2.msra.mxu0 %v769
        %1229 = vmatprep.subr.mxu0 %v766
        %1230 = vmatpush2.msra.mxu0 %v765
        %1231 = vmatprep.subr.mxu0 %v762
        %1232 = vmatpush2.msra.mxu0 %v761
        %1233 = vmatprep.subr.mxu0 %v758
        %1234 = vmatpush2.msra.mxu0 %v757
        %1235 = vmatprep.subr.mxu0 %v754
        %1236 = vmatpush2.msra.mxu0 %v753
        %1237 = vmatprep.subr.mxu0 %v750
        %1238 = vmatpush2.msra.mxu0 %v749
        %1239 = vmatprep.subr.mxu0 %v746
        %1240 = vmatpush2.msra.mxu0 %v745
        %1241 = vmatprep.subr.mxu0 %v742
        %1242 = vmatpush2.msra.mxu0 %v741
        %1243 = vmatprep.subr.mxu0 %v738
        %1244 = vmatpush2.msra.mxu0 %v737
        %1245 = vmatprep.mubr.f32.mxu0 %v1062
        %1246 = vmatmul.mubr.f32.gmra.mxu0 %v1058
        %v1247 = vpop.f32.mrf.mxu0
        %v1248 = vadd.f32 %v1177, %v1247
        %v1249 = vpop.f32.mrf.mxu0
        %v1250 = vadd.f32 %v1179, %v1249
        %1251 = vdwg.mxu0
        %1252 = vmatprep.subr.mxu0 %v862
        %1253 = vmatpush1.msra.mxu0 %v861
        %1254 = vmatprep.subr.mxu0 %v858
        %1255 = vmatpush1.msra.mxu0 %v857
        %1256 = vmatprep.subr.mxu0 %v854
        %1257 = vmatpush1.msra.mxu0 %v853
        %1258 = vmatprep.subr.mxu0 %v850
        %1259 = vmatpush1.msra.mxu0 %v849
        %1260 = vmatprep.subr.mxu0 %v846
        %1261 = vmatpush1.msra.mxu0 %v845
        %1262 = vmatprep.subr.mxu0 %v842
        %1263 = vmatpush1.msra.mxu0 %v841
        %1264 = vmatprep.subr.mxu0 %v838
        %1265 = vmatpush1.msra.mxu0 %v837
        %1266 = vmatprep.subr.mxu0 %v834
        %1267 = vmatpush1.msra.mxu0 %v833
        %1268 = vmatprep.subr.mxu0 %v830
        %1269 = vmatpush1.msra.mxu0 %v829
        %1270 = vmatprep.subr.mxu0 %v826
        %1271 = vmatpush1.msra.mxu0 %v825
        %1272 = vmatprep.subr.mxu0 %v822
        %1273 = vmatpush1.msra.mxu0 %v821
        %1274 = vmatprep.subr.mxu0 %v818
        %1275 = vmatpush1.msra.mxu0 %v817
        %1276 = vmatprep.subr.mxu0 %v814
        %1277 = vmatpush1.msra.mxu0 %v813
        %1278 = vmatprep.subr.mxu0 %v810
        %1279 = vmatpush1.msra.mxu0 %v809
        %1280 = vmatprep.subr.mxu0 %v806
        %1281 = vmatpush1.msra.mxu0 %v805
        %1282 = vmatprep.subr.mxu0 %v802
        %1283 = vmatpush1.msra.mxu0 %v801
        %1284 = vmatprep.subr.mxu0 %v926
        %1285 = vmatpush2.msra.mxu0 %v925
        %1286 = vmatprep.subr.mxu0 %v922
        %1287 = vmatpush2.msra.mxu0 %v921
        %1288 = vmatprep.subr.mxu0 %v918
        %1289 = vmatpush2.msra.mxu0 %v917
        %1290 = vmatprep.subr.mxu0 %v914
        %1291 = vmatpush2.msra.mxu0 %v913
        %1292 = vmatprep.subr.mxu0 %v910
        %1293 = vmatpush2.msra.mxu0 %v909
        %1294 = vmatprep.subr.mxu0 %v906
        %1295 = vmatpush2.msra.mxu0 %v905
        %1296 = vmatprep.subr.mxu0 %v902
        %1297 = vmatpush2.msra.mxu0 %v901
        %1298 = vmatprep.subr.mxu0 %v898
        %1299 = vmatpush2.msra.mxu0 %v897
        %1300 = vmatprep.subr.mxu0 %v894
        %1301 = vmatpush2.msra.mxu0 %v893
        %1302 = vmatprep.subr.mxu0 %v890
        %1303 = vmatpush2.msra.mxu0 %v889
        %1304 = vmatprep.subr.mxu0 %v886
        %1305 = vmatpush2.msra.mxu0 %v885
        %1306 = vmatprep.subr.mxu0 %v882
        %1307 = vmatpush2.msra.mxu0 %v881
        %1308 = vmatprep.subr.mxu0 %v878
        %1309 = vmatpush2.msra.mxu0 %v877
        %1310 = vmatprep.subr.mxu0 %v874
        %1311 = vmatpush2.msra.mxu0 %v873
        %1312 = vmatprep.subr.mxu0 %v870
        %1313 = vmatpush2.msra.mxu0 %v869
        %1314 = vmatprep.subr.mxu0 %v866
        %1315 = vmatpush2.msra.mxu0 %v865
        %1316 = vmatprep.mubr.f32.mxu0 %v1070
        %1317 = vmatmul.mubr.f32.gmra.mxu0 %v1066
        %v1318 = vpop.f32.mrf.mxu0
        %v1319 = vadd.f32 %v1248, %v1318
        %v1320 = vpop.f32.mrf.mxu0
        %v1321 = vadd.f32 %v1250, %v1320
        %1322 = vdwg.mxu0
        %1323 = vmatprep.subr.mxu0 %v990
        %1324 = vmatpush1.msra.mxu0 %v989
        %1325 = vmatprep.subr.mxu0 %v986
        %1326 = vmatpush1.msra.mxu0 %v985
        %1327 = vmatprep.subr.mxu0 %v982
        %1328 = vmatpush1.msra.mxu0 %v981
        %1329 = vmatprep.subr.mxu0 %v978
        %1330 = vmatpush1.msra.mxu0 %v977
        %1331 = vmatprep.subr.mxu0 %v974
        %1332 = vmatpush1.msra.mxu0 %v973
        %1333 = vmatprep.subr.mxu0 %v970
        %1334 = vmatpush1.msra.mxu0 %v969
        %1335 = vmatprep.subr.mxu0 %v966
        %1336 = vmatpush1.msra.mxu0 %v965
        %1337 = vmatprep.subr.mxu0 %v962
        %1338 = vmatpush1.msra.mxu0 %v961
        %1339 = vmatprep.subr.mxu0 %v958
        %1340 = vmatpush1.msra.mxu0 %v957
        %1341 = vmatprep.subr.mxu0 %v954
        %1342 = vmatpush1.msra.mxu0 %v953
        %1343 = vmatprep.subr.mxu0 %v950
        %1344 = vmatpush1.msra.mxu0 %v949
        %1345 = vmatprep.subr.mxu0 %v946
        %1346 = vmatpush1.msra.mxu0 %v945
        %1347 = vmatprep.subr.mxu0 %v942
        %1348 = vmatpush1.msra.mxu0 %v941
        %1349 = vmatprep.subr.mxu0 %v938
        %1350 = vmatpush1.msra.mxu0 %v937
        %1351 = vmatprep.subr.mxu0 %v934
        %1352 = vmatpush1.msra.mxu0 %v933
        %1353 = vmatprep.subr.mxu0 %v930
        %1354 = vmatpush1.msra.mxu0 %v929
        %1355 = vmatprep.subr.mxu0 0.0
        %1356 = vmatpush2.msra.mxu0 0.0
        %1357 = vmatprep.subr.mxu0 0.0
        %1358 = vmatpush2.msra.mxu0 0.0
        %1359 = vmatprep.subr.mxu0 0.0
        %1360 = vmatpush2.msra.mxu0 0.0
        %1361 = vmatprep.subr.mxu0 %v1042
        %1362 = vmatpush2.msra.mxu0 %v1041
        %1363 = vmatprep.subr.mxu0 %v1038
        %1364 = vmatpush2.msra.mxu0 %v1037
        %1365 = vmatprep.subr.mxu0 %v1034
        %1366 = vmatpush2.msra.mxu0 %v1033
        %1367 = vmatprep.subr.mxu0 %v1030
        %1368 = vmatpush2.msra.mxu0 %v1029
        %1369 = vmatprep.subr.mxu0 %v1026
        %1370 = vmatpush2.msra.mxu0 %v1025
        %1371 = vmatprep.subr.mxu0 %v1022
        %1372 = vmatpush2.msra.mxu0 %v1021
        %1373 = vmatprep.subr.mxu0 %v1018
        %1374 = vmatpush2.msra.mxu0 %v1017
        %1375 = vmatprep.subr.mxu0 %v1014
        %1376 = vmatpush2.msra.mxu0 %v1013
        %1377 = vmatprep.subr.mxu0 %v1010
        %1378 = vmatpush2.msra.mxu0 %v1009
        %1379 = vmatprep.subr.mxu0 %v1006
        %1380 = vmatpush2.msra.mxu0 %v1005
        %1381 = vmatprep.subr.mxu0 %v1002
        %1382 = vmatpush2.msra.mxu0 %v1001
        %1383 = vmatprep.subr.mxu0 %v998
        %1384 = vmatpush2.msra.mxu0 %v997
        %1385 = vmatprep.subr.mxu0 %v994
        %1386 = vmatpush2.msra.mxu0 %v993
        %1387 = vmatprep.mubr.f32.mxu0 %v1108
        %1388 = vmatmul.mubr.f32.gmra.mxu0 %v1074
        %v1389 = vpop.f32.mrf.mxu0
        %v1390 = vadd.f32 %v1319, %v1389
        %v1391 = vpop.f32.mrf.mxu0
        %v1392 = vadd.f32 %v1321, %v1391
        %1393 = vdwg.mxu0
        %1394 = vmatprep.subr.mxu0 %v608
        %1395 = vmatpush1.msra.mxu0 %v607
        %1396 = vmatprep.subr.mxu0 %v604
        %1397 = vmatpush1.msra.mxu0 %v603
        %1398 = vmatprep.subr.mxu0 %v600
        %1399 = vmatpush1.msra.mxu0 %v599
        %1400 = vmatprep.subr.mxu0 %v596
        %1401 = vmatpush1.msra.mxu0 %v595
        %1402 = vmatprep.subr.mxu0 %v592
        %1403 = vmatpush1.msra.mxu0 %v591
        %1404 = vmatprep.subr.mxu0 %v588
        %1405 = vmatpush1.msra.mxu0 %v587
        %1406 = vmatprep.subr.mxu0 %v584
        %1407 = vmatpush1.msra.mxu0 %v583
        %1408 = vmatprep.subr.mxu0 %v580
        %1409 = vmatpush1.msra.mxu0 %v579
        %1410 = vmatprep.subr.mxu0 %v576
        %1411 = vmatpush1.msra.mxu0 %v575
        %1412 = vmatprep.subr.mxu0 %v572
        %1413 = vmatpush1.msra.mxu0 %v571
        %1414 = vmatprep.subr.mxu0 %v568
        %1415 = vmatpush1.msra.mxu0 %v567
        %1416 = vmatprep.subr.mxu0 %v564
        %1417 = vmatpush1.msra.mxu0 %v563
        %1418 = vmatprep.subr.mxu0 %v560
        %1419 = vmatpush1.msra.mxu0 %v559
        %1420 = vmatprep.subr.mxu0 %v556
        %1421 = vmatpush1.msra.mxu0 %v555
        %1422 = vmatprep.subr.mxu0 %v552
        %1423 = vmatpush1.msra.mxu0 %v551
        %1424 = vmatprep.subr.mxu0 %v548
        %1425 = vmatpush1.msra.mxu0 %v547
        %1426 = vmatprep.subr.mxu0 %v672
        %1427 = vmatpush2.msra.mxu0 %v671
        %1428 = vmatprep.subr.mxu0 %v668
        %1429 = vmatpush2.msra.mxu0 %v667
        %1430 = vmatprep.subr.mxu0 %v664
        %1431 = vmatpush2.msra.mxu0 %v663
        %1432 = vmatprep.subr.mxu0 %v660
        %1433 = vmatpush2.msra.mxu0 %v659
        %1434 = vmatprep.subr.mxu0 %v656
        %1435 = vmatpush2.msra.mxu0 %v655
        %1436 = vmatprep.subr.mxu0 %v652
        %1437 = vmatpush2.msra.mxu0 %v651
        %1438 = vmatprep.subr.mxu0 %v648
        %1439 = vmatpush2.msra.mxu0 %v647
        %1440 = vmatprep.subr.mxu0 %v644
        %1441 = vmatpush2.msra.mxu0 %v643
        %1442 = vmatprep.subr.mxu0 %v640
        %1443 = vmatpush2.msra.mxu0 %v639
        %1444 = vmatprep.subr.mxu0 %v636
        %1445 = vmatpush2.msra.mxu0 %v635
        %1446 = vmatprep.subr.mxu0 %v632
        %1447 = vmatpush2.msra.mxu0 %v631
        %1448 = vmatprep.subr.mxu0 %v628
        %1449 = vmatpush2.msra.mxu0 %v627
        %1450 = vmatprep.subr.mxu0 %v624
        %1451 = vmatpush2.msra.mxu0 %v623
        %1452 = vmatprep.subr.mxu0 %v620
        %1453 = vmatpush2.msra.mxu0 %v619
        %1454 = vmatprep.subr.mxu0 %v616
        %1455 = vmatpush2.msra.mxu0 %v615
        %1456 = vmatprep.subr.mxu0 %v612
        %1457 = vmatpush2.msra.mxu0 %v611
        %1458 = vmatprep.mubr.f32.mxu0 %v1054
        %1459 = vmatmul.mubr.f32.gmra.mxu0 %v1050
        %v1460 = vpop.f32.mrf.mxu0
        %v1461 = vadd.f32 %v1098, %v1460
        %v1462 = vpop.f32.mrf.mxu0
        %v1463 = vadd.f32 %v1102, %v1462
        %1464 = vdwg.mxu0
        %1465 = vmatprep.subr.mxu0 %v736
        %1466 = vmatpush1.msra.mxu0 %v735
        %1467 = vmatprep.subr.mxu0 %v732
        %1468 = vmatpush1.msra.mxu0 %v731
        %1469 = vmatprep.subr.mxu0 %v728
        %1470 = vmatpush1.msra.mxu0 %v727
        %1471 = vmatprep.subr.mxu0 %v724
        %1472 = vmatpush1.msra.mxu0 %v723
        %1473 = vmatprep.subr.mxu0 %v720
        %1474 = vmatpush1.msra.mxu0 %v719
        %1475 = vmatprep.subr.mxu0 %v716
        %1476 = vmatpush1.msra.mxu0 %v715
        %1477 = vmatprep.subr.mxu0 %v712
        %1478 = vmatpush1.msra.mxu0 %v711
        %1479 = vmatprep.subr.mxu0 %v708
        %1480 = vmatpush1.msra.mxu0 %v707
        %1481 = vmatprep.subr.mxu0 %v704
        %1482 = vmatpush1.msra.mxu0 %v703
        %1483 = vmatprep.subr.mxu0 %v700
        %1484 = vmatpush1.msra.mxu0 %v699
        %1485 = vmatprep.subr.mxu0 %v696
        %1486 = vmatpush1.msra.mxu0 %v695
        %1487 = vmatprep.subr.mxu0 %v692
        %1488 = vmatpush1.msra.mxu0 %v691
        %1489 = vmatprep.subr.mxu0 %v688
        %1490 = vmatpush1.msra.mxu0 %v687
        %1491 = vmatprep.subr.mxu0 %v684
        %1492 = vmatpush1.msra.mxu0 %v683
        %1493 = vmatprep.subr.mxu0 %v680
        %1494 = vmatpush1.msra.mxu0 %v679
        %1495 = vmatprep.subr.mxu0 %v676
        %1496 = vmatpush1.msra.mxu0 %v675
        %1497 = vmatprep.subr.mxu0 %v800
        %1498 = vmatpush2.msra.mxu0 %v799
        %1499 = vmatprep.subr.mxu0 %v796
        %1500 = vmatpush2.msra.mxu0 %v795
        %1501 = vmatprep.subr.mxu0 %v792
        %1502 = vmatpush2.msra.mxu0 %v791
        %1503 = vmatprep.subr.mxu0 %v788
        %1504 = vmatpush2.msra.mxu0 %v787
        %1505 = vmatprep.subr.mxu0 %v784
        %1506 = vmatpush2.msra.mxu0 %v783
        %1507 = vmatprep.subr.mxu0 %v780
        %1508 = vmatpush2.msra.mxu0 %v779
        %1509 = vmatprep.subr.mxu0 %v776
        %1510 = vmatpush2.msra.mxu0 %v775
        %1511 = vmatprep.subr.mxu0 %v772
        %1512 = vmatpush2.msra.mxu0 %v771
        %1513 = vmatprep.subr.mxu0 %v768
        %1514 = vmatpush2.msra.mxu0 %v767
        %1515 = vmatprep.subr.mxu0 %v764
        %1516 = vmatpush2.msra.mxu0 %v763
        %1517 = vmatprep.subr.mxu0 %v760
        %1518 = vmatpush2.msra.mxu0 %v759
        %1519 = vmatprep.subr.mxu0 %v756
        %1520 = vmatpush2.msra.mxu0 %v755
        %1521 = vmatprep.subr.mxu0 %v752
        %1522 = vmatpush2.msra.mxu0 %v751
        %1523 = vmatprep.subr.mxu0 %v748
        %1524 = vmatpush2.msra.mxu0 %v747
        %1525 = vmatprep.subr.mxu0 %v744
        %1526 = vmatpush2.msra.mxu0 %v743
        %1527 = vmatprep.subr.mxu0 %v740
        %1528 = vmatpush2.msra.mxu0 %v739
        %1529 = vmatprep.mubr.f32.mxu0 %v1062
        %1530 = vmatmul.mubr.f32.gmra.mxu0 %v1058
        %v1531 = vpop.f32.mrf.mxu0
        %v1532 = vadd.f32 %v1461, %v1531
        %v1533 = vpop.f32.mrf.mxu0
        %v1534 = vadd.f32 %v1463, %v1533
        %1535 = vdwg.mxu0
        %1536 = vmatprep.subr.mxu0 %v864
        %1537 = vmatpush1.msra.mxu0 %v863
        %1538 = vmatprep.subr.mxu0 %v860
        %1539 = vmatpush1.msra.mxu0 %v859
        %1540 = vmatprep.subr.mxu0 %v856
        %1541 = vmatpush1.msra.mxu0 %v855
        %1542 = vmatprep.subr.mxu0 %v852
        %1543 = vmatpush1.msra.mxu0 %v851
        %1544 = vmatprep.subr.mxu0 %v848
        %1545 = vmatpush1.msra.mxu0 %v847
        %1546 = vmatprep.subr.mxu0 %v844
        %1547 = vmatpush1.msra.mxu0 %v843
        %1548 = vmatprep.subr.mxu0 %v840
        %1549 = vmatpush1.msra.mxu0 %v839
        %1550 = vmatprep.subr.mxu0 %v836
        %1551 = vmatpush1.msra.mxu0 %v835
        %1552 = vmatprep.subr.mxu0 %v832
        %1553 = vmatpush1.msra.mxu0 %v831
        %1554 = vmatprep.subr.mxu0 %v828
        %1555 = vmatpush1.msra.mxu0 %v827
        %1556 = vmatprep.subr.mxu0 %v824
        %1557 = vmatpush1.msra.mxu0 %v823
        %1558 = vmatprep.subr.mxu0 %v820
        %1559 = vmatpush1.msra.mxu0 %v819
        %1560 = vmatprep.subr.mxu0 %v816
        %1561 = vmatpush1.msra.mxu0 %v815
        %1562 = vmatprep.subr.mxu0 %v812
        %1563 = vmatpush1.msra.mxu0 %v811
        %1564 = vmatprep.subr.mxu0 %v808
        %1565 = vmatpush1.msra.mxu0 %v807
        %1566 = vmatprep.subr.mxu0 %v804
        %1567 = vmatpush1.msra.mxu0 %v803
        %1568 = vmatprep.subr.mxu0 %v928
        %1569 = vmatpush2.msra.mxu0 %v927
        %1570 = vmatprep.subr.mxu0 %v924
        %1571 = vmatpush2.msra.mxu0 %v923
        %1572 = vmatprep.subr.mxu0 %v920
        %1573 = vmatpush2.msra.mxu0 %v919
        %1574 = vmatprep.subr.mxu0 %v916
        %1575 = vmatpush2.msra.mxu0 %v915
        %1576 = vmatprep.subr.mxu0 %v912
        %1577 = vmatpush2.msra.mxu0 %v911
        %1578 = vmatprep.subr.mxu0 %v908
        %1579 = vmatpush2.msra.mxu0 %v907
        %1580 = vmatprep.subr.mxu0 %v904
        %1581 = vmatpush2.msra.mxu0 %v903
        %1582 = vmatprep.subr.mxu0 %v900
        %1583 = vmatpush2.msra.mxu0 %v899
        %1584 = vmatprep.subr.mxu0 %v896
        %1585 = vmatpush2.msra.mxu0 %v895
        %1586 = vmatprep.subr.mxu0 %v892
        %1587 = vmatpush2.msra.mxu0 %v891
        %1588 = vmatprep.subr.mxu0 %v888
        %1589 = vmatpush2.msra.mxu0 %v887
        %1590 = vmatprep.subr.mxu0 %v884
        %1591 = vmatpush2.msra.mxu0 %v883
        %1592 = vmatprep.subr.mxu0 %v880
        %1593 = vmatpush2.msra.mxu0 %v879
        %1594 = vmatprep.subr.mxu0 %v876
        %1595 = vmatpush2.msra.mxu0 %v875
        %1596 = vmatprep.subr.mxu0 %v872
        %1597 = vmatpush2.msra.mxu0 %v871
        %1598 = vmatprep.subr.mxu0 %v868
        %1599 = vmatpush2.msra.mxu0 %v867
        %1600 = vmatprep.mubr.f32.mxu0 %v1070
        %1601 = vmatmul.mubr.f32.gmra.mxu0 %v1066
        %v1602 = vpop.f32.mrf.mxu0
        %v1603 = vadd.f32 %v1532, %v1602
        %v1604 = vpop.f32.mrf.mxu0
        %v1605 = vadd.f32 %v1534, %v1604
        %1606 = vdwg.mxu0
        %1607 = vmatprep.subr.mxu0 %v992
        %1608 = vmatpush1.msra.mxu0 %v991
        %1609 = vmatprep.subr.mxu0 %v988
        %1610 = vmatpush1.msra.mxu0 %v987
        %1611 = vmatprep.subr.mxu0 %v984
        %1612 = vmatpush1.msra.mxu0 %v983
        %1613 = vmatprep.subr.mxu0 %v980
        %1614 = vmatpush1.msra.mxu0 %v979
        %1615 = vmatprep.subr.mxu0 %v976
        %1616 = vmatpush1.msra.mxu0 %v975
        %1617 = vmatprep.subr.mxu0 %v972
        %1618 = vmatpush1.msra.mxu0 %v971
        %1619 = vmatprep.subr.mxu0 %v968
        %1620 = vmatpush1.msra.mxu0 %v967
        %1621 = vmatprep.subr.mxu0 %v964
        %1622 = vmatpush1.msra.mxu0 %v963
        %1623 = vmatprep.subr.mxu0 %v960
        %1624 = vmatpush1.msra.mxu0 %v959
        %1625 = vmatprep.subr.mxu0 %v956
        %1626 = vmatpush1.msra.mxu0 %v955
        %1627 = vmatprep.subr.mxu0 %v952
        %1628 = vmatpush1.msra.mxu0 %v951
        %1629 = vmatprep.subr.mxu0 %v948
        %1630 = vmatpush1.msra.mxu0 %v947
        %1631 = vmatprep.subr.mxu0 %v944
        %1632 = vmatpush1.msra.mxu0 %v943
        %1633 = vmatprep.subr.mxu0 %v940
        %1634 = vmatpush1.msra.mxu0 %v939
        %1635 = vmatprep.subr.mxu0 %v936
        %1636 = vmatpush1.msra.mxu0 %v935
        %1637 = vmatprep.subr.mxu0 %v932
        %1638 = vmatpush1.msra.mxu0 %v931
        %1639 = vmatprep.subr.mxu0 0.0
        %1640 = vmatpush2.msra.mxu0 0.0
        %1641 = vmatprep.subr.mxu0 0.0
        %1642 = vmatpush2.msra.mxu0 0.0
        %1643 = vmatprep.subr.mxu0 0.0
        %1644 = vmatpush2.msra.mxu0 0.0
        %1645 = vmatprep.subr.mxu0 %v1044
        %1646 = vmatpush2.msra.mxu0 %v1043
        %1647 = vmatprep.subr.mxu0 %v1040
        %1648 = vmatpush2.msra.mxu0 %v1039
        %1649 = vmatprep.subr.mxu0 %v1036
        %1650 = vmatpush2.msra.mxu0 %v1035
        %1651 = vmatprep.subr.mxu0 %v1032
        %1652 = vmatpush2.msra.mxu0 %v1031
        %1653 = vmatprep.subr.mxu0 %v1028
        %1654 = vmatpush2.msra.mxu0 %v1027
        %1655 = vmatprep.subr.mxu0 %v1024
        %1656 = vmatpush2.msra.mxu0 %v1023
        %1657 = vmatprep.subr.mxu0 %v1020
        %1658 = vmatpush2.msra.mxu0 %v1019
        %1659 = vmatprep.subr.mxu0 %v1016
        %1660 = vmatpush2.msra.mxu0 %v1015
        %1661 = vmatprep.subr.mxu0 %v1012
        %1662 = vmatpush2.msra.mxu0 %v1011
        %1663 = vmatprep.subr.mxu0 %v1008
        %1664 = vmatpush2.msra.mxu0 %v1007
        %1665 = vmatprep.subr.mxu0 %v1004
        %1666 = vmatpush2.msra.mxu0 %v1003
        %1667 = vmatprep.subr.mxu0 %v1000
        %1668 = vmatpush2.msra.mxu0 %v999
        %1669 = vmatprep.subr.mxu0 %v996
        %1670 = vmatpush2.msra.mxu0 %v995
        %1671 = vmatprep.mubr.f32.mxu0 %v1108
        %1672 = vmatmul.mubr.f32.gmra.mxu0 %v1074
        %v1673 = vpop.f32.mrf.mxu0
        %v1674 = vadd.f32 %v1603, %v1673
        %v1675 = vpop.f32.mrf.mxu0
        %v1676 = vadd.f32 %v1605, %v1675
        %1677 = vdwg.mxu0
        %v1678 = vmax.f32 %v1390, 0.0
        %v1679 = vmax.f32 %v1392, 0.0
        %v1680 = vmax.f32 %v1674, 0.0
        %v1681 = vmax.f32 %v1676, 0.0
        %s1682 = scalar_lea.vmem %s9, 1
        %v1683 = vld [vmem:[%s1682] ss:$4 sm:$0xf]
        %v1685 = vlaneseq
        %v1686 = vshrl.u32 %v1685, 7
        %v1687 = vsub.s32 0, %v1686
        %v1688 = vrot.slane %v1683, %v1687
        %v1689 = vlaneseq
        %v1690 = vshrl.u32 %v1689, 7
        %v1691 = vsub.s32 1, %v1690
        %v1692 = vrot.slane %v1683, %v1691
        %v1693 = vlaneseq
        %v1694 = vshrl.u32 %v1693, 7
        %v1695 = vsub.s32 2, %v1694
        %v1696 = vrot.slane %v1683, %v1695
        %v1697 = vlaneseq
        %v1698 = vshrl.u32 %v1697, 7
        %v1699 = vsub.s32 3, %v1698
        %v1700 = vrot.slane %v1683, %v1699
        %v1705 = vmul.f32 %v1678, %v1688
        %v1706 = vmul.f32 %v1679, %v1692
        %v1707 = vmul.f32 %v1680, %v1696
        %v1708 = vmul.f32 %v1681, %v1700
        %s1709 = scalar_lea.vmem %s9, 2
        %v1710 = vld [vmem:[%s1709] ss:$4 sm:$0xf]
        %v1712 = vlaneseq
        %v1713 = vshrl.u32 %v1712, 7
        %v1714 = vsub.s32 0, %v1713
        %v1715 = vrot.slane %v1710, %v1714
        %v1716 = vlaneseq
        %v1717 = vshrl.u32 %v1716, 7
        %v1718 = vsub.s32 1, %v1717
        %v1719 = vrot.slane %v1710, %v1718
        %v1720 = vlaneseq
        %v1721 = vshrl.u32 %v1720, 7
        %v1722 = vsub.s32 2, %v1721
        %v1723 = vrot.slane %v1710, %v1722
        %v1724 = vlaneseq
        %v1725 = vshrl.u32 %v1724, 7
        %v1726 = vsub.s32 3, %v1725
        %v1727 = vrot.slane %v1710, %v1726
        %v1732 = vadd.f32 %v1705, %v1715
        %v1733 = vadd.f32 %v1706, %v1719
        %v1734 = vadd.f32 %v1707, %v1723
        %v1735 = vadd.f32 %v1708, %v1727
        %v1736 = vmax.f32 %v1732, %v1734
        %v1737 = vmax.f32 %v1733, %v1735
        %v1738 = vld [vmem:[%s2] sm:$0xff]
        %v1739 = vld [vmem:[%s2 + $0x8] sm:$0xff]
        %v1740 = vld [vmem:[%s2 + $0x10] sm:$0xff]
        %v1741 = vld [vmem:[%s2 + $0x18] sm:$0xff]
        %v1742 = vld [vmem:[%s2 + $0x20] sm:$0xff]
        %v1743 = vld [vmem:[%s2 + $0x28] sm:$0xff]
        %v1744 = vld [vmem:[%s2 + $0x30] sm:$0xff]
        %v1745 = vld [vmem:[%s2 + $0x38] sm:$0xff]
        %v1746 = vld [vmem:[%s2 + $0x40] sm:$0xff]
        %v1747 = vld [vmem:[%s2 + $0x48] sm:$0xff]
        %v1748 = vld [vmem:[%s2 + $0x50] sm:$0xff]
        %v1749 = vld [vmem:[%s2 + $0x58] sm:$0xff]
        %v1750 = vld [vmem:[%s2 + $0x60] sm:$0xff]
        %v1751 = vld [vmem:[%s2 + $0x68] sm:$0xff]
        %v1752 = vld [vmem:[%s2 + $0x70] sm:$0xff]
        %v1753 = vld [vmem:[%s2 + $0x78] sm:$0xff]
        %v1754 = vld [vmem:[%s2 + $0x80] sm:$0xff]
        %v1755 = vld [vmem:[%s2 + $0x88] sm:$0xff]
        %v1756 = vld [vmem:[%s2 + $0x90] sm:$0xff]
        %v1757 = vld [vmem:[%s2 + $0x98] sm:$0xff]
        %v1758 = vld [vmem:[%s2 + $0xa0] sm:$0xff]
        %v1759 = vld [vmem:[%s2 + $0xa8] sm:$0xff]
        %v1760 = vld [vmem:[%s2 + $0xb0] sm:$0xff]
        %v1761 = vld [vmem:[%s2 + $0xb8] sm:$0xff]
        %v1762 = vld [vmem:[%s2 + $0xc0] sm:$0xff]
        %v1763 = vld [vmem:[%s2 + $0xc8] sm:$0xff]
        %v1764 = vld [vmem:[%s2 + $0xd0] sm:$0xff]
        %v1765 = vld [vmem:[%s2 + $0xd8] sm:$0xff]
        %v1766 = vld [vmem:[%s2 + $0xe0] sm:$0xff]
        %v1767 = vld [vmem:[%s2 + $0xe8] sm:$0xff]
        %v1768 = vld [vmem:[%s2 + $0xf0] sm:$0xff]
        %v1769 = vld [vmem:[%s2 + $0xf8] sm:$0xff]
        %v1770 = vld [vmem:[%s2 + $0x100] sm:$0xff]
        %v1771 = vld [vmem:[%s2 + $0x108] sm:$0xff]
        %v1772 = vld [vmem:[%s2 + $0x110] sm:$0xff]
        %v1773 = vld [vmem:[%s2 + $0x118] sm:$0xff]
        %v1774 = vld [vmem:[%s2 + $0x120] sm:$0xff]
        %v1775 = vld [vmem:[%s2 + $0x128] sm:$0xff]
        %v1776 = vld [vmem:[%s2 + $0x130] sm:$0xff]
        %v1777 = vld [vmem:[%s2 + $0x138] sm:$0xff]
        %v1778 = vld [vmem:[%s2 + $0x140] sm:$0xff]
        %v1779 = vld [vmem:[%s2 + $0x148] sm:$0xff]
        %v1780 = vld [vmem:[%s2 + $0x150] sm:$0xff]
        %v1781 = vld [vmem:[%s2 + $0x158] sm:$0xff]
        %v1782 = vld [vmem:[%s2 + $0x160] sm:$0xff]
        %v1783 = vld [vmem:[%s2 + $0x168] sm:$0xff]
        %v1784 = vld [vmem:[%s2 + $0x170] sm:$0xff]
        %v1785 = vld [vmem:[%s2 + $0x178] sm:$0xff]
        %v1786 = vld [vmem:[%s2 + $0x180] sm:$0xff]
        %v1787 = vld [vmem:[%s2 + $0x188] sm:$0xff]
        %v1788 = vld [vmem:[%s2 + $0x190] sm:$0xff]
        %v1789 = vld [vmem:[%s2 + $0x198] sm:$0xff]
        %v1790 = vld [vmem:[%s2 + $0x1a0] sm:$0xff]
        %v1791 = vld [vmem:[%s2 + $0x1a8] sm:$0xff]
        %v1792 = vld [vmem:[%s2 + $0x1b0] sm:$0xff]
        %v1793 = vld [vmem:[%s2 + $0x1b8] sm:$0xff]
        %v1794 = vld [vmem:[%s2 + $0x1c0] sm:$0xff]
        %v1795 = vld [vmem:[%s2 + $0x1c8] sm:$0xff]
        %v1796 = vld [vmem:[%s2 + $0x1d0] sm:$0xff]
        %v1797 = vld [vmem:[%s2 + $0x1d8] sm:$0xff]
        %v1798 = vld [vmem:[%s2 + $0x1e0] sm:$0xff]
        %v1799 = vld [vmem:[%s2 + $0x1e8] sm:$0xff]
        %v1800 = vld [vmem:[%s2 + $0x1f0] sm:$0x3]
        %v1801 = vld [vmem:[%s2 + $0x1f8] sm:$0x3]
        %v1802 = vld [vmem:[%s10] ss:$4 sm:$0x3]
        %v1804 = vlaneseq
        %v1805 = vshrl.u32 %v1804, 7
        %v1806 = vsub.s32 0, %v1805
        %v1807 = vrot.slane %v1802, %v1806
        %v1808 = vlaneseq
        %v1809 = vshrl.u32 %v1808, 7
        %v1810 = vsub.s32 1, %v1809
        %v1811 = vrot.slane %v1802, %v1810
        %vm1814 = vcmask 998400
        %v1816 = vsel %vm1814, %v1737, 0
        %vm1818 = vcmask 1041408
        %v1820 = vsel %vm1818, %v1800, 0
        %v1823 = vsel %vm1818, %v1801, 0
        %1825 = vmatprep.subr.mxu0 %v1769
        %1826 = vmatpush1.msra.mxu0 %v1768
        %1827 = vmatprep.subr.mxu0 %v1767
        %1828 = vmatpush1.msra.mxu0 %v1766
        %1829 = vmatprep.subr.mxu0 %v1765
        %1830 = vmatpush1.msra.mxu0 %v1764
        %1831 = vmatprep.subr.mxu0 %v1763
        %1832 = vmatpush1.msra.mxu0 %v1762
        %1833 = vmatprep.subr.mxu0 %v1761
        %1834 = vmatpush1.msra.mxu0 %v1760
        %1835 = vmatprep.subr.mxu0 %v1759
        %1836 = vmatpush1.msra.mxu0 %v1758
        %1837 = vmatprep.subr.mxu0 %v1757
        %1838 = vmatpush1.msra.mxu0 %v1756
        %1839 = vmatprep.subr.mxu0 %v1755
        %1840 = vmatpush1.msra.mxu0 %v1754
        %1841 = vmatprep.subr.mxu0 %v1753
        %1842 = vmatpush1.msra.mxu0 %v1752
        %1843 = vmatprep.subr.mxu0 %v1751
        %1844 = vmatpush1.msra.mxu0 %v1750
        %1845 = vmatprep.subr.mxu0 %v1749
        %1846 = vmatpush1.msra.mxu0 %v1748
        %1847 = vmatprep.subr.mxu0 %v1747
        %1848 = vmatpush1.msra.mxu0 %v1746
        %1849 = vmatprep.subr.mxu0 %v1745
        %1850 = vmatpush1.msra.mxu0 %v1744
        %1851 = vmatprep.subr.mxu0 %v1743
        %1852 = vmatpush1.msra.mxu0 %v1742
        %1853 = vmatprep.subr.mxu0 %v1741
        %1854 = vmatpush1.msra.mxu0 %v1740
        %1855 = vmatprep.subr.mxu0 %v1739
        %1856 = vmatpush1.msra.mxu0 %v1738
        %1857 = vmatprep.subr.mxu0 %v1823
        %1858 = vmatpush2.msra.mxu0 %v1820
        %1859 = vmatprep.subr.mxu0 %v1799
        %1860 = vmatpush2.msra.mxu0 %v1798
        %1861 = vmatprep.subr.mxu0 %v1797
        %1862 = vmatpush2.msra.mxu0 %v1796
        %1863 = vmatprep.subr.mxu0 %v1795
        %1864 = vmatpush2.msra.mxu0 %v1794
        %1865 = vmatprep.subr.mxu0 %v1793
        %1866 = vmatpush2.msra.mxu0 %v1792
        %1867 = vmatprep.subr.mxu0 %v1791
        %1868 = vmatpush2.msra.mxu0 %v1790
        %1869 = vmatprep.subr.mxu0 %v1789
        %1870 = vmatpush2.msra.mxu0 %v1788
        %1871 = vmatprep.subr.mxu0 %v1787
        %1872 = vmatpush2.msra.mxu0 %v1786
        %1873 = vmatprep.subr.mxu0 %v1785
        %1874 = vmatpush2.msra.mxu0 %v1784
        %1875 = vmatprep.subr.mxu0 %v1783
        %1876 = vmatpush2.msra.mxu0 %v1782
        %1877 = vmatprep.subr.mxu0 %v1781
        %1878 = vmatpush2.msra.mxu0 %v1780
        %1879 = vmatprep.subr.mxu0 %v1779
        %1880 = vmatpush2.msra.mxu0 %v1778
        %1881 = vmatprep.subr.mxu0 %v1777
        %1882 = vmatpush2.msra.mxu0 %v1776
        %1883 = vmatprep.subr.mxu0 %v1775
        %1884 = vmatpush2.msra.mxu0 %v1774
        %1885 = vmatprep.subr.mxu0 %v1773
        %1886 = vmatpush2.msra.mxu0 %v1772
        %1887 = vmatprep.subr.mxu0 %v1771
        %1888 = vmatpush2.msra.mxu0 %v1770
        %1889 = vmatprep.mubr.f32.mxu0 %v1816
        %1890 = vmatmul.mubr.f32.gmra.mxu0 %v1736
        %v1891 = vpop.f32.mrf.mxu0
        %v1892 = vadd.f32 %v1807, %v1891
        %v1893 = vpop.f32.mrf.mxu0
        %v1894 = vadd.f32 %v1811, %v1893
        %1895 = vdwg.mxu0
        %v1896 = vmax.f32 %v1892, 0.0
        %v1897 = vmax.f32 %v1894, 0.0
        %s1898 = scalar_lea.vmem %s10, 1
        %v1899 = vld [vmem:[%s1898] ss:$4 sm:$0x3]
        %v1901 = vlaneseq
        %v1902 = vshrl.u32 %v1901, 7
        %v1903 = vsub.s32 0, %v1902
        %v1904 = vrot.slane %v1899, %v1903
        %v1905 = vlaneseq
        %v1906 = vshrl.u32 %v1905, 7
        %v1907 = vsub.s32 1, %v1906
        %v1908 = vrot.slane %v1899, %v1907
        %v1911 = vmul.f32 %v1896, %v1904
        %v1912 = vmul.f32 %v1897, %v1908
        %s1913 = scalar_lea.vmem %s10, 2
        %v1914 = vld [vmem:[%s1913] ss:$4 sm:$0x3]
        %v1916 = vlaneseq
        %v1917 = vshrl.u32 %v1916, 7
        %v1918 = vsub.s32 0, %v1917
        %v1919 = vrot.slane %v1914, %v1918
        %v1920 = vlaneseq
        %v1921 = vshrl.u32 %v1920, 7
        %v1922 = vsub.s32 1, %v1921
        %v1923 = vrot.slane %v1914, %v1922
        %v1926 = vadd.f32 %v1911, %v1919
        %v1927 = vadd.f32 %v1912, %v1923
        %v1928 = vmax.f32 %v1926, %v1927
        %v1929 = vld [vmem:[%s3] sm:$0xff]
        %v1930 = vld [vmem:[%s3 + $0x8] sm:$0xff]
        %v1931 = vld [vmem:[%s3 + $0x10] sm:$0xff]
        %v1932 = vld [vmem:[%s3 + $0x18] sm:$0xff]
        %v1933 = vld [vmem:[%s3 + $0x20] sm:$0xff]
        %v1934 = vld [vmem:[%s3 + $0x28] sm:$0xff]
        %v1935 = vld [vmem:[%s3 + $0x30] sm:$0xff]
        %v1936 = vld [vmem:[%s3 + $0x38] sm:$0xff]
        %v1937 = vld [vmem:[%s3 + $0x40] sm:$0xff]
        %v1938 = vld [vmem:[%s3 + $0x48] sm:$0xff]
        %v1939 = vld [vmem:[%s3 + $0x50] sm:$0xff]
        %v1940 = vld [vmem:[%s3 + $0x58] sm:$0xff]
        %v1941 = vld [vmem:[%s3 + $0x60] sm:$0xff]
        %v1942 = vld [vmem:[%s3 + $0x68] sm:$0xff]
        %v1943 = vld [vmem:[%s3 + $0x70] sm:$0xff]
        %v1944 = vld [vmem:[%s3 + $0x78] sm:$0xff]
        %v1945 = vld [vmem:[%s3 + $0x80] sm:$0xff]
        %v1946 = vld [vmem:[%s3 + $0x88] sm:$0xff]
        %v1947 = vld [vmem:[%s3 + $0x90] sm:$0xff]
        %v1948 = vld [vmem:[%s3 + $0x98] sm:$0xff]
        %v1949 = vld [vmem:[%s3 + $0xa0] sm:$0xff]
        %v1950 = vld [vmem:[%s3 + $0xa8] sm:$0xff]
        %v1951 = vld [vmem:[%s3 + $0xb0] sm:$0xff]
        %v1952 = vld [vmem:[%s3 + $0xb8] sm:$0xff]
        %v1953 = vld [vmem:[%s3 + $0xc0] sm:$0xff]
        %v1954 = vld [vmem:[%s3 + $0xc8] sm:$0xff]
        %v1955 = vld [vmem:[%s3 + $0xd0] sm:$0xff]
        %v1956 = vld [vmem:[%s3 + $0xd8] sm:$0xff]
        %v1957 = vld [vmem:[%s3 + $0xe0] sm:$0xff]
        %v1958 = vld [vmem:[%s3 + $0xe8] sm:$0xff]
        %v1959 = vld [vmem:[%s11] ss:$4 sm:$0x3]
        %v1961 = vlaneseq
        %v1962 = vshrl.u32 %v1961, 7
        %v1963 = vsub.s32 0, %v1962
        %v1964 = vrot.slane %v1959, %v1963
        %v1965 = vlaneseq
        %v1966 = vshrl.u32 %v1965, 7
        %v1967 = vsub.s32 1, %v1966
        %v1968 = vrot.slane %v1959, %v1967
        %vm1971 = vcmask 982016
        %v1973 = vsel %vm1971, %v1928, 0
        %1975 = vmatprep.subr.mxu0 0.0
        %1976 = vmatpush1.msra.mxu0 0.0
        %1977 = vmatprep.subr.mxu0 %v1958
        %1978 = vmatpush1.msra.mxu0 %v1957
        %1979 = vmatprep.subr.mxu0 %v1956
        %1980 = vmatpush1.msra.mxu0 %v1955
        %1981 = vmatprep.subr.mxu0 %v1954
        %1982 = vmatpush1.msra.mxu0 %v1953
        %1983 = vmatprep.subr.mxu0 %v1952
        %1984 = vmatpush1.msra.mxu0 %v1951
        %1985 = vmatprep.subr.mxu0 %v1950
        %1986 = vmatpush1.msra.mxu0 %v1949
        %1987 = vmatprep.subr.mxu0 %v1948
        %1988 = vmatpush1.msra.mxu0 %v1947
        %1989 = vmatprep.subr.mxu0 %v1946
        %1990 = vmatpush1.msra.mxu0 %v1945
        %1991 = vmatprep.subr.mxu0 %v1944
        %1992 = vmatpush1.msra.mxu0 %v1943
        %1993 = vmatprep.subr.mxu0 %v1942
        %1994 = vmatpush1.msra.mxu0 %v1941
        %1995 = vmatprep.subr.mxu0 %v1940
        %1996 = vmatpush1.msra.mxu0 %v1939
        %1997 = vmatprep.subr.mxu0 %v1938
        %1998 = vmatpush1.msra.mxu0 %v1937
        %1999 = vmatprep.subr.mxu0 %v1936
        %2000 = vmatpush1.msra.mxu0 %v1935
        %2001 = vmatprep.subr.mxu0 %v1934
        %2002 = vmatpush1.msra.mxu0 %v1933
        %2003 = vmatprep.subr.mxu0 %v1932
        %2004 = vmatpush1.msra.mxu0 %v1931
        %2005 = vmatprep.subr.mxu0 %v1930
        %2006 = vmatpush1.msra.mxu0 %v1929
        %2007 = vmatprep.subr.mxu0 0.0
        %2008 = vmatpush2.msra.mxu0 0.0
        %2009 = vmatprep.subr.mxu0 0.0
        %2010 = vmatpush2.msra.mxu0 0.0
        %2011 = vmatprep.subr.mxu0 0.0
        %2012 = vmatpush2.msra.mxu0 0.0
        %2013 = vmatprep.subr.mxu0 0.0
        %2014 = vmatpush2.msra.mxu0 0.0
        %2015 = vmatprep.subr.mxu0 0.0
        %2016 = vmatpush2.msra.mxu0 0.0
        %2017 = vmatprep.subr.mxu0 0.0
        %2018 = vmatpush2.msra.mxu0 0.0
        %2019 = vmatprep.subr.mxu0 0.0
        %2020 = vmatpush2.msra.mxu0 0.0
        %2021 = vmatprep.subr.mxu0 0.0
        %2022 = vmatpush2.msra.mxu0 0.0
        %2023 = vmatprep.subr.mxu0 0.0
        %2024 = vmatpush2.msra.mxu0 0.0
        %2025 = vmatprep.subr.mxu0 0.0
        %2026 = vmatpush2.msra.mxu0 0.0
        %2027 = vmatprep.subr.mxu0 0.0
        %2028 = vmatpush2.msra.mxu0 0.0
        %2029 = vmatprep.subr.mxu0 0.0
        %2030 = vmatpush2.msra.mxu0 0.0
        %2031 = vmatprep.subr.mxu0 0.0
        %2032 = vmatpush2.msra.mxu0 0.0
        %2033 = vmatprep.subr.mxu0 0.0
        %2034 = vmatpush2.msra.mxu0 0.0
        %2035 = vmatprep.subr.mxu0 0.0
        %2036 = vmatpush2.msra.mxu0 0.0
        %2037 = vmatprep.subr.mxu0 0.0
        %2038 = vmatpush2.msra.mxu0 0.0
        %2039 = vmatprep.mubr.f32.mxu0 0.0
        %2040 = vmatmul.mubr.f32.gmra.mxu0 %v1973
        %v2041 = vpop.f32.mrf.mxu0
        %v2042 = vadd.f32 %v1964, %v2041
        %v2043 = vpop.f32.mrf.mxu0
        %v2044 = vadd.f32 %v1968, %v2043
        %2045 = vdwg.mxu0
        %s2046 = scalar_lea.vmem %s11, 1
        %v2047 = vld [vmem:[%s2046] ss:$4 sm:$0x3]
        %v2049 = vlaneseq
        %v2050 = vshrl.u32 %v2049, 7
        %v2051 = vsub.s32 0, %v2050
        %v2052 = vrot.slane %v2047, %v2051
        %v2053 = vlaneseq
        %v2054 = vshrl.u32 %v2053, 7
        %v2055 = vsub.s32 1, %v2054
        %v2056 = vrot.slane %v2047, %v2055
        %v2059 = vmul.f32 %v2042, %v2052
        %v2060 = vmul.f32 %v2044, %v2056
        %s2061 = scalar_lea.vmem %s11, 2
        %v2062 = vld [vmem:[%s2061] ss:$4 sm:$0x3]
        %v2064 = vlaneseq
        %v2065 = vshrl.u32 %v2064, 7
        %v2066 = vsub.s32 0, %v2065
        %v2067 = vrot.slane %v2062, %v2066
        %v2068 = vlaneseq
        %v2069 = vshrl.u32 %v2068, 7
        %v2070 = vsub.s32 1, %v2069
        %v2071 = vrot.slane %v2062, %v2070
        %v2074 = vadd.f32 %v2059, %v2067
        %v2075 = vadd.f32 %v2060, %v2071
        %v2076 = vld [vmem:[%s4] sm:$0xff]
        %v2077 = vld [vmem:[%s4 + $0x8] sm:$0xff]
        %v2078 = vld [vmem:[%s4 + $0x10] sm:$0xff]
        %v2079 = vld [vmem:[%s4 + $0x18] sm:$0xff]
        %v2080 = vld [vmem:[%s4 + $0x20] sm:$0xff]
        %v2081 = vld [vmem:[%s4 + $0x28] sm:$0xff]
        %v2082 = vld [vmem:[%s4 + $0x30] sm:$0xff]
        %v2083 = vld [vmem:[%s4 + $0x38] sm:$0xff]
        %v2084 = vld [vmem:[%s4 + $0x40] sm:$0xff]
        %v2085 = vld [vmem:[%s4 + $0x48] sm:$0xff]
        %v2086 = vld [vmem:[%s4 + $0x50] sm:$0xff]
        %v2087 = vld [vmem:[%s4 + $0x58] sm:$0xff]
        %v2088 = vld [vmem:[%s4 + $0x60] sm:$0xff]
        %v2089 = vld [vmem:[%s4 + $0x68] sm:$0xff]
        %v2090 = vld [vmem:[%s4 + $0x70] sm:$0xff]
        %v2091 = vld [vmem:[%s4 + $0x78] sm:$0xff]
        %v2092 = vld [vmem:[%s4 + $0x80] sm:$0xff]
        %v2093 = vld [vmem:[%s4 + $0x88] sm:$0xff]
        %v2094 = vld [vmem:[%s4 + $0x90] sm:$0xff]
        %v2095 = vld [vmem:[%s4 + $0x98] sm:$0xff]
        %v2096 = vld [vmem:[%s4 + $0xa0] sm:$0xff]
        %v2097 = vld [vmem:[%s4 + $0xa8] sm:$0xff]
        %v2098 = vld [vmem:[%s4 + $0xb0] sm:$0xff]
        %v2099 = vld [vmem:[%s4 + $0xb8] sm:$0xff]
        %v2100 = vld [vmem:[%s4 + $0xc0] sm:$0xff]
        %v2101 = vld [vmem:[%s4 + $0xc8] sm:$0xff]
        %v2102 = vld [vmem:[%s4 + $0xd0] sm:$0xff]
        %v2103 = vld [vmem:[%s4 + $0xd8] sm:$0xff]
        %v2104 = vld [vmem:[%s4 + $0xe0] sm:$0xff]
        %v2105 = vld [vmem:[%s4 + $0xe8] sm:$0xff]
        %v2106 = vld [vmem:[%s14] sm:$0x1]
        %vm2107 = vcmask 916480
        %v2109 = vsel %vm2107, %v2075, 0
        %2111 = vmatprep.subr.mxu0 0.0
        %2112 = vmatpush1.msra.mxu0 %v2091
        %2113 = vmatprep.subr.mxu0 0.0
        %2114 = vmatpush1.msra.mxu0 %v2090
        %2115 = vmatprep.subr.mxu0 0.0
        %2116 = vmatpush1.msra.mxu0 %v2089
        %2117 = vmatprep.subr.mxu0 0.0
        %2118 = vmatpush1.msra.mxu0 %v2088
        %2119 = vmatprep.subr.mxu0 0.0
        %2120 = vmatpush1.msra.mxu0 %v2087
        %2121 = vmatprep.subr.mxu0 0.0
        %2122 = vmatpush1.msra.mxu0 %v2086
        %2123 = vmatprep.subr.mxu0 0.0
        %2124 = vmatpush1.msra.mxu0 %v2085
        %2125 = vmatprep.subr.mxu0 0.0
        %2126 = vmatpush1.msra.mxu0 %v2084
        %2127 = vmatprep.subr.mxu0 0.0
        %2128 = vmatpush1.msra.mxu0 %v2083
        %2129 = vmatprep.subr.mxu0 0.0
        %2130 = vmatpush1.msra.mxu0 %v2082
        %2131 = vmatprep.subr.mxu0 0.0
        %2132 = vmatpush1.msra.mxu0 %v2081
        %2133 = vmatprep.subr.mxu0 0.0
        %2134 = vmatpush1.msra.mxu0 %v2080
        %2135 = vmatprep.subr.mxu0 0.0
        %2136 = vmatpush1.msra.mxu0 %v2079
        %2137 = vmatprep.subr.mxu0 0.0
        %2138 = vmatpush1.msra.mxu0 %v2078
        %2139 = vmatprep.subr.mxu0 0.0
        %2140 = vmatpush1.msra.mxu0 %v2077
        %2141 = vmatprep.subr.mxu0 0.0
        %2142 = vmatpush1.msra.mxu0 %v2076
        %2143 = vmatprep.subr.mxu0 0.0
        %2144 = vmatpush2.msra.mxu0 0.0
        %2145 = vmatprep.subr.mxu0 0.0
        %2146 = vmatpush2.msra.mxu0 0.0
        %2147 = vmatprep.subr.mxu0 0.0
        %2148 = vmatpush2.msra.mxu0 %v2105
        %2149 = vmatprep.subr.mxu0 0.0
        %2150 = vmatpush2.msra.mxu0 %v2104
        %2151 = vmatprep.subr.mxu0 0.0
        %2152 = vmatpush2.msra.mxu0 %v2103
        %2153 = vmatprep.subr.mxu0 0.0
        %2154 = vmatpush2.msra.mxu0 %v2102
        %2155 = vmatprep.subr.mxu0 0.0
        %2156 = vmatpush2.msra.mxu0 %v2101
        %2157 = vmatprep.subr.mxu0 0.0
        %2158 = vmatpush2.msra.mxu0 %v2100
        %2159 = vmatprep.subr.mxu0 0.0
        %2160 = vmatpush2.msra.mxu0 %v2099
        %2161 = vmatprep.subr.mxu0 0.0
        %2162 = vmatpush2.msra.mxu0 %v2098
        %2163 = vmatprep.subr.mxu0 0.0
        %2164 = vmatpush2.msra.mxu0 %v2097
        %2165 = vmatprep.subr.mxu0 0.0
        %2166 = vmatpush2.msra.mxu0 %v2096
        %2167 = vmatprep.subr.mxu0 0.0
        %2168 = vmatpush2.msra.mxu0 %v2095
        %2169 = vmatprep.subr.mxu0 0.0
        %2170 = vmatpush2.msra.mxu0 %v2094
        %2171 = vmatprep.subr.mxu0 0.0
        %2172 = vmatpush2.msra.mxu0 %v2093
        %2173 = vmatprep.subr.mxu0 0.0
        %2174 = vmatpush2.msra.mxu0 %v2092
        %2175 = vmatprep.mubr.f32.mxu0 %v2109
        %2176 = vmatmul.mubr.f32.gmra.mxu0 %v2074
        %v2177 = vpop.f32.mrf.mxu0
        %v2178 = vadd.f32 %v2106, %v2177
        %v2179 = vpop.f32.mrf.mxu0
        %2180 = vdwg.mxu0
        %v2181 = vld [vmem:[%s5] sm:$0xff]
        %v2182 = vld [vmem:[%s5 + $0x8] sm:$0xff]
        %v2183 = vld [vmem:[%s5 + $0x10] sm:$0xf]
        %v2184 = vld [vmem:[%s15] sm:$0x1]
        %vm2185 = vcmask 162816
        %v2187 = vsel %vm2185, %v2178, 0
        %vm2189 = vcmask 1043456
        %v2191 = vsel %vm2189, %v2183, 0
        %2193 = vmatprep.subr.mxu0 0.0
        %2194 = vmatpush1.msra.mxu0 0.0
        %2195 = vmatprep.subr.mxu0 0.0
        %2196 = vmatpush1.msra.mxu0 0.0
        %2197 = vmatprep.subr.mxu0 0.0
        %2198 = vmatpush1.msra.mxu0 0.0
        %2199 = vmatprep.subr.mxu0 0.0
        %2200 = vmatpush1.msra.mxu0 0.0
        %2201 = vmatprep.subr.mxu0 0.0
        %2202 = vmatpush1.msra.mxu0 0.0
        %2203 = vmatprep.subr.mxu0 0.0
        %2204 = vmatpush1.msra.mxu0 0.0
        %2205 = vmatprep.subr.mxu0 0.0
        %2206 = vmatpush1.msra.mxu0 0.0
        %2207 = vmatprep.subr.mxu0 0.0
        %2208 = vmatpush1.msra.mxu0 0.0
        %2209 = vmatprep.subr.mxu0 0.0
        %2210 = vmatpush1.msra.mxu0 0.0
        %2211 = vmatprep.subr.mxu0 0.0
        %2212 = vmatpush1.msra.mxu0 0.0
        %2213 = vmatprep.subr.mxu0 0.0
        %2214 = vmatpush1.msra.mxu0 0.0
        %2215 = vmatprep.subr.mxu0 0.0
        %2216 = vmatpush1.msra.mxu0 0.0
        %2217 = vmatprep.subr.mxu0 0.0
        %2218 = vmatpush1.msra.mxu0 0.0
        %2219 = vmatprep.subr.mxu0 0.0
        %2220 = vmatpush1.msra.mxu0 %v2191
        %2221 = vmatprep.subr.mxu0 0.0
        %2222 = vmatpush1.msra.mxu0 %v2182
        %2223 = vmatprep.subr.mxu0 0.0
        %2224 = vmatpush1.msra.mxu0 %v2181
        %2225 = vmatprep.subr.mxu0 0.0
        %2226 = vmatpush2.msra.mxu0 0.0
        %2227 = vmatprep.subr.mxu0 0.0
        %2228 = vmatpush2.msra.mxu0 0.0
        %2229 = vmatprep.subr.mxu0 0.0
        %2230 = vmatpush2.msra.mxu0 0.0
        %2231 = vmatprep.subr.mxu0 0.0
        %2232 = vmatpush2.msra.mxu0 0.0
        %2233 = vmatprep.subr.mxu0 0.0
        %2234 = vmatpush2.msra.mxu0 0.0
        %2235 = vmatprep.subr.mxu0 0.0
        %2236 = vmatpush2.msra.mxu0 0.0
        %2237 = vmatprep.subr.mxu0 0.0
        %2238 = vmatpush2.msra.mxu0 0.0
        %2239 = vmatprep.subr.mxu0 0.0
        %2240 = vmatpush2.msra.mxu0 0.0
        %2241 = vmatprep.subr.mxu0 0.0
        %2242 = vmatpush2.msra.mxu0 0.0
        %2243 = vmatprep.subr.mxu0 0.0
        %2244 = vmatpush2.msra.mxu0 0.0
        %2245 = vmatprep.subr.mxu0 0.0
        %2246 = vmatpush2.msra.mxu0 0.0
        %2247 = vmatprep.subr.mxu0 0.0
        %2248 = vmatpush2.msra.mxu0 0.0
        %2249 = vmatprep.subr.mxu0 0.0
        %2250 = vmatpush2.msra.mxu0 0.0
        %2251 = vmatprep.subr.mxu0 0.0
        %2252 = vmatpush2.msra.mxu0 0.0
        %2253 = vmatprep.subr.mxu0 0.0
        %2254 = vmatpush2.msra.mxu0 0.0
        %2255 = vmatprep.subr.mxu0 0.0
        %2256 = vmatpush2.msra.mxu0 0.0
        %2257 = vmatprep.mubr.f32.mxu0 0.0
        %2258 = vmatmul.mubr.f32.gmra.mxu0 %v2187
        %v2259 = vpop.f32.mrf.mxu0
        %v2260 = vadd.f32 %v2184, %v2259
        %v2261 = vpop.f32.mrf.mxu0
        %2262 = vdwg.mxu0
        %v2263 = vmax.f32 %v2260, 0.0
        %v2264 = vld [vmem:[%s6] sm:$0xff]
        %v2265 = vld [vmem:[%s6 + $0x8] sm:$0xff]
        %v2266 = vld [vmem:[%s6 + $0x10] sm:$0xff]
        %v2267 = vld [vmem:[%s6 + $0x18] sm:$0xff]
        %v2268 = vld [vmem:[%s6 + $0x20] sm:$0xff]
        %v2269 = vld [vmem:[%s6 + $0x28] sm:$0xff]
        %v2270 = vld [vmem:[%s6 + $0x30] sm:$0xff]
        %v2271 = vld [vmem:[%s6 + $0x38] sm:$0xff]
        %v2272 = vld [vmem:[%s6 + $0x40] sm:$0xff]
        %v2273 = vld [vmem:[%s6 + $0x48] sm:$0xff]
        %v2274 = vld [vmem:[%s6 + $0x50] sm:$0xff]
        %v2275 = vld [vmem:[%s6 + $0x58] sm:$0xff]
        %v2276 = vld [vmem:[%s6 + $0x60] sm:$0xff]
        %v2277 = vld [vmem:[%s6 + $0x68] sm:$0xff]
        %v2278 = vld [vmem:[%s6 + $0x70] sm:$0xff]
        %v2279 = vld [vmem:[%s12] sm:$0x1]
        %v2281 = vsel %vm1971, %v2263, 0
        %2283 = vmatprep.subr.mxu0 0.0
        %2284 = vmatpush1.msra.mxu0 0.0
        %2285 = vmatprep.subr.mxu0 0.0
        %2286 = vmatpush1.msra.mxu0 %v2278
        %2287 = vmatprep.subr.mxu0 0.0
        %2288 = vmatpush1.msra.mxu0 %v2277
        %2289 = vmatprep.subr.mxu0 0.0
        %2290 = vmatpush1.msra.mxu0 %v2276
        %2291 = vmatprep.subr.mxu0 0.0
        %2292 = vmatpush1.msra.mxu0 %v2275
        %2293 = vmatprep.subr.mxu0 0.0
        %2294 = vmatpush1.msra.mxu0 %v2274
        %2295 = vmatprep.subr.mxu0 0.0
        %2296 = vmatpush1.msra.mxu0 %v2273
        %2297 = vmatprep.subr.mxu0 0.0
        %2298 = vmatpush1.msra.mxu0 %v2272
        %2299 = vmatprep.subr.mxu0 0.0
        %2300 = vmatpush1.msra.mxu0 %v2271
        %2301 = vmatprep.subr.mxu0 0.0
        %2302 = vmatpush1.msra.mxu0 %v2270
        %2303 = vmatprep.subr.mxu0 0.0
        %2304 = vmatpush1.msra.mxu0 %v2269
        %2305 = vmatprep.subr.mxu0 0.0
        %2306 = vmatpush1.msra.mxu0 %v2268
        %2307 = vmatprep.subr.mxu0 0.0
        %2308 = vmatpush1.msra.mxu0 %v2267
        %2309 = vmatprep.subr.mxu0 0.0
        %2310 = vmatpush1.msra.mxu0 %v2266
        %2311 = vmatprep.subr.mxu0 0.0
        %2312 = vmatpush1.msra.mxu0 %v2265
        %2313 = vmatprep.subr.mxu0 0.0
        %2314 = vmatpush1.msra.mxu0 %v2264
        %2315 = vmatprep.subr.mxu0 0.0
        %2316 = vmatpush2.msra.mxu0 0.0
        %2317 = vmatprep.subr.mxu0 0.0
        %2318 = vmatpush2.msra.mxu0 0.0
        %2319 = vmatprep.subr.mxu0 0.0
        %2320 = vmatpush2.msra.mxu0 0.0
        %2321 = vmatprep.subr.mxu0 0.0
        %2322 = vmatpush2.msra.mxu0 0.0
        %2323 = vmatprep.subr.mxu0 0.0
        %2324 = vmatpush2.msra.mxu0 0.0
        %2325 = vmatprep.subr.mxu0 0.0
        %2326 = vmatpush2.msra.mxu0 0.0
        %2327 = vmatprep.subr.mxu0 0.0
        %2328 = vmatpush2.msra.mxu0 0.0
        %2329 = vmatprep.subr.mxu0 0.0
        %2330 = vmatpush2.msra.mxu0 0.0
        %2331 = vmatprep.subr.mxu0 0.0
        %2332 = vmatpush2.msra.mxu0 0.0
        %2333 = vmatprep.subr.mxu0 0.0
        %2334 = vmatpush2.msra.mxu0 0.0
        %2335 = vmatprep.subr.mxu0 0.0
        %2336 = vmatpush2.msra.mxu0 0.0
        %2337 = vmatprep.subr.mxu0 0.0
        %2338 = vmatpush2.msra.mxu0 0.0
        %2339 = vmatprep.subr.mxu0 0.0
        %2340 = vmatpush2.msra.mxu0 0.0
        %2341 = vmatprep.subr.mxu0 0.0
        %2342 = vmatpush2.msra.mxu0 0.0
        %2343 = vmatprep.subr.mxu0 0.0
        %2344 = vmatpush2.msra.mxu0 0.0
        %2345 = vmatprep.subr.mxu0 0.0
        %2346 = vmatpush2.msra.mxu0 0.0
        %2347 = vmatprep.mubr.f32.mxu0 0.0
        %2348 = vmatmul.mubr.f32.gmra.mxu0 %v2281
        %v2349 = vpop.f32.mrf.mxu0
        %v2350 = vadd.f32 %v2279, %v2349
        %v2351 = vpop.f32.mrf.mxu0
        %2352 = vdwg.mxu0
        %v2353 = vmax.f32 %v2350, 0.0
        %v2354 = vld [vmem:[%s12 + $0x1] sm:$0x1]
        %v2355 = vmul.f32 %v2353, %v2354
        %v2356 = vld [vmem:[%s12 + $0x2] sm:$0x1]
        %v2357 = vadd.f32 %v2355, %v2356
        %v2358 = vld [vmem:[%s7] sm:$0xff]
        %v2359 = vld [vmem:[%s7 + $0x8] sm:$0xff]
        %v2360 = vld [vmem:[%s7 + $0x10] sm:$0xff]
        %v2361 = vld [vmem:[%s7 + $0x18] sm:$0xff]
        %v2362 = vld [vmem:[%s7 + $0x20] sm:$0xff]
        %v2363 = vld [vmem:[%s7 + $0x28] sm:$0xff]
        %v2364 = vld [vmem:[%s7 + $0x30] sm:$0xff]
        %v2365 = vld [vmem:[%s7 + $0x38] sm:$0xff]
        %v2366 = vld [vmem:[%s7 + $0x40] sm:$0xff]
        %v2367 = vld [vmem:[%s7 + $0x48] sm:$0xff]
        %v2368 = vld [vmem:[%s7 + $0x50] sm:$0xff]
        %v2369 = vld [vmem:[%s7 + $0x58] sm:$0xff]
        %v2370 = vld [vmem:[%s7 + $0x60] sm:$0xff]
        %v2371 = vld [vmem:[%s7 + $0x68] sm:$0xff]
        %v2372 = vld [vmem:[%s7 + $0x70] sm:$0xff]
        %v2373 = vld [vmem:[%s7 + $0x78] sm:$0xff]
        %v2374 = vld [vmem:[%s7 + $0x80] sm:$0xff]
        %v2375 = vld [vmem:[%s7 + $0x88] sm:$0xff]
        %v2376 = vld [vmem:[%s7 + $0x90] sm:$0xff]
        %v2377 = vld [vmem:[%s7 + $0x98] sm:$0xff]
        %v2378 = vld [vmem:[%s7 + $0xa0] sm:$0xff]
        %v2379 = vld [vmem:[%s7 + $0xa8] sm:$0xff]
        %v2380 = vld [vmem:[%s7 + $0xb0] sm:$0xff]
        %v2381 = vld [vmem:[%s7 + $0xb8] sm:$0xff]
        %v2382 = vld [vmem:[%s7 + $0xc0] sm:$0xff]
        %v2383 = vld [vmem:[%s7 + $0xc8] sm:$0xff]
        %v2384 = vld [vmem:[%s7 + $0xd0] sm:$0xff]
        %v2385 = vld [vmem:[%s7 + $0xd8] sm:$0xff]
        %v2386 = vld [vmem:[%s7 + $0xe0] sm:$0xff]
        %v2387 = vld [vmem:[%s7 + $0xe8] sm:$0xff]
        %v2388 = vld [vmem:[%s13] ss:$4 sm:$0x3]
        %v2390 = vlaneseq
        %v2391 = vshrl.u32 %v2390, 7
        %v2392 = vsub.s32 0, %v2391
        %v2393 = vrot.slane %v2388, %v2392
        %v2394 = vlaneseq
        %v2395 = vshrl.u32 %v2394, 7
        %v2396 = vsub.s32 1, %v2395
        %v2397 = vrot.slane %v2388, %v2396
        %v2401 = vsel %vm1971, %v2357, 0
        %2403 = vmatprep.subr.mxu0 0.0
        %2404 = vmatpush1.msra.mxu0 0.0
        %2405 = vmatprep.subr.mxu0 %v2387
        %2406 = vmatpush1.msra.mxu0 %v2386
        %2407 = vmatprep.subr.mxu0 %v2385
        %2408 = vmatpush1.msra.mxu0 %v2384
        %2409 = vmatprep.subr.mxu0 %v2383
        %2410 = vmatpush1.msra.mxu0 %v2382
        %2411 = vmatprep.subr.mxu0 %v2381
        %2412 = vmatpush1.msra.mxu0 %v2380
        %2413 = vmatprep.subr.mxu0 %v2379
        %2414 = vmatpush1.msra.mxu0 %v2378
        %2415 = vmatprep.subr.mxu0 %v2377
        %2416 = vmatpush1.msra.mxu0 %v2376
        %2417 = vmatprep.subr.mxu0 %v2375
        %2418 = vmatpush1.msra.mxu0 %v2374
        %2419 = vmatprep.subr.mxu0 %v2373
        %2420 = vmatpush1.msra.mxu0 %v2372
        %2421 = vmatprep.subr.mxu0 %v2371
        %2422 = vmatpush1.msra.mxu0 %v2370
        %2423 = vmatprep.subr.mxu0 %v2369
        %2424 = vmatpush1.msra.mxu0 %v2368
        %2425 = vmatprep.subr.mxu0 %v2367
        %2426 = vmatpush1.msra.mxu0 %v2366
        %2427 = vmatprep.subr.mxu0 %v2365
        %2428 = vmatpush1.msra.mxu0 %v2364
        %2429 = vmatprep.subr.mxu0 %v2363
        %2430 = vmatpush1.msra.mxu0 %v2362
        %2431 = vmatprep.subr.mxu0 %v2361
        %2432 = vmatpush1.msra.mxu0 %v2360
        %2433 = vmatprep.subr.mxu0 %v2359
        %2434 = vmatpush1.msra.mxu0 %v2358
        %2435 = vmatprep.subr.mxu0 0.0
        %2436 = vmatpush2.msra.mxu0 0.0
        %2437 = vmatprep.subr.mxu0 0.0
        %2438 = vmatpush2.msra.mxu0 0.0
        %2439 = vmatprep.subr.mxu0 0.0
        %2440 = vmatpush2.msra.mxu0 0.0
        %2441 = vmatprep.subr.mxu0 0.0
        %2442 = vmatpush2.msra.mxu0 0.0
        %2443 = vmatprep.subr.mxu0 0.0
        %2444 = vmatpush2.msra.mxu0 0.0
        %2445 = vmatprep.subr.mxu0 0.0
        %2446 = vmatpush2.msra.mxu0 0.0
        %2447 = vmatprep.subr.mxu0 0.0
        %2448 = vmatpush2.msra.mxu0 0.0
        %2449 = vmatprep.subr.mxu0 0.0
        %2450 = vmatpush2.msra.mxu0 0.0
        %2451 = vmatprep.subr.mxu0 0.0
        %2452 = vmatpush2.msra.mxu0 0.0
        %2453 = vmatprep.subr.mxu0 0.0
        %2454 = vmatpush2.msra.mxu0 0.0
        %2455 = vmatprep.subr.mxu0 0.0
        %2456 = vmatpush2.msra.mxu0 0.0
        %2457 = vmatprep.subr.mxu0 0.0
        %2458 = vmatpush2.msra.mxu0 0.0
        %2459 = vmatprep.subr.mxu0 0.0
        %2460 = vmatpush2.msra.mxu0 0.0
        %2461 = vmatprep.subr.mxu0 0.0
        %2462 = vmatpush2.msra.mxu0 0.0
        %2463 = vmatprep.subr.mxu0 0.0
        %2464 = vmatpush2.msra.mxu0 0.0
        %2465 = vmatprep.subr.mxu0 0.0
        %2466 = vmatpush2.msra.mxu0 0.0
        %2467 = vmatprep.mubr.f32.mxu0 0.0
        %2468 = vmatmul.mubr.f32.gmra.mxu0 %v2401
        %v2469 = vpop.f32.mrf.mxu0
        %v2470 = vadd.f32 %v2393, %v2469
        %v2471 = vpop.f32.mrf.mxu0
        %v2472 = vadd.f32 %v2397, %v2471
        %2473 = vdwg.mxu0
        %v2474 = vmax.f32 %v2470, 0.0
        %v2475 = vmax.f32 %v2472, 0.0
        %s2476 = scalar_lea.vmem %s13, 1
        %v2477 = vld [vmem:[%s2476] ss:$4 sm:$0x3]
        %v2479 = vlaneseq
        %v2480 = vshrl.u32 %v2479, 7
        %v2481 = vsub.s32 0, %v2480
        %v2482 = vrot.slane %v2477, %v2481
        %v2483 = vlaneseq
        %v2484 = vshrl.u32 %v2483, 7
        %v2485 = vsub.s32 1, %v2484
        %v2486 = vrot.slane %v2477, %v2485
        %v2489 = vmul.f32 %v2474, %v2482
        %v2490 = vmul.f32 %v2475, %v2486
        %s2491 = scalar_lea.vmem %s13, 2
        %v2492 = vld [vmem:[%s2491] ss:$4 sm:$0x3]
        %v2494 = vlaneseq
        %v2495 = vshrl.u32 %v2494, 7
        %v2496 = vsub.s32 0, %v2495
        %v2497 = vrot.slane %v2492, %v2496
        %v2498 = vlaneseq
        %v2499 = vshrl.u32 %v2498, 7
        %v2500 = vsub.s32 1, %v2499
        %v2501 = vrot.slane %v2492, %v2500
        %v2504 = vadd.f32 %v2489, %v2497
        %v2505 = vadd.f32 %v2490, %v2501
        %v2506 = vld [vmem:[%s8] sm:$0xff]
        %v2507 = vld [vmem:[%s8 + $0x8] sm:$0xff]
        %v2508 = vld [vmem:[%s8 + $0x10] sm:$0xff]
        %v2509 = vld [vmem:[%s8 + $0x18] sm:$0xff]
        %v2510 = vld [vmem:[%s8 + $0x20] sm:$0xff]
        %v2511 = vld [vmem:[%s8 + $0x28] sm:$0xff]
        %v2512 = vld [vmem:[%s8 + $0x30] sm:$0xff]
        %v2513 = vld [vmem:[%s8 + $0x38] sm:$0xff]
        %v2514 = vld [vmem:[%s8 + $0x40] sm:$0xff]
        %v2515 = vld [vmem:[%s8 + $0x48] sm:$0xff]
        %v2516 = vld [vmem:[%s8 + $0x50] sm:$0xff]
        %v2517 = vld [vmem:[%s8 + $0x58] sm:$0xff]
        %v2518 = vld [vmem:[%s8 + $0x60] sm:$0xff]
        %v2519 = vld [vmem:[%s8 + $0x68] sm:$0xff]
        %v2520 = vld [vmem:[%s8 + $0x70] sm:$0xff]
        %v2521 = vld [vmem:[%s8 + $0x78] sm:$0xff]
        %v2522 = vld [vmem:[%s8 + $0x80] sm:$0xff]
        %v2523 = vld [vmem:[%s8 + $0x88] sm:$0xff]
        %v2524 = vld [vmem:[%s8 + $0x90] sm:$0xff]
        %v2525 = vld [vmem:[%s8 + $0x98] sm:$0xff]
        %v2526 = vld [vmem:[%s8 + $0xa0] sm:$0xff]
        %v2527 = vld [vmem:[%s8 + $0xa8] sm:$0xff]
        %v2528 = vld [vmem:[%s8 + $0xb0] sm:$0xff]
        %v2529 = vld [vmem:[%s8 + $0xb8] sm:$0xff]
        %v2530 = vld [vmem:[%s8 + $0xc0] sm:$0xff]
        %v2531 = vld [vmem:[%s8 + $0xc8] sm:$0xff]
        %v2532 = vld [vmem:[%s8 + $0xd0] sm:$0xff]
        %v2533 = vld [vmem:[%s8 + $0xd8] sm:$0xff]
        %v2534 = vld [vmem:[%s8 + $0xe0] sm:$0xff]
        %v2535 = vld [vmem:[%s8 + $0xe8] sm:$0xff]
        %v2536 = vld [vmem:[%s8 + $0xf0] sm:$0xff]
        %v2537 = vld [vmem:[%s8 + $0xf8] sm:$0xff]
        %v2538 = vld [vmem:[%s8 + $0x100] sm:$0xff]
        %v2539 = vld [vmem:[%s8 + $0x108] sm:$0xff]
        %v2540 = vld [vmem:[%s8 + $0x110] sm:$0xff]
        %v2541 = vld [vmem:[%s8 + $0x118] sm:$0xff]
        %v2542 = vld [vmem:[%s8 + $0x120] sm:$0xff]
        %v2543 = vld [vmem:[%s8 + $0x128] sm:$0xff]
        %v2544 = vld [vmem:[%s8 + $0x130] sm:$0xff]
        %v2545 = vld [vmem:[%s8 + $0x138] sm:$0xff]
        %v2546 = vld [vmem:[%s8 + $0x140] sm:$0xff]
        %v2547 = vld [vmem:[%s8 + $0x148] sm:$0xff]
        %v2548 = vld [vmem:[%s8 + $0x150] sm:$0xff]
        %v2549 = vld [vmem:[%s8 + $0x158] sm:$0xff]
        %v2550 = vld [vmem:[%s8 + $0x160] sm:$0xff]
        %v2551 = vld [vmem:[%s8 + $0x168] sm:$0xff]
        %v2552 = vld [vmem:[%s8 + $0x170] sm:$0xff]
        %v2553 = vld [vmem:[%s8 + $0x178] sm:$0xff]
        %v2554 = vld [vmem:[%s8 + $0x180] sm:$0xff]
        %v2555 = vld [vmem:[%s8 + $0x188] sm:$0xff]
        %v2556 = vld [vmem:[%s8 + $0x190] sm:$0xff]
        %v2557 = vld [vmem:[%s8 + $0x198] sm:$0xff]
        %v2558 = vld [vmem:[%s8 + $0x1a0] sm:$0xff]
        %v2559 = vld [vmem:[%s8 + $0x1a8] sm:$0xff]
        %v2560 = vld [vmem:[%s8 + $0x1b0] sm:$0xff]
        %v2561 = vld [vmem:[%s8 + $0x1b8] sm:$0xff]
        %v2562 = vld [vmem:[%s8 + $0x1c0] sm:$0xff]
        %v2563 = vld [vmem:[%s8 + $0x1c8] sm:$0xff]
        %v2564 = vld [vmem:[%s8 + $0x1d0] sm:$0xff]
        %v2565 = vld [vmem:[%s8 + $0x1d8] sm:$0xff]
        %v2566 = vld [vmem:[%s8 + $0x1e0] sm:$0xff]
        %v2567 = vld [vmem:[%s8 + $0x1e8] sm:$0xff]
        %v2568 = vld [vmem:[%s8 + $0x1f0] sm:$0xff]
        %v2569 = vld [vmem:[%s8 + $0x1f8] sm:$0xff]
        %v2570 = vld [vmem:[%s8 + $0x200] sm:$0xff]
        %v2571 = vld [vmem:[%s8 + $0x208] sm:$0xff]
        %v2572 = vld [vmem:[%s8 + $0x210] sm:$0xff]
        %v2573 = vld [vmem:[%s8 + $0x218] sm:$0xff]
        %v2574 = vld [vmem:[%s8 + $0x220] sm:$0xff]
        %v2575 = vld [vmem:[%s8 + $0x228] sm:$0xff]
        %v2576 = vld [vmem:[%s8 + $0x230] sm:$0xff]
        %v2577 = vld [vmem:[%s8 + $0x238] sm:$0xff]
        %v2578 = vld [vmem:[%s8 + $0x240] sm:$0xff]
        %v2579 = vld [vmem:[%s8 + $0x248] sm:$0xff]
        %v2580 = vld [vmem:[%s8 + $0x250] sm:$0xff]
        %v2581 = vld [vmem:[%s8 + $0x258] sm:$0xff]
        %v2582 = vld [vmem:[%s8 + $0x260] sm:$0xff]
        %v2583 = vld [vmem:[%s8 + $0x268] sm:$0xff]
        %v2584 = vld [vmem:[%s8 + $0x270] sm:$0xff]
        %v2585 = vld [vmem:[%s8 + $0x278] sm:$0xff]
        %v2586 = vld [vmem:[%s8 + $0x280] sm:$0xff]
        %v2587 = vld [vmem:[%s8 + $0x288] sm:$0xff]
        %v2588 = vld [vmem:[%s8 + $0x290] sm:$0xff]
        %v2589 = vld [vmem:[%s8 + $0x298] sm:$0xff]
        %v2590 = vld [vmem:[%s8 + $0x2a0] sm:$0xff]
        %v2591 = vld [vmem:[%s8 + $0x2a8] sm:$0xff]
        %v2592 = vld [vmem:[%s8 + $0x2b0] sm:$0xff]
        %v2593 = vld [vmem:[%s8 + $0x2b8] sm:$0xff]
        %v2594 = vld [vmem:[%s8 + $0x2c0] sm:$0xff]
        %v2595 = vld [vmem:[%s8 + $0x2c8] sm:$0xff]
        %v2596 = vld [vmem:[%s8 + $0x2d0] sm:$0xff]
        %v2597 = vld [vmem:[%s8 + $0x2d8] sm:$0xff]
        %v2598 = vld [vmem:[%s8 + $0x2e0] sm:$0xff]
        %v2599 = vld [vmem:[%s8 + $0x2e8] sm:$0xff]
        %v2600 = vld [vmem:[%s8 + $0x2f0] sm:$0xff]
        %v2601 = vld [vmem:[%s8 + $0x2f8] sm:$0xff]
        %v2602 = vld [vmem:[%s8 + $0x300] sm:$0xff]
        %v2603 = vld [vmem:[%s8 + $0x308] sm:$0xff]
        %v2604 = vld [vmem:[%s8 + $0x310] sm:$0xff]
        %v2605 = vld [vmem:[%s8 + $0x318] sm:$0xff]
        %v2606 = vld [vmem:[%s8 + $0x320] sm:$0xff]
        %v2607 = vld [vmem:[%s8 + $0x328] sm:$0xff]
        %v2608 = vld [vmem:[%s8 + $0x330] sm:$0xff]
        %v2609 = vld [vmem:[%s8 + $0x338] sm:$0xff]
        %v2610 = vld [vmem:[%s8 + $0x340] sm:$0xff]
        %v2611 = vld [vmem:[%s8 + $0x348] sm:$0xff]
        %v2612 = vld [vmem:[%s8 + $0x350] sm:$0xff]
        %v2613 = vld [vmem:[%s8 + $0x358] sm:$0xff]
        %v2614 = vld [vmem:[%s8 + $0x360] sm:$0xff]
        %v2615 = vld [vmem:[%s8 + $0x368] sm:$0xff]
        %v2616 = vld [vmem:[%s8 + $0x370] sm:$0xff]
        %v2617 = vld [vmem:[%s8 + $0x378] sm:$0xff]
        %v2618 = vld [vmem:[%s8 + $0x380] sm:$0xff]
        %v2619 = vld [vmem:[%s8 + $0x388] sm:$0xff]
        %v2620 = vld [vmem:[%s8 + $0x390] sm:$0xff]
        %v2621 = vld [vmem:[%s8 + $0x398] sm:$0xff]
        %v2622 = vld [vmem:[%s8 + $0x3a0] sm:$0xff]
        %v2623 = vld [vmem:[%s8 + $0x3a8] sm:$0xff]
        %v2624 = vld [vmem:[%s8 + $0x3b0] sm:$0xff]
        %v2625 = vld [vmem:[%s8 + $0x3b8] sm:$0xff]
        %v2626 = vld [vmem:[%s8 + $0x3c0] sm:$0xff]
        %v2627 = vld [vmem:[%s8 + $0x3c8] sm:$0xff]
        %v2628 = vld [vmem:[%s8 + $0x3d0] sm:$0xff]
        %v2629 = vld [vmem:[%s8 + $0x3d8] sm:$0xff]
        %v2630 = vld [vmem:[%s8 + $0x3e0] sm:$0xff]
        %v2631 = vld [vmem:[%s8 + $0x3e8] sm:$0xff]
        %v2632 = vld [vmem:[%s8 + $0x3f0] sm:$0xff]
        %v2633 = vld [vmem:[%s8 + $0x3f8] sm:$0xff]
        %v2634 = vld [vmem:[%s8 + $0x400] sm:$0xff]
        %v2635 = vld [vmem:[%s8 + $0x408] sm:$0xff]
        %v2636 = vld [vmem:[%s8 + $0x410] sm:$0xff]
        %v2637 = vld [vmem:[%s8 + $0x418] sm:$0xff]
        %v2638 = vld [vmem:[%s8 + $0x420] sm:$0xff]
        %v2639 = vld [vmem:[%s8 + $0x428] sm:$0xff]
        %v2640 = vld [vmem:[%s8 + $0x430] sm:$0xff]
        %v2641 = vld [vmem:[%s8 + $0x438] sm:$0xff]
        %v2642 = vld [vmem:[%s8 + $0x440] sm:$0xff]
        %v2643 = vld [vmem:[%s8 + $0x448] sm:$0xff]
        %v2644 = vld [vmem:[%s8 + $0x450] sm:$0xff]
        %v2645 = vld [vmem:[%s8 + $0x458] sm:$0xff]
        %v2646 = vld [vmem:[%s8 + $0x460] sm:$0xff]
        %v2647 = vld [vmem:[%s8 + $0x468] sm:$0xff]
        %v2648 = vld [vmem:[%s8 + $0x470] sm:$0xff]
        %v2649 = vld [vmem:[%s8 + $0x478] sm:$0xff]
        %v2650 = vld [vmem:[%s8 + $0x480] sm:$0xff]
        %v2651 = vld [vmem:[%s8 + $0x488] sm:$0xff]
        %v2652 = vld [vmem:[%s8 + $0x490] sm:$0xff]
        %v2653 = vld [vmem:[%s8 + $0x498] sm:$0xff]
        %v2654 = vld [vmem:[%s8 + $0x4a0] sm:$0xff]
        %v2655 = vld [vmem:[%s8 + $0x4a8] sm:$0xff]
        %v2656 = vld [vmem:[%s8 + $0x4b0] sm:$0xff]
        %v2657 = vld [vmem:[%s8 + $0x4b8] sm:$0xff]
        %v2658 = vld [vmem:[%s8 + $0x4c0] sm:$0xff]
        %v2659 = vld [vmem:[%s8 + $0x4c8] sm:$0xff]
        %v2660 = vld [vmem:[%s8 + $0x4d0] sm:$0xff]
        %v2661 = vld [vmem:[%s8 + $0x4d8] sm:$0xff]
        %v2662 = vld [vmem:[%s8 + $0x4e0] sm:$0xff]
        %v2663 = vld [vmem:[%s8 + $0x4e8] sm:$0xff]
        %v2664 = vld [vmem:[%s8 + $0x4f0] sm:$0xff]
        %v2665 = vld [vmem:[%s8 + $0x4f8] sm:$0xff]
        %v2666 = vld [vmem:[%s8 + $0x500] sm:$0xff]
        %v2667 = vld [vmem:[%s8 + $0x508] sm:$0xff]
        %v2668 = vld [vmem:[%s8 + $0x510] sm:$0xff]
        %v2669 = vld [vmem:[%s8 + $0x518] sm:$0xff]
        %v2670 = vld [vmem:[%s8 + $0x520] sm:$0xff]
        %v2671 = vld [vmem:[%s8 + $0x528] sm:$0xff]
        %v2672 = vld [vmem:[%s8 + $0x530] sm:$0xff]
        %v2673 = vld [vmem:[%s8 + $0x538] sm:$0xff]
        %v2674 = vld [vmem:[%s8 + $0x540] sm:$0xff]
        %v2675 = vld [vmem:[%s8 + $0x548] sm:$0xff]
        %v2676 = vld [vmem:[%s8 + $0x550] sm:$0xff]
        %v2677 = vld [vmem:[%s8 + $0x558] sm:$0xff]
        %v2678 = vld [vmem:[%s8 + $0x560] sm:$0xff]
        %v2679 = vld [vmem:[%s8 + $0x568] sm:$0xff]
        %v2680 = vld [vmem:[%s8 + $0x570] sm:$0xff]
        %v2681 = vld [vmem:[%s8 + $0x578] sm:$0xff]
        %v2682 = vld [vmem:[%s8 + $0x580] sm:$0xff]
        %v2683 = vld [vmem:[%s8 + $0x588] sm:$0xff]
        %v2684 = vld [vmem:[%s8 + $0x590] sm:$0xff]
        %v2685 = vld [vmem:[%s8 + $0x598] sm:$0xff]
        %v2686 = vld [vmem:[%s8 + $0x5a0] sm:$0xff]
        %v2687 = vld [vmem:[%s8 + $0x5a8] sm:$0xff]
        %v2688 = vld [vmem:[%s8 + $0x5b0] sm:$0xff]
        %v2689 = vld [vmem:[%s8 + $0x5b8] sm:$0xff]
        %v2690 = vld [vmem:[%s8 + $0x5c0] sm:$0xff]
        %v2691 = vld [vmem:[%s8 + $0x5c8] sm:$0xff]
        %v2692 = vld [vmem:[%s8 + $0x5d0] sm:$0xff]
        %v2693 = vld [vmem:[%s8 + $0x5d8] sm:$0xff]
        %v2694 = vld [vmem:[%s8 + $0x5e0] sm:$0xff]
        %v2695 = vld [vmem:[%s8 + $0x5e8] sm:$0xff]
        %v2696 = vld [vmem:[%s8 + $0x5f0] sm:$0xff]
        %v2697 = vld [vmem:[%s8 + $0x5f8] sm:$0xff]
        %v2698 = vld [vmem:[%s8 + $0x600] sm:$0xff]
        %v2699 = vld [vmem:[%s8 + $0x608] sm:$0xff]
        %v2700 = vld [vmem:[%s8 + $0x610] sm:$0xff]
        %v2701 = vld [vmem:[%s8 + $0x618] sm:$0xff]
        %v2702 = vld [vmem:[%s8 + $0x620] sm:$0xff]
        %v2703 = vld [vmem:[%s8 + $0x628] sm:$0xff]
        %v2704 = vld [vmem:[%s8 + $0x630] sm:$0xff]
        %v2705 = vld [vmem:[%s8 + $0x638] sm:$0xff]
        %v2706 = vld [vmem:[%s8 + $0x640] sm:$0xff]
        %v2707 = vld [vmem:[%s8 + $0x648] sm:$0xff]
        %v2708 = vld [vmem:[%s8 + $0x650] sm:$0xff]
        %v2709 = vld [vmem:[%s8 + $0x658] sm:$0xff]
        %v2710 = vld [vmem:[%s8 + $0x660] sm:$0xff]
        %v2711 = vld [vmem:[%s8 + $0x668] sm:$0xff]
        %v2712 = vld [vmem:[%s8 + $0x670] sm:$0xff]
        %v2713 = vld [vmem:[%s8 + $0x678] sm:$0xff]
        %v2714 = vld [vmem:[%s8 + $0x680] sm:$0xff]
        %v2715 = vld [vmem:[%s8 + $0x688] sm:$0xff]
        %v2716 = vld [vmem:[%s8 + $0x690] sm:$0xff]
        %v2717 = vld [vmem:[%s8 + $0x698] sm:$0xff]
        %v2718 = vld [vmem:[%s8 + $0x6a0] sm:$0xff]
        %v2719 = vld [vmem:[%s8 + $0x6a8] sm:$0xff]
        %v2720 = vld [vmem:[%s8 + $0x6b0] sm:$0xff]
        %v2721 = vld [vmem:[%s8 + $0x6b8] sm:$0xff]
        %v2722 = vld [vmem:[%s8 + $0x6c0] sm:$0xff]
        %v2723 = vld [vmem:[%s8 + $0x6c8] sm:$0xff]
        %v2724 = vld [vmem:[%s8 + $0x6d0] sm:$0xff]
        %v2725 = vld [vmem:[%s8 + $0x6d8] sm:$0xff]
        %v2726 = vld [vmem:[%s8 + $0x6e0] sm:$0xff]
        %v2727 = vld [vmem:[%s8 + $0x6e8] sm:$0xff]
        %v2728 = vld [vmem:[%s8 + $0x6f0] sm:$0xff]
        %v2729 = vld [vmem:[%s8 + $0x6f8] sm:$0xff]
        %v2730 = vld [vmem:[%s8 + $0x700] sm:$0xff]
        %v2731 = vld [vmem:[%s8 + $0x708] sm:$0xff]
        %v2732 = vld [vmem:[%s8 + $0x710] sm:$0xff]
        %v2733 = vld [vmem:[%s8 + $0x718] sm:$0xff]
        %v2734 = vld [vmem:[%s8 + $0x720] sm:$0xff]
        %v2735 = vld [vmem:[%s8 + $0x728] sm:$0xff]
        %v2736 = vld [vmem:[%s8 + $0x730] sm:$0xff]
        %v2737 = vld [vmem:[%s8 + $0x738] sm:$0xff]
        %v2738 = vld [vmem:[%s8 + $0x740] sm:$0xff]
        %v2739 = vld [vmem:[%s8 + $0x748] sm:$0xff]
        %v2740 = vld [vmem:[%s8 + $0x750] sm:$0xff]
        %v2741 = vld [vmem:[%s8 + $0x758] sm:$0xff]
        %v2742 = vld [vmem:[%s8 + $0x760] sm:$0xff]
        %v2743 = vld [vmem:[%s8 + $0x768] sm:$0xff]
        %v2744 = vld [vmem:[%s8 + $0x770] sm:$0xff]
        %v2745 = vld [vmem:[%s8 + $0x778] sm:$0xff]
        %v2746 = vld [vmem:[%s8 + $0x780] sm:$0xff]
        %v2747 = vld [vmem:[%s8 + $0x788] sm:$0xff]
        %v2748 = vld [vmem:[%s8 + $0x790] sm:$0xff]
        %v2749 = vld [vmem:[%s8 + $0x798] sm:$0xff]
        %v2750 = vld [vmem:[%s8 + $0x7a0] sm:$0xff]
        %v2751 = vld [vmem:[%s8 + $0x7a8] sm:$0xff]
        %v2752 = vld [vmem:[%s8 + $0x7b0] sm:$0xff]
        %v2753 = vld [vmem:[%s8 + $0x7b8] sm:$0xff]
        %v2754 = vld [vmem:[%s8 + $0x7c0] sm:$0x3]
        %v2755 = vld [vmem:[%s8 + $0x7c8] sm:$0x3]
        %v2756 = vld [vmem:[%s8 + $0x7d0] sm:$0x3]
        %v2757 = vld [vmem:[%s8 + $0x7d8] sm:$0x3]
        %v2758 = vld [vmem:[%s8 + $0x7e0] sm:$0x3]
        %v2759 = vld [vmem:[%s8 + $0x7e8] sm:$0x3]
        %v2760 = vld [vmem:[%s8 + $0x7f0] sm:$0x3]
        %v2761 = vld [vmem:[%s8 + $0x7f8] sm:$0x3]
        %v2762 = vld [vmem:[%s16] sm:$0xff]
        %v2764 = vlaneseq
        %v2765 = vshrl.u32 %v2764, 7
        %v2766 = vsub.s32 0, %v2765
        %v2767 = vrot.slane %v2762, %v2766
        %v2768 = vlaneseq
        %v2769 = vshrl.u32 %v2768, 7
        %v2770 = vsub.s32 1, %v2769
        %v2771 = vrot.slane %v2762, %v2770
        %v2772 = vlaneseq
        %v2773 = vshrl.u32 %v2772, 7
        %v2774 = vsub.s32 2, %v2773
        %v2775 = vrot.slane %v2762, %v2774
        %v2776 = vlaneseq
        %v2777 = vshrl.u32 %v2776, 7
        %v2778 = vsub.s32 3, %v2777
        %v2779 = vrot.slane %v2762, %v2778
        %v2780 = vlaneseq
        %v2781 = vshrl.u32 %v2780, 7
        %v2782 = vsub.s32 4, %v2781
        %v2783 = vrot.slane %v2762, %v2782
        %v2784 = vlaneseq
        %v2785 = vshrl.u32 %v2784, 7
        %v2786 = vsub.s32 5, %v2785
        %v2787 = vrot.slane %v2762, %v2786
        %v2788 = vlaneseq
        %v2789 = vshrl.u32 %v2788, 7
        %v2790 = vsub.s32 6, %v2789
        %v2791 = vrot.slane %v2762, %v2790
        %v2792 = vlaneseq
        %v2793 = vshrl.u32 %v2792, 7
        %v2794 = vsub.s32 7, %v2793
        %v2795 = vrot.slane %v2762, %v2794
        %v2805 = vsel %vm1814, %v2505, 0
        %v2808 = vsel %vm1818, %v2754, 0
        %v2811 = vsel %vm1818, %v2755, 0
        %v2814 = vsel %vm1818, %v2756, 0
        %v2817 = vsel %vm1818, %v2757, 0
        %v2820 = vsel %vm1818, %v2758, 0
        %v2823 = vsel %vm1818, %v2759, 0
        %v2826 = vsel %vm1818, %v2760, 0
        %v2829 = vsel %vm1818, %v2761, 0
        %2831 = vmatprep.subr.mxu0 %v2627
        %2832 = vmatpush1.msra.mxu0 %v2626
        %2833 = vmatprep.subr.mxu0 %v2619
        %2834 = vmatpush1.msra.mxu0 %v2618
        %2835 = vmatprep.subr.mxu0 %v2611
        %2836 = vmatpush1.msra.mxu0 %v2610
        %2837 = vmatprep.subr.mxu0 %v2603
        %2838 = vmatpush1.msra.mxu0 %v2602
        %2839 = vmatprep.subr.mxu0 %v2595
        %2840 = vmatpush1.msra.mxu0 %v2594
        %2841 = vmatprep.subr.mxu0 %v2587
        %2842 = vmatpush1.msra.mxu0 %v2586
        %2843 = vmatprep.subr.mxu0 %v2579
        %2844 = vmatpush1.msra.mxu0 %v2578
        %2845 = vmatprep.subr.mxu0 %v2571
        %2846 = vmatpush1.msra.mxu0 %v2570
        %2847 = vmatprep.subr.mxu0 %v2563
        %2848 = vmatpush1.msra.mxu0 %v2562
        %2849 = vmatprep.subr.mxu0 %v2555
        %2850 = vmatpush1.msra.mxu0 %v2554
        %2851 = vmatprep.subr.mxu0 %v2547
        %2852 = vmatpush1.msra.mxu0 %v2546
        %2853 = vmatprep.subr.mxu0 %v2539
        %2854 = vmatpush1.msra.mxu0 %v2538
        %2855 = vmatprep.subr.mxu0 %v2531
        %2856 = vmatpush1.msra.mxu0 %v2530
        %2857 = vmatprep.subr.mxu0 %v2523
        %2858 = vmatpush1.msra.mxu0 %v2522
        %2859 = vmatprep.subr.mxu0 %v2515
        %2860 = vmatpush1.msra.mxu0 %v2514
        %2861 = vmatprep.subr.mxu0 %v2507
        %2862 = vmatpush1.msra.mxu0 %v2506
        %2863 = vmatprep.subr.mxu0 %v2811
        %2864 = vmatpush2.msra.mxu0 %v2808
        %2865 = vmatprep.subr.mxu0 %v2747
        %2866 = vmatpush2.msra.mxu0 %v2746
        %2867 = vmatprep.subr.mxu0 %v2739
        %2868 = vmatpush2.msra.mxu0 %v2738
        %2869 = vmatprep.subr.mxu0 %v2731
        %2870 = vmatpush2.msra.mxu0 %v2730
        %2871 = vmatprep.subr.mxu0 %v2723
        %2872 = vmatpush2.msra.mxu0 %v2722
        %2873 = vmatprep.subr.mxu0 %v2715
        %2874 = vmatpush2.msra.mxu0 %v2714
        %2875 = vmatprep.subr.mxu0 %v2707
        %2876 = vmatpush2.msra.mxu0 %v2706
        %2877 = vmatprep.subr.mxu0 %v2699
        %2878 = vmatpush2.msra.mxu0 %v2698
        %2879 = vmatprep.subr.mxu0 %v2691
        %2880 = vmatpush2.msra.mxu0 %v2690
        %2881 = vmatprep.subr.mxu0 %v2683
        %2882 = vmatpush2.msra.mxu0 %v2682
        %2883 = vmatprep.subr.mxu0 %v2675
        %2884 = vmatpush2.msra.mxu0 %v2674
        %2885 = vmatprep.subr.mxu0 %v2667
        %2886 = vmatpush2.msra.mxu0 %v2666
        %2887 = vmatprep.subr.mxu0 %v2659
        %2888 = vmatpush2.msra.mxu0 %v2658
        %2889 = vmatprep.subr.mxu0 %v2651
        %2890 = vmatpush2.msra.mxu0 %v2650
        %2891 = vmatprep.subr.mxu0 %v2643
        %2892 = vmatpush2.msra.mxu0 %v2642
        %2893 = vmatprep.subr.mxu0 %v2635
        %2894 = vmatpush2.msra.mxu0 %v2634
        %2895 = vmatprep.mubr.f32.mxu0 %v2805
        %2896 = vmatmul.mubr.f32.gmra.mxu0 %v2504
        %v2897 = vpop.f32.mrf.mxu0
        %v2898 = vadd.f32 %v2767, %v2897
        %v2899 = vpop.f32.mrf.mxu0
        %v2900 = vadd.f32 %v2771, %v2899
        %2901 = vdwg.mxu0
        %2902 = vmatprep.subr.mxu0 %v2629
        %2903 = vmatpush1.msra.mxu0 %v2628
        %2904 = vmatprep.subr.mxu0 %v2621
        %2905 = vmatpush1.msra.mxu0 %v2620
        %2906 = vmatprep.subr.mxu0 %v2613
        %2907 = vmatpush1.msra.mxu0 %v2612
        %2908 = vmatprep.subr.mxu0 %v2605
        %2909 = vmatpush1.msra.mxu0 %v2604
        %2910 = vmatprep.subr.mxu0 %v2597
        %2911 = vmatpush1.msra.mxu0 %v2596
        %2912 = vmatprep.subr.mxu0 %v2589
        %2913 = vmatpush1.msra.mxu0 %v2588
        %2914 = vmatprep.subr.mxu0 %v2581
        %2915 = vmatpush1.msra.mxu0 %v2580
        %2916 = vmatprep.subr.mxu0 %v2573
        %2917 = vmatpush1.msra.mxu0 %v2572
        %2918 = vmatprep.subr.mxu0 %v2565
        %2919 = vmatpush1.msra.mxu0 %v2564
        %2920 = vmatprep.subr.mxu0 %v2557
        %2921 = vmatpush1.msra.mxu0 %v2556
        %2922 = vmatprep.subr.mxu0 %v2549
        %2923 = vmatpush1.msra.mxu0 %v2548
        %2924 = vmatprep.subr.mxu0 %v2541
        %2925 = vmatpush1.msra.mxu0 %v2540
        %2926 = vmatprep.subr.mxu0 %v2533
        %2927 = vmatpush1.msra.mxu0 %v2532
        %2928 = vmatprep.subr.mxu0 %v2525
        %2929 = vmatpush1.msra.mxu0 %v2524
        %2930 = vmatprep.subr.mxu0 %v2517
        %2931 = vmatpush1.msra.mxu0 %v2516
        %2932 = vmatprep.subr.mxu0 %v2509
        %2933 = vmatpush1.msra.mxu0 %v2508
        %2934 = vmatprep.subr.mxu0 %v2817
        %2935 = vmatpush2.msra.mxu0 %v2814
        %2936 = vmatprep.subr.mxu0 %v2749
        %2937 = vmatpush2.msra.mxu0 %v2748
        %2938 = vmatprep.subr.mxu0 %v2741
        %2939 = vmatpush2.msra.mxu0 %v2740
        %2940 = vmatprep.subr.mxu0 %v2733
        %2941 = vmatpush2.msra.mxu0 %v2732
        %2942 = vmatprep.subr.mxu0 %v2725
        %2943 = vmatpush2.msra.mxu0 %v2724
        %2944 = vmatprep.subr.mxu0 %v2717
        %2945 = vmatpush2.msra.mxu0 %v2716
        %2946 = vmatprep.subr.mxu0 %v2709
        %2947 = vmatpush2.msra.mxu0 %v2708
        %2948 = vmatprep.subr.mxu0 %v2701
        %2949 = vmatpush2.msra.mxu0 %v2700
        %2950 = vmatprep.subr.mxu0 %v2693
        %2951 = vmatpush2.msra.mxu0 %v2692
        %2952 = vmatprep.subr.mxu0 %v2685
        %2953 = vmatpush2.msra.mxu0 %v2684
        %2954 = vmatprep.subr.mxu0 %v2677
        %2955 = vmatpush2.msra.mxu0 %v2676
        %2956 = vmatprep.subr.mxu0 %v2669
        %2957 = vmatpush2.msra.mxu0 %v2668
        %2958 = vmatprep.subr.mxu0 %v2661
        %2959 = vmatpush2.msra.mxu0 %v2660
        %2960 = vmatprep.subr.mxu0 %v2653
        %2961 = vmatpush2.msra.mxu0 %v2652
        %2962 = vmatprep.subr.mxu0 %v2645
        %2963 = vmatpush2.msra.mxu0 %v2644
        %2964 = vmatprep.subr.mxu0 %v2637
        %2965 = vmatpush2.msra.mxu0 %v2636
        %2966 = vmatprep.mubr.f32.mxu0 %v2805
        %2967 = vmatmul.mubr.f32.gmra.mxu0 %v2504
        %v2968 = vpop.f32.mrf.mxu0
        %v2969 = vadd.f32 %v2775, %v2968
        %v2970 = vpop.f32.mrf.mxu0
        %v2971 = vadd.f32 %v2779, %v2970
        %2972 = vdwg.mxu0
        %2973 = vmatprep.subr.mxu0 %v2631
        %2974 = vmatpush1.msra.mxu0 %v2630
        %2975 = vmatprep.subr.mxu0 %v2623
        %2976 = vmatpush1.msra.mxu0 %v2622
        %2977 = vmatprep.subr.mxu0 %v2615
        %2978 = vmatpush1.msra.mxu0 %v2614
        %2979 = vmatprep.subr.mxu0 %v2607
        %2980 = vmatpush1.msra.mxu0 %v2606
        %2981 = vmatprep.subr.mxu0 %v2599
        %2982 = vmatpush1.msra.mxu0 %v2598
        %2983 = vmatprep.subr.mxu0 %v2591
        %2984 = vmatpush1.msra.mxu0 %v2590
        %2985 = vmatprep.subr.mxu0 %v2583
        %2986 = vmatpush1.msra.mxu0 %v2582
        %2987 = vmatprep.subr.mxu0 %v2575
        %2988 = vmatpush1.msra.mxu0 %v2574
        %2989 = vmatprep.subr.mxu0 %v2567
        %2990 = vmatpush1.msra.mxu0 %v2566
        %2991 = vmatprep.subr.mxu0 %v2559
        %2992 = vmatpush1.msra.mxu0 %v2558
        %2993 = vmatprep.subr.mxu0 %v2551
        %2994 = vmatpush1.msra.mxu0 %v2550
        %2995 = vmatprep.subr.mxu0 %v2543
        %2996 = vmatpush1.msra.mxu0 %v2542
        %2997 = vmatprep.subr.mxu0 %v2535
        %2998 = vmatpush1.msra.mxu0 %v2534
        %2999 = vmatprep.subr.mxu0 %v2527
        %3000 = vmatpush1.msra.mxu0 %v2526
        %3001 = vmatprep.subr.mxu0 %v2519
        %3002 = vmatpush1.msra.mxu0 %v2518
        %3003 = vmatprep.subr.mxu0 %v2511
        %3004 = vmatpush1.msra.mxu0 %v2510
        %3005 = vmatprep.subr.mxu0 %v2823
        %3006 = vmatpush2.msra.mxu0 %v2820
        %3007 = vmatprep.subr.mxu0 %v2751
        %3008 = vmatpush2.msra.mxu0 %v2750
        %3009 = vmatprep.subr.mxu0 %v2743
        %3010 = vmatpush2.msra.mxu0 %v2742
        %3011 = vmatprep.subr.mxu0 %v2735
        %3012 = vmatpush2.msra.mxu0 %v2734
        %3013 = vmatprep.subr.mxu0 %v2727
        %3014 = vmatpush2.msra.mxu0 %v2726
        %3015 = vmatprep.subr.mxu0 %v2719
        %3016 = vmatpush2.msra.mxu0 %v2718
        %3017 = vmatprep.subr.mxu0 %v2711
        %3018 = vmatpush2.msra.mxu0 %v2710
        %3019 = vmatprep.subr.mxu0 %v2703
        %3020 = vmatpush2.msra.mxu0 %v2702
        %3021 = vmatprep.subr.mxu0 %v2695
        %3022 = vmatpush2.msra.mxu0 %v2694
        %3023 = vmatprep.subr.mxu0 %v2687
        %3024 = vmatpush2.msra.mxu0 %v2686
        %3025 = vmatprep.subr.mxu0 %v2679
        %3026 = vmatpush2.msra.mxu0 %v2678
        %3027 = vmatprep.subr.mxu0 %v2671
        %3028 = vmatpush2.msra.mxu0 %v2670
        %3029 = vmatprep.subr.mxu0 %v2663
        %3030 = vmatpush2.msra.mxu0 %v2662
        %3031 = vmatprep.subr.mxu0 %v2655
        %3032 = vmatpush2.msra.mxu0 %v2654
        %3033 = vmatprep.subr.mxu0 %v2647
        %3034 = vmatpush2.msra.mxu0 %v2646
        %3035 = vmatprep.subr.mxu0 %v2639
        %3036 = vmatpush2.msra.mxu0 %v2638
        %3037 = vmatprep.mubr.f32.mxu0 %v2805
        %3038 = vmatmul.mubr.f32.gmra.mxu0 %v2504
        %v3039 = vpop.f32.mrf.mxu0
        %v3040 = vadd.f32 %v2783, %v3039
        %v3041 = vpop.f32.mrf.mxu0
        %v3042 = vadd.f32 %v2787, %v3041
        %3043 = vdwg.mxu0
        %3044 = vmatprep.subr.mxu0 %v2633
        %3045 = vmatpush1.msra.mxu0 %v2632
        %3046 = vmatprep.subr.mxu0 %v2625
        %3047 = vmatpush1.msra.mxu0 %v2624
        %3048 = vmatprep.subr.mxu0 %v2617
        %3049 = vmatpush1.msra.mxu0 %v2616
        %3050 = vmatprep.subr.mxu0 %v2609
        %3051 = vmatpush1.msra.mxu0 %v2608
        %3052 = vmatprep.subr.mxu0 %v2601
        %3053 = vmatpush1.msra.mxu0 %v2600
        %3054 = vmatprep.subr.mxu0 %v2593
        %3055 = vmatpush1.msra.mxu0 %v2592
        %3056 = vmatprep.subr.mxu0 %v2585
        %3057 = vmatpush1.msra.mxu0 %v2584
        %3058 = vmatprep.subr.mxu0 %v2577
        %3059 = vmatpush1.msra.mxu0 %v2576
        %3060 = vmatprep.subr.mxu0 %v2569
        %3061 = vmatpush1.msra.mxu0 %v2568
        %3062 = vmatprep.subr.mxu0 %v2561
        %3063 = vmatpush1.msra.mxu0 %v2560
        %3064 = vmatprep.subr.mxu0 %v2553
        %3065 = vmatpush1.msra.mxu0 %v2552
        %3066 = vmatprep.subr.mxu0 %v2545
        %3067 = vmatpush1.msra.mxu0 %v2544
        %3068 = vmatprep.subr.mxu0 %v2537
        %3069 = vmatpush1.msra.mxu0 %v2536
        %3070 = vmatprep.subr.mxu0 %v2529
        %3071 = vmatpush1.msra.mxu0 %v2528
        %3072 = vmatprep.subr.mxu0 %v2521
        %3073 = vmatpush1.msra.mxu0 %v2520
        %3074 = vmatprep.subr.mxu0 %v2513
        %3075 = vmatpush1.msra.mxu0 %v2512
        %3076 = vmatprep.subr.mxu0 %v2829
        %3077 = vmatpush2.msra.mxu0 %v2826
        %3078 = vmatprep.subr.mxu0 %v2753
        %3079 = vmatpush2.msra.mxu0 %v2752
        %3080 = vmatprep.subr.mxu0 %v2745
        %3081 = vmatpush2.msra.mxu0 %v2744
        %3082 = vmatprep.subr.mxu0 %v2737
        %3083 = vmatpush2.msra.mxu0 %v2736
        %3084 = vmatprep.subr.mxu0 %v2729
        %3085 = vmatpush2.msra.mxu0 %v2728
        %3086 = vmatprep.subr.mxu0 %v2721
        %3087 = vmatpush2.msra.mxu0 %v2720
        %3088 = vmatprep.subr.mxu0 %v2713
        %3089 = vmatpush2.msra.mxu0 %v2712
        %3090 = vmatprep.subr.mxu0 %v2705
        %3091 = vmatpush2.msra.mxu0 %v2704
        %3092 = vmatprep.subr.mxu0 %v2697
        %3093 = vmatpush2.msra.mxu0 %v2696
        %3094 = vmatprep.subr.mxu0 %v2689
        %3095 = vmatpush2.msra.mxu0 %v2688
        %3096 = vmatprep.subr.mxu0 %v2681
        %3097 = vmatpush2.msra.mxu0 %v2680
        %3098 = vmatprep.subr.mxu0 %v2673
        %3099 = vmatpush2.msra.mxu0 %v2672
        %3100 = vmatprep.subr.mxu0 %v2665
        %3101 = vmatpush2.msra.mxu0 %v2664
        %3102 = vmatprep.subr.mxu0 %v2657
        %3103 = vmatpush2.msra.mxu0 %v2656
        %3104 = vmatprep.subr.mxu0 %v2649
        %3105 = vmatpush2.msra.mxu0 %v2648
        %3106 = vmatprep.subr.mxu0 %v2641
        %3107 = vmatpush2.msra.mxu0 %v2640
        %3108 = vmatprep.mubr.f32.mxu0 %v2805
        %3109 = vmatmul.mubr.f32.gmra.mxu0 %v2504
        %v3110 = vpop.f32.mrf.mxu0
        %v3111 = vadd.f32 %v2791, %v3110
        %v3112 = vpop.f32.mrf.mxu0
        %v3113 = vadd.f32 %v2795, %v3112
        %3114 = vdwg.mxu0
        %v3115 = vmax.f32 %v2898, 0.0
        %v3116 = vmax.f32 %v2900, 0.0
        %v3117 = vmax.f32 %v2969, 0.0
        %v3118 = vmax.f32 %v2971, 0.0
        %v3119 = vmax.f32 %v3040, 0.0
        %v3120 = vmax.f32 %v3042, 0.0
        %v3121 = vmax.f32 %v3111, 0.0
        %v3122 = vmax.f32 %v3113, 0.0
        %v3131 = vcombine.low %v3115, %v3116
        %v3132 = vcombine.low %v3117, %v3118
        %v3133 = vcombine.low %v3119, %v3120
        %v3134 = vcombine.low %v3121, %v3122
        %v3136 = vunpack.c.l.s4 1966171168
        %v3137 = vunpack.c.0.s8 %v3136
        %v3138 = vlaneseq
        %v3139 = vshrl.u32 %v3138, 7
        %v3140 = vsub.s32 %v3137, %v3139
        %v3141 = vrot.slane %v3131, %v3140
        %v3143 = vunpack.c.l.s4 1966171168
        %v3144 = vunpack.c.0.s8 %v3143
        %v3145 = vlaneseq
        %v3146 = vshrl.u32 %v3145, 7
        %v3147 = vsub.s32 %v3144, %v3146
        %v3148 = vrot.slane %v3132, %v3147
        %v3150 = vunpack.c.l.s4 1966171168
        %v3151 = vunpack.c.0.s8 %v3150
        %v3152 = vlaneseq
        %v3153 = vshrl.u32 %v3152, 7
        %v3154 = vsub.s32 %v3151, %v3153
        %v3155 = vrot.slane %v3133, %v3154
        %v3157 = vunpack.c.l.s4 1966171168
        %v3158 = vunpack.c.0.s8 %v3157
        %v3159 = vlaneseq
        %v3160 = vshrl.u32 %v3159, 7
        %v3161 = vsub.s32 %v3158, %v3160
        %v3162 = vrot.slane %v3134, %v3161
        %v3163 = vcombine.low %v3141, %v3148
        %v3164 = vcombine.low %v3155, %v3162
        %v3166 = vunpack.c.l.s4 1966171168
        %v3167 = vunpack.c.0.s8 %v3166
        %v3168 = vlaneseq
        %v3169 = vshrl.u32 %v3168, 7
        %v3170 = vsub.s32 %v3167, %v3169
        %v3171 = vrot.slane %v3163, %v3170
        %v3173 = vunpack.c.l.s4 1966171168
        %v3174 = vunpack.c.0.s8 %v3173
        %v3175 = vlaneseq
        %v3176 = vshrl.u32 %v3175, 7
        %v3177 = vsub.s32 %v3174, %v3176
        %v3178 = vrot.slane %v3164, %v3177
        %v3179 = vcombine.low %v3171, %v3178
        %v3181 = vlaneseq
        %vm3182 = vcmp.ge.s32.totalorder %v3181, 0
        %vm3183 = vcmp.lt.s32.totalorder %v3181, 1000
        %vm3184 = vmand %vm3182, %vm3183
        %3185 = vst.msk [vmem:[%s539] sm:$0xff] %vm3184, %v3179
        %s3186 = sand.u32 %s401, 1
        %s3187 = scalar_lea.sflag [#allocation3], %s3186
        %s3188 = sand.u32 %s401, 1
        %s3189 = smul.addr %s3188, 8
        %s3190 = scalar_lea.vmem [#allocation2], %s3189
        // Predicated region
        $region89: #{tpu_custom_call.1} parent=87 // pred_check
          %p3191 = pneg %p411
        $region90: #{tpu_custom_call.1} parent=87 // pred_check_branch
          %3193 = sbr.rel (%p3191) target = $region92
        $region91: #{tpu_custom_call.1} parent=87 // pred_region
          %s3195 = ssub.s32 128, 128
          %3196 = vsyncadd %s3187, %s3195
          %s3197 = smul.addr %s31, 8
          %s3198 = smul.addr %s3197, 16
          %s3199 = scalar_lea.hbm %s17, %s3198
          %s3201 = sshll.u32 %s3190, 4
          %s3202 = int_to_ptr.vmem [resolvable:$true] %s3201
          %3204 = dma.vmem_to_hbm [thread:$0]  %s3202, 128, %s3199, %s3187
        $region92: #{tpu_custom_call.1} parent=87 // pred_fallthru
          _
      $region88: #{tpu_custom_call.1} parent=5 // pred_fallthru
        _
      %p3205 = scmp.le.s32.totalorder 2, %s26
      // Predicated region
      $region93: #{tpu_custom_call.1} parent=5 // pred_check
        %p3206 = pneg %p3205
      $region94: #{tpu_custom_call.1} parent=5 // pred_check_branch
        %3208 = sbr.rel (%p3206) target = $region96
      $region95: #{tpu_custom_call.1} parent=5 // pred_region
        %s3209 = ssub.s32 %s26, 2
        // Predicated region
        $region97: #{tpu_custom_call.1} parent=95 // pred_check
          %p3210 = pneg %p417
        $region98: #{tpu_custom_call.1} parent=95 // pred_check_branch
          %3212 = sbr.rel (%p3210) target = $region100
        $region99: #{tpu_custom_call.1} parent=95 // pred_region
          %s3213 = sand.u32 %s402, 1
          %s3214 = scalar_lea.sflag [#allocation3], %s3213
          %s3215 = sand.u32 %s402, 1
          %s3216 = smul.addr %s3215, 8
          %s3217 = scalar_lea.vmem [#allocation2], %s3216
          %3218 = dma.done %s3214, 128
        $region100: #{tpu_custom_call.1} parent=95 // pred_fallthru
          _
      $region96: #{tpu_custom_call.1} parent=5 // pred_fallthru
        _
    $region6: #{tpu_custom_call.1} parent=1 // loop_footer
      %s30 = sadd.s32 1, %s26
    $region7: #{tpu_custom_call.1} parent=1 // loop_footer_branch
      %25 = sbr.rel target = $region3
    $region8: #{tpu_custom_call.1} parent=1 // loop_exit
      _
    %3219 = vsyncpa [#allocation3], 1
    %s3220 = scalar_lea.sflag [#allocation3], 1
    %3221 = vsyncpa %s3220, 1

</llo_original>
